<compile_context>
chip_gen: v7x
topology: tpu7x:2x2x1
jax: 0.10.0
libtpu: 0.0.40
codegen_flags: <defaults>
</compile_context>

<pallas_src>
import functools
import math

import jax
import jax.numpy as jnp
from jax.experimental import pallas as pl
from jax.experimental.pallas import tpu as pltpu

EPS = 1e-6  # Annotated-Transformer LayerNorm eps


# ------------------------------ Fused kernel -------------------------------

def _decoder_kernel(x_ref, mem_ref, tbias_ref, sbias_ref,
                    ln_ref, wqkv_ref, battn_ref, wo_ref,
                    ffw1_ref, ffw2_ref, ffb_ref,
                    o_ref, *, n_heads, n_layers):
    # grid = (batch,) ; all decoder layers are unrolled inside the kernel.
    D = x_ref.shape[-1]
    dk = D // n_heads
    d_ff = ffw1_ref.shape[1]

    x = x_ref[0].astype(jnp.float32)      # (S_tgt, D) residual stream, f32
    mem = mem_ref[0]                      # (S_src, D) bf16 (pre-cast on host)
    tbias = tbias_ref[0]                  # (S_tgt, S_tgt) additive mask bias
    sbias = sbias_ref[0]                  # (S_tgt, S_src)

    def layer_norm(z, idx):
        # torch.Tensor.std semantics: unbiased variance, eps added to std.
        gb = ln_ref[idx]                  # (2, D): row 0 = gamma, row 1 = beta
        mean = jnp.mean(z, axis=-1, keepdims=True)
        var = jnp.sum((z - mean) ** 2, axis=-1, keepdims=True) / (z.shape[-1] - 1)
        inv = pl.reciprocal(jnp.sqrt(var) + EPS, approx=True)   # EUP slot
        return gb[0:1, :] * (z - mean) * inv + gb[1:2, :]

    def mxu(a, w_bf16):
        # (S, Din) x (Dout, Din)^T -> (S, Dout): bf16 operands, f32 accumulate.
        return jax.lax.dot_general(
            a.astype(jnp.bfloat16), w_bf16,
            (((1,), (1,)), ((), ())), preferred_element_type=jnp.float32)

    def softmax(s):
        s = s - jnp.max(s, axis=-1, keepdims=True)
        p = jnp.exp(s)
        return p * pl.reciprocal(jnp.sum(p, axis=-1, keepdims=True), approx=True)

    def attention(idx, q_in, kv_in, bias, self_attn):
        # idx in [0, 2L): (layer, attn-kind).  self_attn is a static bool.
        w = wqkv_ref[idx]                 # (3D, D) bf16: [Wq*scale; Wk; Wv]
        bvec = battn_ref[idx]             # (1, 4D) f32: [bq*scale, bk, bv, bo]
        if self_attn:
            # One fused QKV matmul (q_in == kv_in).
            qkv = mxu(q_in, w) + bvec[:, :3 * D]                 # (Sq, 3D)
            q_all = qkv[:, :D]
            k_all = qkv[:, D:2 * D]
            v_all = qkv[:, 2 * D:3 * D]
        else:
            # Q from the decoder stream, fused K/V from encoder memory.
            q_all = mxu(q_in, w[:D]) + bvec[:, :D]               # (Sq, D)
            kv = mxu(kv_in, w[D:]) + bvec[:, D:3 * D]            # (Sk, 2D)
            k_all = kv[:, :D]
            v_all = kv[:, D:]
        heads = []
        for h in range(n_heads):          # static unroll; slices are static
            sl = slice(h * dk, (h + 1) * dk)
            q_h = q_all[:, sl].astype(jnp.bfloat16)
            k_h = k_all[:, sl].astype(jnp.bfloat16)
            v_h = v_all[:, sl].astype(jnp.bfloat16)
            s = jax.lax.dot_general(q_h, k_h, (((1,), (1,)), ((), ())),
                                    preferred_element_type=jnp.float32)
            p = softmax(s + bias)                                # (Sq, Sk)
            heads.append(jnp.dot(p.astype(jnp.bfloat16), v_h,
                                 preferred_element_type=jnp.float32))
        pv_all = jnp.concatenate(heads, axis=-1)                 # (Sq, D)
        # Single unsplit output projection + bias.
        return mxu(pv_all, wo_ref[idx]) + bvec[:, 3 * D:]

    for l in range(n_layers):             # static unroll over layers
        # Sublayer 1: pre-norm self-attention + residual.
        xn = layer_norm(x, 3 * l + 0)
        x = x + attention(2 * l + 0, xn, xn, tbias, True)
        # Sublayer 2: pre-norm cross-attention over encoder memory + residual.
        xn = layer_norm(x, 3 * l + 1)
        x = x + attention(2 * l + 1, xn, mem, sbias, False)
        # Sublayer 3: pre-norm position-wise FFN + residual.
        xn = layer_norm(x, 3 * l + 2)
        fb = ffb_ref[l]                                          # (1, d_ff + D)
        h1 = jnp.maximum(mxu(xn, ffw1_ref[l]) + fb[:, :d_ff], 0.0)
        x = x + mxu(h1, ffw2_ref[l]) + fb[:, d_ff:]

    # Final LayerNorm + single store.
    o_ref[0] = layer_norm(x, 3 * n_layers).astype(o_ref.dtype)


# --------------------------- Host-side param packing ------------------------

def _pack_decoder_params(params, n_heads):
    """Pack per-layer weights into a few resident arrays:
       fused QKV slabs (scale folded into Q), fused per-attn bias vectors,
       unsplit W_o, stacked LayerNorm g/b, fused FFN bias vectors.
       Matmul weights are stored bf16 (half the DMA bytes / VMEM)."""
    layers = params["layers"]
    D = params["norm_g"].shape[0]
    dk = D // n_heads
    scale = 1.0 / math.sqrt(dk)

    ln_rows, wqkv, battn, wo = [], [], [], []
    ffw1, ffw2, ffb = [], [], []
    for lp in layers:
        for i in range(3):
            ln_rows.append(jnp.stack([lp[f"ln{i}_g"], lp[f"ln{i}_b"]]))   # (2, D)
        for name in ("self_attn", "src_attn"):
            p = lp[name]
            w = jnp.concatenate([p["wq"] * scale, p["wk"], p["wv"]], axis=0)
            wqkv.append(w.astype(jnp.bfloat16))                           # (3D, D)
            b = jnp.concatenate([p["bq"] * scale, p["bk"], p["bv"], p["bo"]])
            battn.append(b.reshape(1, 4 * D))                             # (1, 4D)
            wo.append(p["wo"].astype(jnp.bfloat16))                       # (D, D)
        ffw1.append(lp["ff_w1"].astype(jnp.bfloat16))                     # (d_ff, D)
        ffw2.append(lp["ff_w2"].astype(jnp.bfloat16))                     # (D, d_ff)
        ffb.append(jnp.concatenate([lp["ff_b1"], lp["ff_b2"]]).reshape(1, -1))
    ln_rows.append(jnp.stack([params["norm_g"], params["norm_b"]]))       # final

    return {
        "ln": jnp.stack(ln_rows),          # (3L+1, 2, D)      f32
        "wqkv": jnp.stack(wqkv),           # (2L, 3D, D)       bf16
        "battn": jnp.stack(battn),         # (2L, 1, 4D)       f32
        "wo": jnp.stack(wo),               # (2L, D, D)        bf16
        "ffw1": jnp.stack(ffw1),           # (L, d_ff, D)      bf16
        "ffw2": jnp.stack(ffw2),           # (L, D, d_ff)      bf16
        "ffb": jnp.stack(ffb),             # (L, 1, d_ff + D)  f32
    }


def _decoder_cost(B, L, S, S_src, D, d_ff, act_arrays, w_args):
    self_f = 2 * S * D * 3 * D + 4 * S * S * D + 2 * S * D * D
    cross_f = 2 * S * D * D + 2 * S_src * D * 2 * D + 4 * S * S_src * D + 2 * S * D * D
    ffn_f = 4 * S * D * d_ff
    flops = B * L * (self_f + cross_f + ffn_f)
    transcendentals = B * L * (S * S + S * S_src)
    bytes_acc = sum(int(a.size) * a.dtype.itemsize for a in w_args)
    bytes_acc += sum(int(a.size) * a.dtype.itemsize for a in act_arrays)
    bytes_acc += B * S * D * 4                                   # output
    return int(flops), int(transcendentals), int(bytes_acc)


# ------------------------------ Pallas wrapper ------------------------------

def decoder_forward_pallas(x, memory, src_mask, tgt_mask, params, n_heads):
    B, S_tgt, D = x.shape
    S_src = memory.shape[1]
    n_layers = len(params["layers"])
    packed = _pack_decoder_params(params, n_heads)
    d_ff = packed["ffw1"].shape[1]

    # memory only ever feeds the MXU as a bf16 operand -> pre-cast on host.
    memory_bf16 = memory.astype(jnp.bfloat16)

    # Additive mask bias: 0.0 where keep, -1e9 where masked (replaces cmp+sel).
    tgt_bias = ((tgt_mask - 1.0) * 1e9).astype(jnp.float32)
    src_bias = ((src_mask - 1.0) * 1e9).astype(jnp.float32)

    w_keys = ("ln", "wqkv", "battn", "wo", "ffw1", "ffw2", "ffb")
    w_args = [packed[k] for k in w_keys]

    def _resident_spec(arr):
        # Full-array block + constant index map -> fetched once, VMEM-resident
        # across the whole batch grid.
        zeros = (0,) * arr.ndim
        return pl.BlockSpec(arr.shape, lambda b, _z=zeros: _z)

    in_specs = [
        pl.BlockSpec((1, S_tgt, D), lambda b: (b, 0, 0)),        # x
        pl.BlockSpec((1, S_src, D), lambda b: (b, 0, 0)),        # memory (bf16)
        pl.BlockSpec((1, S_tgt, S_tgt), lambda b: (b, 0, 0)),    # tgt bias
        pl.BlockSpec((1, S_tgt, S_src), lambda b: (b, 0, 0)),    # src bias
    ] + [_resident_spec(a) for a in w_args]

    grid_spec = pltpu.PrefetchScalarGridSpec(
        num_scalar_prefetch=0,
        grid=(B,),
        in_specs=in_specs,
        out_specs=pl.BlockSpec((1, S_tgt, D), lambda b: (b, 0, 0)),
    )

    flops, transc, bytes_acc = _decoder_cost(
        B, n_layers, S_tgt, S_src, D, d_ff,
        (x, memory_bf16, tgt_bias, src_bias), w_args)

    return pl.pallas_call(
        functools.partial(_decoder_kernel, n_heads=n_heads, n_layers=n_layers),
        out_shape=jax.ShapeDtypeStruct((B, S_tgt, D), x.dtype),
        grid_spec=grid_spec,
        compiler_params=pltpu.CompilerParams(
            dimension_semantics=("parallel",),     # B=2 -> both v7x TCs get work
            vmem_limit_bytes=32 * 1024 * 1024,
        ),
        cost_estimate=pl.CostEstimate(
            flops=flops, transcendentals=transc, bytes_accessed=bytes_acc),
    )(x, memory_bf16, tgt_bias, src_bias, *w_args)


# -------------------------- Pure-JAX reference path -------------------------

def _ref_layer_norm(x, g, b):
    mean = jnp.mean(x, axis=-1, keepdims=True)
    var = jnp.sum((x - mean) ** 2, axis=-1, keepdims=True) / (x.shape[-1] - 1)
    return g * (x - mean) / (jnp.sqrt(var) + EPS) + b


def _ref_linear(x, w, b):
    return jnp.einsum("bsd,od->bso", x, w,
                      precision=jax.lax.Precision.HIGHEST) + b


def _ref_mha(q_in, k_in, v_in, mask, p, n_heads):
    B, Sq, D = q_in.shape
    Sk = k_in.shape[1]
    dk = D // n_heads
    q = _ref_linear(q_in, p["wq"], p["bq"]).reshape(B, Sq, n_heads, dk).transpose(0, 2, 1, 3)
    k = _ref_linear(k_in, p["wk"], p["bk"]).reshape(B, Sk, n_heads, dk).transpose(0, 2, 1, 3)
    v = _ref_linear(v_in, p["wv"], p["bv"]).reshape(B, Sk, n_heads, dk).transpose(0, 2, 1, 3)
    s = jnp.einsum("bhqd,bhkd->bhqk", q, k,
                   precision=jax.lax.Precision.HIGHEST) / math.sqrt(dk)
    s = jnp.where(mask[:, None, :, :] == 0.0, -1e9, s)
    a = jax.nn.softmax(s, axis=-1)
    o = jnp.einsum("bhqk,bhkd->bhqd", a, v, precision=jax.lax.Precision.HIGHEST)
    o = o.transpose(0, 2, 1, 3).reshape(B, Sq, D)
    return _ref_linear(o, p["wo"], p["bo"])


def decoder_forward_ref(x, memory, src_mask, tgt_mask, params, n_heads):
    for lp in params["layers"]:
        xn = _ref_layer_norm(x, lp["ln0_g"], lp["ln0_b"])
        x = x + _ref_mha(xn, xn, xn, tgt_mask, lp["self_attn"], n_heads)
        xn = _ref_layer_norm(x, lp["ln1_g"], lp["ln1_b"])
        x = x + _ref_mha(xn, memory, memory, src_mask, lp["src_attn"], n_heads)
        xn = _ref_layer_norm(x, lp["ln2_g"], lp["ln2_b"])
        h = jnp.maximum(_ref_linear(xn, lp["ff_w1"], lp["ff_b1"]), 0.0)
        x = x + _ref_linear(h, lp["ff_w2"], lp["ff_b2"])
    return _ref_layer_norm(x, params["norm_g"], params["norm_b"])


# ----------------------------- Parameter init -------------------------------

def init_linear_params(key, dout, din):
    k1, k2 = jax.random.split(key)
    lim = 1.0 / math.sqrt(din)
    w = jax.random.uniform(k1, (dout, din), jnp.float32, -lim, lim)
    b = jax.random.uniform(k2, (dout,), jnp.float32, -lim, lim)
    return w, b


def init_attn_params(key, d_model):
    keys = jax.random.split(key, 4)
    p = {}
    for name, k in zip(("q", "k", "v", "o"), keys):
        w, b = init_linear_params(k, d_model, d_model)
        p["w" + name], p["b" + name] = w, b
    return p


def init_decoder_params(key, n_layers, d_model, d_ff):
    params = {"layers": []}
    keys = jax.random.split(key, n_layers + 1)
    for lk in keys[:-1]:
        k_self, k_src, k_f1, k_f2 = jax.random.split(lk, 4)
        w1, b1 = init_linear_params(k_f1, d_ff, d_model)
        w2, b2 = init_linear_params(k_f2, d_model, d_ff)
        layer = {
            "self_attn": init_attn_params(k_self, d_model),
            "src_attn": init_attn_params(k_src, d_model),
            "ff_w1": w1, "ff_b1": b1, "ff_w2": w2, "ff_b2": b2,
        }
        for i in range(3):
            layer[f"ln{i}_g"] = jnp.ones((d_model,), jnp.float32)
            layer[f"ln{i}_b"] = jnp.zeros((d_model,), jnp.float32)
        params["layers"].append(layer)
    params["norm_g"] = jnp.ones((d_model,), jnp.float32)
    params["norm_b"] = jnp.zeros((d_model,), jnp.float32)
    return params


# ---------------------------------- Main ------------------------------------

if __name__ == "__main__":
    B, S_TGT, S_SRC = 2, 8, 8
    D_MODEL, N_HEADS, D_FF, N_LAYERS = 32, 4, 64, 2

    root = jax.random.PRNGKey(0)
    k_x, k_mem, k_params = jax.random.split(root, 3)

    x = jax.random.normal(k_x, (B, S_TGT, D_MODEL), jnp.float32)
    hidden_states = jax.random.normal(k_mem, (B, S_SRC, D_MODEL), jnp.float32)

    # tgt_mask: causal (subsequent) mask; src_mask: padding mask (batch 1 has
    # its last 2 source positions masked out). 1.0 = keep, 0.0 = masked.
    tgt_mask = jnp.broadcast_to(
        jnp.tril(jnp.ones((S_TGT, S_TGT), jnp.float32)), (B, S_TGT, S_TGT))
    valid_src = jnp.array([S_SRC, S_SRC - 2], jnp.int32)
    src_mask = (jnp.arange(S_SRC)[None, None, :] < valid_src[:, None, None])
    src_mask = jnp.broadcast_to(src_mask, (B, S_TGT, S_SRC)).astype(jnp.float32)

    params = init_decoder_params(k_params, N_LAYERS, D_MODEL, D_FF)

    out = decoder_forward_pallas(x, hidden_states, src_mask, tgt_mask,
                                 params, N_HEADS)
    out = jax.block_until_ready(out)

    ref = decoder_forward_ref(x, hidden_states, src_mask, tgt_mask,
                              params, N_HEADS)
    ref = jax.block_until_ready(ref)

    assert out.shape == (B, S_TGT, D_MODEL) and out.dtype == jnp.float32
    max_diff = float(jnp.max(jnp.abs(out - ref)))
    # The kernel feeds bf16 operands to the MXU and uses approx reciprocals,
    # while the reference runs f32/HIGHEST end-to-end -> modest tolerance.
    assert jnp.allclose(out, ref, atol=5e-2, rtol=5e-2), (
        f"max abs diff {max_diff}")

    print("KERNEL_OK")
</pallas_src>

<mosaic_0001>
module attributes {stable_mosaic.version = 11 : i64} {
  func.func @_decoder_kernel(%arg0: i32, %arg1: memref<1x8x32xf32, #tpu.memory_space<vmem>>, %arg2: memref<1x8x32xbf16, #tpu.memory_space<vmem>>, %arg3: memref<1x8x8xf32, #tpu.memory_space<vmem>>, %arg4: memref<1x8x8xf32, #tpu.memory_space<vmem>>, %arg5: memref<7x2x32xf32, #tpu.memory_space<vmem>>, %arg6: memref<4x96x32xbf16, #tpu.memory_space<vmem>>, %arg7: memref<4x1x128xf32, #tpu.memory_space<vmem>>, %arg8: memref<4x32x32xbf16, #tpu.memory_space<vmem>>, %arg9: memref<2x64x32xbf16, #tpu.memory_space<vmem>>, %arg10: memref<2x32x64xbf16, #tpu.memory_space<vmem>>, %arg11: memref<2x1x96xf32, #tpu.memory_space<vmem>>, %arg12: memref<1x8x32xf32, #tpu.memory_space<vmem>>) attributes {dimension_semantics = [#tpu.dimension_semantics<parallel>], iteration_bounds = array<i64: 2>, scalar_prefetch = 0 : i64, scratch_operands = 0 : i64, tpu.core_type = #tpu.core_type<tc>, window_params = [{transform_indices = @transform_0, window_bounds = array<i64: 1, 8, 32>}, {transform_indices = @transform_1, window_bounds = array<i64: 1, 8, 32>}, {transform_indices = @transform_2, window_bounds = array<i64: 1, 8, 8>}, {transform_indices = @transform_3, window_bounds = array<i64: 1, 8, 8>}, {pipeline_mode = #tpu.pipeline_mode<synchronous>, transform_indices = @transform_4, window_bounds = array<i64: 7, 2, 32>}, {pipeline_mode = #tpu.pipeline_mode<synchronous>, transform_indices = @transform_5, window_bounds = array<i64: 4, 96, 32>}, {pipeline_mode = #tpu.pipeline_mode<synchronous>, transform_indices = @transform_6, window_bounds = array<i64: 4, 1, 128>}, {pipeline_mode = #tpu.pipeline_mode<synchronous>, transform_indices = @transform_7, window_bounds = array<i64: 4, 32, 32>}, {pipeline_mode = #tpu.pipeline_mode<synchronous>, transform_indices = @transform_8, window_bounds = array<i64: 2, 64, 32>}, {pipeline_mode = #tpu.pipeline_mode<synchronous>, transform_indices = @transform_9, window_bounds = array<i64: 2, 32, 64>}, {pipeline_mode = #tpu.pipeline_mode<synchronous>, transform_indices = @transform_10, window_bounds = array<i64: 2, 1, 96>}, {transform_indices = @transform_11, window_bounds = array<i64: 1, 8, 32>}]} {
    %c0 = arith.constant 0 : index
    %c0_0 = arith.constant 0 : index
    %c0_1 = arith.constant 0 : index
    %0 = vector.load %arg1[%c0, %c0_0, %c0_1] : memref<1x8x32xf32, #tpu.memory_space<vmem>>, vector<1x8x32xf32>
    %1 = vector.shape_cast %0 : vector<1x8x32xf32> to vector<8x32xf32>
    %c0_2 = arith.constant 0 : index
    %c0_3 = arith.constant 0 : index
    %c0_4 = arith.constant 0 : index
    %2 = vector.load %arg2[%c0_2, %c0_3, %c0_4] : memref<1x8x32xbf16, #tpu.memory_space<vmem>>, vector<1x8x32xbf16>
    %3 = vector.shape_cast %2 : vector<1x8x32xbf16> to vector<8x32xbf16>
    %c0_5 = arith.constant 0 : index
    %c0_6 = arith.constant 0 : index
    %c0_7 = arith.constant 0 : index
    %4 = vector.load %arg3[%c0_5, %c0_6, %c0_7] : memref<1x8x8xf32, #tpu.memory_space<vmem>>, vector<1x8x8xf32>
    %5 = vector.shape_cast %4 : vector<1x8x8xf32> to vector<8x8xf32>
    %c0_8 = arith.constant 0 : index
    %c0_9 = arith.constant 0 : index
    %c0_10 = arith.constant 0 : index
    %6 = vector.load %arg4[%c0_8, %c0_9, %c0_10] : memref<1x8x8xf32, #tpu.memory_space<vmem>>, vector<1x8x8xf32>
    %7 = vector.shape_cast %6 : vector<1x8x8xf32> to vector<8x8xf32>
    %c0_11 = arith.constant 0 : index
    %c0_12 = arith.constant 0 : index
    %c0_13 = arith.constant 0 : index
    %8 = vector.load %arg5[%c0_11, %c0_12, %c0_13] : memref<7x2x32xf32, #tpu.memory_space<vmem>>, vector<1x2x32xf32>
    %9 = vector.shape_cast %8 : vector<1x2x32xf32> to vector<2x32xf32>
    %cst = arith.constant dense<0.000000e+00> : vector<8xf32>
    %10 = vector.multi_reduction <add>, %1, %cst [1] : vector<8x32xf32> to vector<8xf32>
    %11 = vector.shape_cast %10 : vector<8xf32> to vector<8x1xf32>
    %cst_14 = arith.constant 3.200000e+01 : f32
    %12 = vector.broadcast %cst_14 : f32 to vector<8x1xf32>
    %13 = arith.divf %11, %12 : vector<8x1xf32>
    %14 = vector.broadcast %13 : vector<8x1xf32> to vector<8x32xf32>
    %15 = arith.subf %1, %14 : vector<8x32xf32>
    %16 = arith.mulf %15, %15 : vector<8x32xf32>
    %cst_15 = arith.constant dense<0.000000e+00> : vector<8xf32>
    %17 = vector.multi_reduction <add>, %16, %cst_15 [1] : vector<8x32xf32> to vector<8xf32>
    %18 = vector.shape_cast %17 : vector<8xf32> to vector<8x1xf32>
    %cst_16 = arith.constant 3.100000e+01 : f32
    %19 = vector.broadcast %cst_16 : f32 to vector<8x1xf32>
    %20 = arith.divf %18, %19 : vector<8x1xf32>
    %21 = math.sqrt %20 : vector<8x1xf32>
    %cst_17 = arith.constant 9.99999997E-7 : f32
    %22 = vector.broadcast %cst_17 : f32 to vector<8x1xf32>
    %23 = arith.addf %21, %22 : vector<8x1xf32>
    %24 = tpu.reciprocal %23 {approx = true} : vector<8x1xf32> -> vector<8x1xf32>
    %25 = vector.extract_strided_slice %9 {offsets = [0, 0], sizes = [1, 32], strides = [1, 1]} : vector<2x32xf32> to vector<1x32xf32>
    %26 = vector.broadcast %13 : vector<8x1xf32> to vector<8x32xf32>
    %27 = arith.subf %1, %26 : vector<8x32xf32>
    %28 = vector.broadcast %25 : vector<1x32xf32> to vector<8x32xf32>
    %29 = arith.mulf %28, %27 : vector<8x32xf32>
    %30 = vector.broadcast %24 : vector<8x1xf32> to vector<8x32xf32>
    %31 = arith.mulf %29, %30 : vector<8x32xf32>
    %32 = vector.extract_strided_slice %9 {offsets = [1, 0], sizes = [1, 32], strides = [1, 1]} : vector<2x32xf32> to vector<1x32xf32>
    %33 = vector.broadcast %32 : vector<1x32xf32> to vector<8x32xf32>
    %34 = arith.addf %31, %33 : vector<8x32xf32>
    %c0_18 = arith.constant 0 : index
    %c0_19 = arith.constant 0 : index
    %c0_20 = arith.constant 0 : index
    %35 = vector.load %arg6[%c0_18, %c0_19, %c0_20] : memref<4x96x32xbf16, #tpu.memory_space<vmem>>, vector<1x96x32xbf16>
    %36 = vector.shape_cast %35 : vector<1x96x32xbf16> to vector<96x32xbf16>
    %c0_21 = arith.constant 0 : index
    %c0_22 = arith.constant 0 : index
    %c0_23 = arith.constant 0 : index
    %37 = vector.load %arg7[%c0_21, %c0_22, %c0_23] : memref<4x1x128xf32, #tpu.memory_space<vmem>>, vector<1x1x128xf32>
    %38 = vector.shape_cast %37 : vector<1x1x128xf32> to vector<1x128xf32>
    %39 = arith.truncf %34 : vector<8x32xf32> to vector<8x32xbf16>
    %cst_24 = arith.constant dense<0.000000e+00> : vector<8x96xf32>
    %40 = tpu.matmul %39, %36, %cst_24 {dimension_numbers = #tpu.dot_dimension_numbers<[1], [1], [0], [0], [0, 0, 1, 0], [], []>} : vector<8x32xbf16>, vector<96x32xbf16>, vector<8x96xf32> -> vector<8x96xf32>
    %41 = vector.extract_strided_slice %38 {offsets = [0, 0], sizes = [1, 96], strides = [1, 1]} : vector<1x128xf32> to vector<1x96xf32>
    %42 = vector.broadcast %41 : vector<1x96xf32> to vector<8x96xf32>
    %43 = arith.addf %40, %42 : vector<8x96xf32>
    %44 = vector.extract_strided_slice %43 {offsets = [0, 0], sizes = [8, 32], strides = [1, 1]} : vector<8x96xf32> to vector<8x32xf32>
    %45 = vector.extract_strided_slice %43 {offsets = [0, 32], sizes = [8, 32], strides = [1, 1]} : vector<8x96xf32> to vector<8x32xf32>
    %46 = vector.extract_strided_slice %43 {offsets = [0, 64], sizes = [8, 32], strides = [1, 1]} : vector<8x96xf32> to vector<8x32xf32>
    %47 = vector.extract_strided_slice %44 {offsets = [0, 0], sizes = [8, 8], strides = [1, 1]} : vector<8x32xf32> to vector<8x8xf32>
    %48 = arith.truncf %47 : vector<8x8xf32> to vector<8x8xbf16>
    %49 = vector.extract_strided_slice %45 {offsets = [0, 0], sizes = [8, 8], strides = [1, 1]} : vector<8x32xf32> to vector<8x8xf32>
    %50 = arith.truncf %49 : vector<8x8xf32> to vector<8x8xbf16>
    %51 = vector.extract_strided_slice %46 {offsets = [0, 0], sizes = [8, 8], strides = [1, 1]} : vector<8x32xf32> to vector<8x8xf32>
    %52 = arith.truncf %51 : vector<8x8xf32> to vector<8x8xbf16>
    %cst_25 = arith.constant dense<0.000000e+00> : vector<8x8xf32>
    %53 = tpu.matmul %48, %50, %cst_25 {dimension_numbers = #tpu.dot_dimension_numbers<[1], [1], [0], [0], [0, 0, 1, 0], [], []>} : vector<8x8xbf16>, vector<8x8xbf16>, vector<8x8xf32> -> vector<8x8xf32>
    %54 = arith.addf %53, %5 : vector<8x8xf32>
    %cst_26 = arith.constant dense<0xFF800000> : vector<8xf32>
    %55 = vector.multi_reduction <maximumf>, %54, %cst_26 [1] : vector<8x8xf32> to vector<8xf32>
    %56 = vector.shape_cast %55 : vector<8xf32> to vector<8x1xf32>
    %57 = vector.broadcast %56 : vector<8x1xf32> to vector<8x8xf32>
    %58 = arith.subf %54, %57 : vector<8x8xf32>
    %59 = math.exp %58 : vector<8x8xf32>
    %cst_27 = arith.constant dense<0.000000e+00> : vector<8xf32>
    %60 = vector.multi_reduction <add>, %59, %cst_27 [1] : vector<8x8xf32> to vector<8xf32>
    %61 = vector.shape_cast %60 : vector<8xf32> to vector<8x1xf32>
    %62 = tpu.reciprocal %61 {approx = true} : vector<8x1xf32> -> vector<8x1xf32>
    %63 = vector.broadcast %62 : vector<8x1xf32> to vector<8x8xf32>
    %64 = arith.mulf %59, %63 : vector<8x8xf32>
    %65 = arith.truncf %64 : vector<8x8xf32> to vector<8x8xbf16>
    %cst_28 = arith.constant dense<0.000000e+00> : vector<8x8xf32>
    %66 = tpu.matmul %65, %52, %cst_28 {dimension_numbers = #tpu.dot_dimension_numbers<[1], [0], [0], [1], [0, 0, 1, 1], [], []>} : vector<8x8xbf16>, vector<8x8xbf16>, vector<8x8xf32> -> vector<8x8xf32>
    %67 = vector.extract_strided_slice %44 {offsets = [0, 8], sizes = [8, 8], strides = [1, 1]} : vector<8x32xf32> to vector<8x8xf32>
    %68 = arith.truncf %67 : vector<8x8xf32> to vector<8x8xbf16>
    %69 = vector.extract_strided_slice %45 {offsets = [0, 8], sizes = [8, 8], strides = [1, 1]} : vector<8x32xf32> to vector<8x8xf32>
    %70 = arith.truncf %69 : vector<8x8xf32> to vector<8x8xbf16>
    %71 = vector.extract_strided_slice %46 {offsets = [0, 8], sizes = [8, 8], strides = [1, 1]} : vector<8x32xf32> to vector<8x8xf32>
    %72 = arith.truncf %71 : vector<8x8xf32> to vector<8x8xbf16>
    %cst_29 = arith.constant dense<0.000000e+00> : vector<8x8xf32>
    %73 = tpu.matmul %68, %70, %cst_29 {dimension_numbers = #tpu.dot_dimension_numbers<[1], [1], [0], [0], [0, 0, 1, 0], [], []>} : vector<8x8xbf16>, vector<8x8xbf16>, vector<8x8xf32> -> vector<8x8xf32>
    %74 = arith.addf %73, %5 : vector<8x8xf32>
    %cst_30 = arith.constant dense<0xFF800000> : vector<8xf32>
    %75 = vector.multi_reduction <maximumf>, %74, %cst_30 [1] : vector<8x8xf32> to vector<8xf32>
    %76 = vector.shape_cast %75 : vector<8xf32> to vector<8x1xf32>
    %77 = vector.broadcast %76 : vector<8x1xf32> to vector<8x8xf32>
    %78 = arith.subf %74, %77 : vector<8x8xf32>
    %79 = math.exp %78 : vector<8x8xf32>
    %cst_31 = arith.constant dense<0.000000e+00> : vector<8xf32>
    %80 = vector.multi_reduction <add>, %79, %cst_31 [1] : vector<8x8xf32> to vector<8xf32>
    %81 = vector.shape_cast %80 : vector<8xf32> to vector<8x1xf32>
    %82 = tpu.reciprocal %81 {approx = true} : vector<8x1xf32> -> vector<8x1xf32>
    %83 = vector.broadcast %82 : vector<8x1xf32> to vector<8x8xf32>
    %84 = arith.mulf %79, %83 : vector<8x8xf32>
    %85 = arith.truncf %84 : vector<8x8xf32> to vector<8x8xbf16>
    %cst_32 = arith.constant dense<0.000000e+00> : vector<8x8xf32>
    %86 = tpu.matmul %85, %72, %cst_32 {dimension_numbers = #tpu.dot_dimension_numbers<[1], [0], [0], [1], [0, 0, 1, 1], [], []>} : vector<8x8xbf16>, vector<8x8xbf16>, vector<8x8xf32> -> vector<8x8xf32>
    %87 = vector.extract_strided_slice %44 {offsets = [0, 16], sizes = [8, 8], strides = [1, 1]} : vector<8x32xf32> to vector<8x8xf32>
    %88 = arith.truncf %87 : vector<8x8xf32> to vector<8x8xbf16>
    %89 = vector.extract_strided_slice %45 {offsets = [0, 16], sizes = [8, 8], strides = [1, 1]} : vector<8x32xf32> to vector<8x8xf32>
    %90 = arith.truncf %89 : vector<8x8xf32> to vector<8x8xbf16>
    %91 = vector.extract_strided_slice %46 {offsets = [0, 16], sizes = [8, 8], strides = [1, 1]} : vector<8x32xf32> to vector<8x8xf32>
    %92 = arith.truncf %91 : vector<8x8xf32> to vector<8x8xbf16>
    %cst_33 = arith.constant dense<0.000000e+00> : vector<8x8xf32>
    %93 = tpu.matmul %88, %90, %cst_33 {dimension_numbers = #tpu.dot_dimension_numbers<[1], [1], [0], [0], [0, 0, 1, 0], [], []>} : vector<8x8xbf16>, vector<8x8xbf16>, vector<8x8xf32> -> vector<8x8xf32>
    %94 = arith.addf %93, %5 : vector<8x8xf32>
    %cst_34 = arith.constant dense<0xFF800000> : vector<8xf32>
    %95 = vector.multi_reduction <maximumf>, %94, %cst_34 [1] : vector<8x8xf32> to vector<8xf32>
    %96 = vector.shape_cast %95 : vector<8xf32> to vector<8x1xf32>
    %97 = vector.broadcast %96 : vector<8x1xf32> to vector<8x8xf32>
    %98 = arith.subf %94, %97 : vector<8x8xf32>
    %99 = math.exp %98 : vector<8x8xf32>
    %cst_35 = arith.constant dense<0.000000e+00> : vector<8xf32>
    %100 = vector.multi_reduction <add>, %99, %cst_35 [1] : vector<8x8xf32> to vector<8xf32>
    %101 = vector.shape_cast %100 : vector<8xf32> to vector<8x1xf32>
    %102 = tpu.reciprocal %101 {approx = true} : vector<8x1xf32> -> vector<8x1xf32>
    %103 = vector.broadcast %102 : vector<8x1xf32> to vector<8x8xf32>
    %104 = arith.mulf %99, %103 : vector<8x8xf32>
    %105 = arith.truncf %104 : vector<8x8xf32> to vector<8x8xbf16>
    %cst_36 = arith.constant dense<0.000000e+00> : vector<8x8xf32>
    %106 = tpu.matmul %105, %92, %cst_36 {dimension_numbers = #tpu.dot_dimension_numbers<[1], [0], [0], [1], [0, 0, 1, 1], [], []>} : vector<8x8xbf16>, vector<8x8xbf16>, vector<8x8xf32> -> vector<8x8xf32>
    %107 = vector.extract_strided_slice %44 {offsets = [0, 24], sizes = [8, 8], strides = [1, 1]} : vector<8x32xf32> to vector<8x8xf32>
    %108 = arith.truncf %107 : vector<8x8xf32> to vector<8x8xbf16>
    %109 = vector.extract_strided_slice %45 {offsets = [0, 24], sizes = [8, 8], strides = [1, 1]} : vector<8x32xf32> to vector<8x8xf32>
    %110 = arith.truncf %109 : vector<8x8xf32> to vector<8x8xbf16>
    %111 = vector.extract_strided_slice %46 {offsets = [0, 24], sizes = [8, 8], strides = [1, 1]} : vector<8x32xf32> to vector<8x8xf32>
    %112 = arith.truncf %111 : vector<8x8xf32> to vector<8x8xbf16>
    %cst_37 = arith.constant dense<0.000000e+00> : vector<8x8xf32>
    %113 = tpu.matmul %108, %110, %cst_37 {dimension_numbers = #tpu.dot_dimension_numbers<[1], [1], [0], [0], [0, 0, 1, 0], [], []>} : vector<8x8xbf16>, vector<8x8xbf16>, vector<8x8xf32> -> vector<8x8xf32>
    %114 = arith.addf %113, %5 : vector<8x8xf32>
    %cst_38 = arith.constant dense<0xFF800000> : vector<8xf32>
    %115 = vector.multi_reduction <maximumf>, %114, %cst_38 [1] : vector<8x8xf32> to vector<8xf32>
    %116 = vector.shape_cast %115 : vector<8xf32> to vector<8x1xf32>
    %117 = vector.broadcast %116 : vector<8x1xf32> to vector<8x8xf32>
    %118 = arith.subf %114, %117 : vector<8x8xf32>
    %119 = math.exp %118 : vector<8x8xf32>
    %cst_39 = arith.constant dense<0.000000e+00> : vector<8xf32>
    %120 = vector.multi_reduction <add>, %119, %cst_39 [1] : vector<8x8xf32> to vector<8xf32>
    %121 = vector.shape_cast %120 : vector<8xf32> to vector<8x1xf32>
    %122 = tpu.reciprocal %121 {approx = true} : vector<8x1xf32> -> vector<8x1xf32>
    %123 = vector.broadcast %122 : vector<8x1xf32> to vector<8x8xf32>
    %124 = arith.mulf %119, %123 : vector<8x8xf32>
    %125 = arith.truncf %124 : vector<8x8xf32> to vector<8x8xbf16>
    %cst_40 = arith.constant dense<0.000000e+00> : vector<8x8xf32>
    %126 = tpu.matmul %125, %112, %cst_40 {dimension_numbers = #tpu.dot_dimension_numbers<[1], [0], [0], [1], [0, 0, 1, 1], [], []>} : vector<8x8xbf16>, vector<8x8xbf16>, vector<8x8xf32> -> vector<8x8xf32>
    %127 = tpu.concatenate %66, %86, %106, %126 in 1 : vector<8x8xf32>, vector<8x8xf32>, vector<8x8xf32>, vector<8x8xf32> -> vector<8x32xf32>
    %c0_41 = arith.constant 0 : index
    %c0_42 = arith.constant 0 : index
    %c0_43 = arith.constant 0 : index
    %128 = vector.load %arg8[%c0_41, %c0_42, %c0_43] : memref<4x32x32xbf16, #tpu.memory_space<vmem>>, vector<1x32x32xbf16>
    %129 = vector.shape_cast %128 : vector<1x32x32xbf16> to vector<32x32xbf16>
    %130 = arith.truncf %127 : vector<8x32xf32> to vector<8x32xbf16>
    %cst_44 = arith.constant dense<0.000000e+00> : vector<8x32xf32>
    %131 = tpu.matmul %130, %129, %cst_44 {dimension_numbers = #tpu.dot_dimension_numbers<[1], [1], [0], [0], [0, 0, 1, 0], [], []>} : vector<8x32xbf16>, vector<32x32xbf16>, vector<8x32xf32> -> vector<8x32xf32>
    %132 = vector.extract_strided_slice %38 {offsets = [0, 96], sizes = [1, 32], strides = [1, 1]} : vector<1x128xf32> to vector<1x32xf32>
    %133 = vector.broadcast %132 : vector<1x32xf32> to vector<8x32xf32>
    %134 = arith.addf %131, %133 : vector<8x32xf32>
    %135 = arith.addf %1, %134 : vector<8x32xf32>
    %c1 = arith.constant 1 : index
    %c0_45 = arith.constant 0 : index
    %c0_46 = arith.constant 0 : index
    %136 = vector.load %arg5[%c1, %c0_45, %c0_46] : memref<7x2x32xf32, #tpu.memory_space<vmem>>, vector<1x2x32xf32>
    %137 = vector.shape_cast %136 : vector<1x2x32xf32> to vector<2x32xf32>
    %cst_47 = arith.constant dense<0.000000e+00> : vector<8xf32>
    %138 = vector.multi_reduction <add>, %135, %cst_47 [1] : vector<8x32xf32> to vector<8xf32>
    %139 = vector.shape_cast %138 : vector<8xf32> to vector<8x1xf32>
    %cst_48 = arith.constant 3.200000e+01 : f32
    %140 = vector.broadcast %cst_48 : f32 to vector<8x1xf32>
    %141 = arith.divf %139, %140 : vector<8x1xf32>
    %142 = vector.broadcast %141 : vector<8x1xf32> to vector<8x32xf32>
    %143 = arith.subf %135, %142 : vector<8x32xf32>
    %144 = arith.mulf %143, %143 : vector<8x32xf32>
    %cst_49 = arith.constant dense<0.000000e+00> : vector<8xf32>
    %145 = vector.multi_reduction <add>, %144, %cst_49 [1] : vector<8x32xf32> to vector<8xf32>
    %146 = vector.shape_cast %145 : vector<8xf32> to vector<8x1xf32>
    %cst_50 = arith.constant 3.100000e+01 : f32
    %147 = vector.broadcast %cst_50 : f32 to vector<8x1xf32>
    %148 = arith.divf %146, %147 : vector<8x1xf32>
    %149 = math.sqrt %148 : vector<8x1xf32>
    %cst_51 = arith.constant 9.99999997E-7 : f32
    %150 = vector.broadcast %cst_51 : f32 to vector<8x1xf32>
    %151 = arith.addf %149, %150 : vector<8x1xf32>
    %152 = tpu.reciprocal %151 {approx = true} : vector<8x1xf32> -> vector<8x1xf32>
    %153 = vector.extract_strided_slice %137 {offsets = [0, 0], sizes = [1, 32], strides = [1, 1]} : vector<2x32xf32> to vector<1x32xf32>
    %154 = vector.broadcast %141 : vector<8x1xf32> to vector<8x32xf32>
    %155 = arith.subf %135, %154 : vector<8x32xf32>
    %156 = vector.broadcast %153 : vector<1x32xf32> to vector<8x32xf32>
    %157 = arith.mulf %156, %155 : vector<8x32xf32>
    %158 = vector.broadcast %152 : vector<8x1xf32> to vector<8x32xf32>
    %159 = arith.mulf %157, %158 : vector<8x32xf32>
    %160 = vector.extract_strided_slice %137 {offsets = [1, 0], sizes = [1, 32], strides = [1, 1]} : vector<2x32xf32> to vector<1x32xf32>
    %161 = vector.broadcast %160 : vector<1x32xf32> to vector<8x32xf32>
    %162 = arith.addf %159, %161 : vector<8x32xf32>
    %c1_52 = arith.constant 1 : index
    %c0_53 = arith.constant 0 : index
    %c0_54 = arith.constant 0 : index
    %163 = vector.load %arg6[%c1_52, %c0_53, %c0_54] : memref<4x96x32xbf16, #tpu.memory_space<vmem>>, vector<1x96x32xbf16>
    %164 = vector.shape_cast %163 : vector<1x96x32xbf16> to vector<96x32xbf16>
    %c1_55 = arith.constant 1 : index
    %c0_56 = arith.constant 0 : index
    %c0_57 = arith.constant 0 : index
    %165 = vector.load %arg7[%c1_55, %c0_56, %c0_57] : memref<4x1x128xf32, #tpu.memory_space<vmem>>, vector<1x1x128xf32>
    %166 = vector.shape_cast %165 : vector<1x1x128xf32> to vector<1x128xf32>
    %167 = vector.extract_strided_slice %164 {offsets = [0, 0], sizes = [32, 32], strides = [1, 1]} : vector<96x32xbf16> to vector<32x32xbf16>
    %168 = arith.truncf %162 : vector<8x32xf32> to vector<8x32xbf16>
    %cst_58 = arith.constant dense<0.000000e+00> : vector<8x32xf32>
    %169 = tpu.matmul %168, %167, %cst_58 {dimension_numbers = #tpu.dot_dimension_numbers<[1], [1], [0], [0], [0, 0, 1, 0], [], []>} : vector<8x32xbf16>, vector<32x32xbf16>, vector<8x32xf32> -> vector<8x32xf32>
    %170 = vector.extract_strided_slice %166 {offsets = [0, 0], sizes = [1, 32], strides = [1, 1]} : vector<1x128xf32> to vector<1x32xf32>
    %171 = vector.broadcast %170 : vector<1x32xf32> to vector<8x32xf32>
    %172 = arith.addf %169, %171 : vector<8x32xf32>
    %173 = vector.extract_strided_slice %164 {offsets = [32, 0], sizes = [64, 32], strides = [1, 1]} : vector<96x32xbf16> to vector<64x32xbf16>
    %cst_59 = arith.constant dense<0.000000e+00> : vector<8x64xf32>
    %174 = tpu.matmul %3, %173, %cst_59 {dimension_numbers = #tpu.dot_dimension_numbers<[1], [1], [0], [0], [0, 0, 1, 0], [], []>} : vector<8x32xbf16>, vector<64x32xbf16>, vector<8x64xf32> -> vector<8x64xf32>
    %175 = vector.extract_strided_slice %166 {offsets = [0, 32], sizes = [1, 64], strides = [1, 1]} : vector<1x128xf32> to vector<1x64xf32>
    %176 = vector.broadcast %175 : vector<1x64xf32> to vector<8x64xf32>
    %177 = arith.addf %174, %176 : vector<8x64xf32>
    %178 = vector.extract_strided_slice %177 {offsets = [0, 0], sizes = [8, 32], strides = [1, 1]} : vector<8x64xf32> to vector<8x32xf32>
    %179 = vector.extract_strided_slice %177 {offsets = [0, 32], sizes = [8, 32], strides = [1, 1]} : vector<8x64xf32> to vector<8x32xf32>
    %180 = vector.extract_strided_slice %172 {offsets = [0, 0], sizes = [8, 8], strides = [1, 1]} : vector<8x32xf32> to vector<8x8xf32>
    %181 = arith.truncf %180 : vector<8x8xf32> to vector<8x8xbf16>
    %182 = vector.extract_strided_slice %178 {offsets = [0, 0], sizes = [8, 8], strides = [1, 1]} : vector<8x32xf32> to vector<8x8xf32>
    %183 = arith.truncf %182 : vector<8x8xf32> to vector<8x8xbf16>
    %184 = vector.extract_strided_slice %179 {offsets = [0, 0], sizes = [8, 8], strides = [1, 1]} : vector<8x32xf32> to vector<8x8xf32>
    %185 = arith.truncf %184 : vector<8x8xf32> to vector<8x8xbf16>
    %cst_60 = arith.constant dense<0.000000e+00> : vector<8x8xf32>
    %186 = tpu.matmul %181, %183, %cst_60 {dimension_numbers = #tpu.dot_dimension_numbers<[1], [1], [0], [0], [0, 0, 1, 0], [], []>} : vector<8x8xbf16>, vector<8x8xbf16>, vector<8x8xf32> -> vector<8x8xf32>
    %187 = arith.addf %186, %7 : vector<8x8xf32>
    %cst_61 = arith.constant dense<0xFF800000> : vector<8xf32>
    %188 = vector.multi_reduction <maximumf>, %187, %cst_61 [1] : vector<8x8xf32> to vector<8xf32>
    %189 = vector.shape_cast %188 : vector<8xf32> to vector<8x1xf32>
    %190 = vector.broadcast %189 : vector<8x1xf32> to vector<8x8xf32>
    %191 = arith.subf %187, %190 : vector<8x8xf32>
    %192 = math.exp %191 : vector<8x8xf32>
    %cst_62 = arith.constant dense<0.000000e+00> : vector<8xf32>
    %193 = vector.multi_reduction <add>, %192, %cst_62 [1] : vector<8x8xf32> to vector<8xf32>
    %194 = vector.shape_cast %193 : vector<8xf32> to vector<8x1xf32>
    %195 = tpu.reciprocal %194 {approx = true} : vector<8x1xf32> -> vector<8x1xf32>
    %196 = vector.broadcast %195 : vector<8x1xf32> to vector<8x8xf32>
    %197 = arith.mulf %192, %196 : vector<8x8xf32>
    %198 = arith.truncf %197 : vector<8x8xf32> to vector<8x8xbf16>
    %cst_63 = arith.constant dense<0.000000e+00> : vector<8x8xf32>
    %199 = tpu.matmul %198, %185, %cst_63 {dimension_numbers = #tpu.dot_dimension_numbers<[1], [0], [0], [1], [0, 0, 1, 1], [], []>} : vector<8x8xbf16>, vector<8x8xbf16>, vector<8x8xf32> -> vector<8x8xf32>
    %200 = vector.extract_strided_slice %172 {offsets = [0, 8], sizes = [8, 8], strides = [1, 1]} : vector<8x32xf32> to vector<8x8xf32>
    %201 = arith.truncf %200 : vector<8x8xf32> to vector<8x8xbf16>
    %202 = vector.extract_strided_slice %178 {offsets = [0, 8], sizes = [8, 8], strides = [1, 1]} : vector<8x32xf32> to vector<8x8xf32>
    %203 = arith.truncf %202 : vector<8x8xf32> to vector<8x8xbf16>
    %204 = vector.extract_strided_slice %179 {offsets = [0, 8], sizes = [8, 8], strides = [1, 1]} : vector<8x32xf32> to vector<8x8xf32>
    %205 = arith.truncf %204 : vector<8x8xf32> to vector<8x8xbf16>
    %cst_64 = arith.constant dense<0.000000e+00> : vector<8x8xf32>
    %206 = tpu.matmul %201, %203, %cst_64 {dimension_numbers = #tpu.dot_dimension_numbers<[1], [1], [0], [0], [0, 0, 1, 0], [], []>} : vector<8x8xbf16>, vector<8x8xbf16>, vector<8x8xf32> -> vector<8x8xf32>
    %207 = arith.addf %206, %7 : vector<8x8xf32>
    %cst_65 = arith.constant dense<0xFF800000> : vector<8xf32>
    %208 = vector.multi_reduction <maximumf>, %207, %cst_65 [1] : vector<8x8xf32> to vector<8xf32>
    %209 = vector.shape_cast %208 : vector<8xf32> to vector<8x1xf32>
    %210 = vector.broadcast %209 : vector<8x1xf32> to vector<8x8xf32>
    %211 = arith.subf %207, %210 : vector<8x8xf32>
    %212 = math.exp %211 : vector<8x8xf32>
    %cst_66 = arith.constant dense<0.000000e+00> : vector<8xf32>
    %213 = vector.multi_reduction <add>, %212, %cst_66 [1] : vector<8x8xf32> to vector<8xf32>
    %214 = vector.shape_cast %213 : vector<8xf32> to vector<8x1xf32>
    %215 = tpu.reciprocal %214 {approx = true} : vector<8x1xf32> -> vector<8x1xf32>
    %216 = vector.broadcast %215 : vector<8x1xf32> to vector<8x8xf32>
    %217 = arith.mulf %212, %216 : vector<8x8xf32>
    %218 = arith.truncf %217 : vector<8x8xf32> to vector<8x8xbf16>
    %cst_67 = arith.constant dense<0.000000e+00> : vector<8x8xf32>
    %219 = tpu.matmul %218, %205, %cst_67 {dimension_numbers = #tpu.dot_dimension_numbers<[1], [0], [0], [1], [0, 0, 1, 1], [], []>} : vector<8x8xbf16>, vector<8x8xbf16>, vector<8x8xf32> -> vector<8x8xf32>
    %220 = vector.extract_strided_slice %172 {offsets = [0, 16], sizes = [8, 8], strides = [1, 1]} : vector<8x32xf32> to vector<8x8xf32>
    %221 = arith.truncf %220 : vector<8x8xf32> to vector<8x8xbf16>
    %222 = vector.extract_strided_slice %178 {offsets = [0, 16], sizes = [8, 8], strides = [1, 1]} : vector<8x32xf32> to vector<8x8xf32>
    %223 = arith.truncf %222 : vector<8x8xf32> to vector<8x8xbf16>
    %224 = vector.extract_strided_slice %179 {offsets = [0, 16], sizes = [8, 8], strides = [1, 1]} : vector<8x32xf32> to vector<8x8xf32>
    %225 = arith.truncf %224 : vector<8x8xf32> to vector<8x8xbf16>
    %cst_68 = arith.constant dense<0.000000e+00> : vector<8x8xf32>
    %226 = tpu.matmul %221, %223, %cst_68 {dimension_numbers = #tpu.dot_dimension_numbers<[1], [1], [0], [0], [0, 0, 1, 0], [], []>} : vector<8x8xbf16>, vector<8x8xbf16>, vector<8x8xf32> -> vector<8x8xf32>
    %227 = arith.addf %226, %7 : vector<8x8xf32>
    %cst_69 = arith.constant dense<0xFF800000> : vector<8xf32>
    %228 = vector.multi_reduction <maximumf>, %227, %cst_69 [1] : vector<8x8xf32> to vector<8xf32>
    %229 = vector.shape_cast %228 : vector<8xf32> to vector<8x1xf32>
    %230 = vector.broadcast %229 : vector<8x1xf32> to vector<8x8xf32>
    %231 = arith.subf %227, %230 : vector<8x8xf32>
    %232 = math.exp %231 : vector<8x8xf32>
    %cst_70 = arith.constant dense<0.000000e+00> : vector<8xf32>
    %233 = vector.multi_reduction <add>, %232, %cst_70 [1] : vector<8x8xf32> to vector<8xf32>
    %234 = vector.shape_cast %233 : vector<8xf32> to vector<8x1xf32>
    %235 = tpu.reciprocal %234 {approx = true} : vector<8x1xf32> -> vector<8x1xf32>
    %236 = vector.broadcast %235 : vector<8x1xf32> to vector<8x8xf32>
    %237 = arith.mulf %232, %236 : vector<8x8xf32>
    %238 = arith.truncf %237 : vector<8x8xf32> to vector<8x8xbf16>
    %cst_71 = arith.constant dense<0.000000e+00> : vector<8x8xf32>
    %239 = tpu.matmul %238, %225, %cst_71 {dimension_numbers = #tpu.dot_dimension_numbers<[1], [0], [0], [1], [0, 0, 1, 1], [], []>} : vector<8x8xbf16>, vector<8x8xbf16>, vector<8x8xf32> -> vector<8x8xf32>
    %240 = vector.extract_strided_slice %172 {offsets = [0, 24], sizes = [8, 8], strides = [1, 1]} : vector<8x32xf32> to vector<8x8xf32>
    %241 = arith.truncf %240 : vector<8x8xf32> to vector<8x8xbf16>
    %242 = vector.extract_strided_slice %178 {offsets = [0, 24], sizes = [8, 8], strides = [1, 1]} : vector<8x32xf32> to vector<8x8xf32>
    %243 = arith.truncf %242 : vector<8x8xf32> to vector<8x8xbf16>
    %244 = vector.extract_strided_slice %179 {offsets = [0, 24], sizes = [8, 8], strides = [1, 1]} : vector<8x32xf32> to vector<8x8xf32>
    %245 = arith.truncf %244 : vector<8x8xf32> to vector<8x8xbf16>
    %cst_72 = arith.constant dense<0.000000e+00> : vector<8x8xf32>
    %246 = tpu.matmul %241, %243, %cst_72 {dimension_numbers = #tpu.dot_dimension_numbers<[1], [1], [0], [0], [0, 0, 1, 0], [], []>} : vector<8x8xbf16>, vector<8x8xbf16>, vector<8x8xf32> -> vector<8x8xf32>
    %247 = arith.addf %246, %7 : vector<8x8xf32>
    %cst_73 = arith.constant dense<0xFF800000> : vector<8xf32>
    %248 = vector.multi_reduction <maximumf>, %247, %cst_73 [1] : vector<8x8xf32> to vector<8xf32>
    %249 = vector.shape_cast %248 : vector<8xf32> to vector<8x1xf32>
    %250 = vector.broadcast %249 : vector<8x1xf32> to vector<8x8xf32>
    %251 = arith.subf %247, %250 : vector<8x8xf32>
    %252 = math.exp %251 : vector<8x8xf32>
    %cst_74 = arith.constant dense<0.000000e+00> : vector<8xf32>
    %253 = vector.multi_reduction <add>, %252, %cst_74 [1] : vector<8x8xf32> to vector<8xf32>
    %254 = vector.shape_cast %253 : vector<8xf32> to vector<8x1xf32>
    %255 = tpu.reciprocal %254 {approx = true} : vector<8x1xf32> -> vector<8x1xf32>
    %256 = vector.broadcast %255 : vector<8x1xf32> to vector<8x8xf32>
    %257 = arith.mulf %252, %256 : vector<8x8xf32>
    %258 = arith.truncf %257 : vector<8x8xf32> to vector<8x8xbf16>
    %cst_75 = arith.constant dense<0.000000e+00> : vector<8x8xf32>
    %259 = tpu.matmul %258, %245, %cst_75 {dimension_numbers = #tpu.dot_dimension_numbers<[1], [0], [0], [1], [0, 0, 1, 1], [], []>} : vector<8x8xbf16>, vector<8x8xbf16>, vector<8x8xf32> -> vector<8x8xf32>
    %260 = tpu.concatenate %199, %219, %239, %259 in 1 : vector<8x8xf32>, vector<8x8xf32>, vector<8x8xf32>, vector<8x8xf32> -> vector<8x32xf32>
    %c1_76 = arith.constant 1 : index
    %c0_77 = arith.constant 0 : index
    %c0_78 = arith.constant 0 : index
    %261 = vector.load %arg8[%c1_76, %c0_77, %c0_78] : memref<4x32x32xbf16, #tpu.memory_space<vmem>>, vector<1x32x32xbf16>
    %262 = vector.shape_cast %261 : vector<1x32x32xbf16> to vector<32x32xbf16>
    %263 = arith.truncf %260 : vector<8x32xf32> to vector<8x32xbf16>
    %cst_79 = arith.constant dense<0.000000e+00> : vector<8x32xf32>
    %264 = tpu.matmul %263, %262, %cst_79 {dimension_numbers = #tpu.dot_dimension_numbers<[1], [1], [0], [0], [0, 0, 1, 0], [], []>} : vector<8x32xbf16>, vector<32x32xbf16>, vector<8x32xf32> -> vector<8x32xf32>
    %265 = vector.extract_strided_slice %166 {offsets = [0, 96], sizes = [1, 32], strides = [1, 1]} : vector<1x128xf32> to vector<1x32xf32>
    %266 = vector.broadcast %265 : vector<1x32xf32> to vector<8x32xf32>
    %267 = arith.addf %264, %266 : vector<8x32xf32>
    %268 = arith.addf %135, %267 : vector<8x32xf32>
    %c2 = arith.constant 2 : index
    %c0_80 = arith.constant 0 : index
    %c0_81 = arith.constant 0 : index
    %269 = vector.load %arg5[%c2, %c0_80, %c0_81] : memref<7x2x32xf32, #tpu.memory_space<vmem>>, vector<1x2x32xf32>
    %270 = vector.shape_cast %269 : vector<1x2x32xf32> to vector<2x32xf32>
    %cst_82 = arith.constant dense<0.000000e+00> : vector<8xf32>
    %271 = vector.multi_reduction <add>, %268, %cst_82 [1] : vector<8x32xf32> to vector<8xf32>
    %272 = vector.shape_cast %271 : vector<8xf32> to vector<8x1xf32>
    %cst_83 = arith.constant 3.200000e+01 : f32
    %273 = vector.broadcast %cst_83 : f32 to vector<8x1xf32>
    %274 = arith.divf %272, %273 : vector<8x1xf32>
    %275 = vector.broadcast %274 : vector<8x1xf32> to vector<8x32xf32>
    %276 = arith.subf %268, %275 : vector<8x32xf32>
    %277 = arith.mulf %276, %276 : vector<8x32xf32>
    %cst_84 = arith.constant dense<0.000000e+00> : vector<8xf32>
    %278 = vector.multi_reduction <add>, %277, %cst_84 [1] : vector<8x32xf32> to vector<8xf32>
    %279 = vector.shape_cast %278 : vector<8xf32> to vector<8x1xf32>
    %cst_85 = arith.constant 3.100000e+01 : f32
    %280 = vector.broadcast %cst_85 : f32 to vector<8x1xf32>
    %281 = arith.divf %279, %280 : vector<8x1xf32>
    %282 = math.sqrt %281 : vector<8x1xf32>
    %cst_86 = arith.constant 9.99999997E-7 : f32
    %283 = vector.broadcast %cst_86 : f32 to vector<8x1xf32>
    %284 = arith.addf %282, %283 : vector<8x1xf32>
    %285 = tpu.reciprocal %284 {approx = true} : vector<8x1xf32> -> vector<8x1xf32>
    %286 = vector.extract_strided_slice %270 {offsets = [0, 0], sizes = [1, 32], strides = [1, 1]} : vector<2x32xf32> to vector<1x32xf32>
    %287 = vector.broadcast %274 : vector<8x1xf32> to vector<8x32xf32>
    %288 = arith.subf %268, %287 : vector<8x32xf32>
    %289 = vector.broadcast %286 : vector<1x32xf32> to vector<8x32xf32>
    %290 = arith.mulf %289, %288 : vector<8x32xf32>
    %291 = vector.broadcast %285 : vector<8x1xf32> to vector<8x32xf32>
    %292 = arith.mulf %290, %291 : vector<8x32xf32>
    %293 = vector.extract_strided_slice %270 {offsets = [1, 0], sizes = [1, 32], strides = [1, 1]} : vector<2x32xf32> to vector<1x32xf32>
    %294 = vector.broadcast %293 : vector<1x32xf32> to vector<8x32xf32>
    %295 = arith.addf %292, %294 : vector<8x32xf32>
    %c0_87 = arith.constant 0 : index
    %c0_88 = arith.constant 0 : index
    %c0_89 = arith.constant 0 : index
    %296 = vector.load %arg11[%c0_87, %c0_88, %c0_89] : memref<2x1x96xf32, #tpu.memory_space<vmem>>, vector<1x1x96xf32>
    %297 = vector.shape_cast %296 : vector<1x1x96xf32> to vector<1x96xf32>
    %c0_90 = arith.constant 0 : index
    %c0_91 = arith.constant 0 : index
    %c0_92 = arith.constant 0 : index
    %298 = vector.load %arg9[%c0_90, %c0_91, %c0_92] : memref<2x64x32xbf16, #tpu.memory_space<vmem>>, vector<1x64x32xbf16>
    %299 = vector.shape_cast %298 : vector<1x64x32xbf16> to vector<64x32xbf16>
    %300 = arith.truncf %295 : vector<8x32xf32> to vector<8x32xbf16>
    %cst_93 = arith.constant dense<0.000000e+00> : vector<8x64xf32>
    %301 = tpu.matmul %300, %299, %cst_93 {dimension_numbers = #tpu.dot_dimension_numbers<[1], [1], [0], [0], [0, 0, 1, 0], [], []>} : vector<8x32xbf16>, vector<64x32xbf16>, vector<8x64xf32> -> vector<8x64xf32>
    %302 = vector.extract_strided_slice %297 {offsets = [0, 0], sizes = [1, 64], strides = [1, 1]} : vector<1x96xf32> to vector<1x64xf32>
    %303 = vector.broadcast %302 : vector<1x64xf32> to vector<8x64xf32>
    %304 = arith.addf %301, %303 : vector<8x64xf32>
    %cst_94 = arith.constant 0.000000e+00 : f32
    %305 = vector.broadcast %cst_94 : f32 to vector<8x64xf32>
    %306 = arith.maximumf %304, %305 : vector<8x64xf32>
    %c0_95 = arith.constant 0 : index
    %c0_96 = arith.constant 0 : index
    %c0_97 = arith.constant 0 : index
    %307 = vector.load %arg10[%c0_95, %c0_96, %c0_97] : memref<2x32x64xbf16, #tpu.memory_space<vmem>>, vector<1x32x64xbf16>
    %308 = vector.shape_cast %307 : vector<1x32x64xbf16> to vector<32x64xbf16>
    %309 = arith.truncf %306 : vector<8x64xf32> to vector<8x64xbf16>
    %cst_98 = arith.constant dense<0.000000e+00> : vector<8x32xf32>
    %310 = tpu.matmul %309, %308, %cst_98 {dimension_numbers = #tpu.dot_dimension_numbers<[1], [1], [0], [0], [0, 0, 1, 0], [], []>} : vector<8x64xbf16>, vector<32x64xbf16>, vector<8x32xf32> -> vector<8x32xf32>
    %311 = arith.addf %268, %310 : vector<8x32xf32>
    %312 = vector.extract_strided_slice %297 {offsets = [0, 64], sizes = [1, 32], strides = [1, 1]} : vector<1x96xf32> to vector<1x32xf32>
    %313 = vector.broadcast %312 : vector<1x32xf32> to vector<8x32xf32>
    %314 = arith.addf %311, %313 : vector<8x32xf32>
    %c3 = arith.constant 3 : index
    %c0_99 = arith.constant 0 : index
    %c0_100 = arith.constant 0 : index
    %315 = vector.load %arg5[%c3, %c0_99, %c0_100] : memref<7x2x32xf32, #tpu.memory_space<vmem>>, vector<1x2x32xf32>
    %316 = vector.shape_cast %315 : vector<1x2x32xf32> to vector<2x32xf32>
    %cst_101 = arith.constant dense<0.000000e+00> : vector<8xf32>
    %317 = vector.multi_reduction <add>, %314, %cst_101 [1] : vector<8x32xf32> to vector<8xf32>
    %318 = vector.shape_cast %317 : vector<8xf32> to vector<8x1xf32>
    %cst_102 = arith.constant 3.200000e+01 : f32
    %319 = vector.broadcast %cst_102 : f32 to vector<8x1xf32>
    %320 = arith.divf %318, %319 : vector<8x1xf32>
    %321 = vector.broadcast %320 : vector<8x1xf32> to vector<8x32xf32>
    %322 = arith.subf %314, %321 : vector<8x32xf32>
    %323 = arith.mulf %322, %322 : vector<8x32xf32>
    %cst_103 = arith.constant dense<0.000000e+00> : vector<8xf32>
    %324 = vector.multi_reduction <add>, %323, %cst_103 [1] : vector<8x32xf32> to vector<8xf32>
    %325 = vector.shape_cast %324 : vector<8xf32> to vector<8x1xf32>
    %cst_104 = arith.constant 3.100000e+01 : f32
    %326 = vector.broadcast %cst_104 : f32 to vector<8x1xf32>
    %327 = arith.divf %325, %326 : vector<8x1xf32>
    %328 = math.sqrt %327 : vector<8x1xf32>
    %cst_105 = arith.constant 9.99999997E-7 : f32
    %329 = vector.broadcast %cst_105 : f32 to vector<8x1xf32>
    %330 = arith.addf %328, %329 : vector<8x1xf32>
    %331 = tpu.reciprocal %330 {approx = true} : vector<8x1xf32> -> vector<8x1xf32>
    %332 = vector.extract_strided_slice %316 {offsets = [0, 0], sizes = [1, 32], strides = [1, 1]} : vector<2x32xf32> to vector<1x32xf32>
    %333 = vector.broadcast %320 : vector<8x1xf32> to vector<8x32xf32>
    %334 = arith.subf %314, %333 : vector<8x32xf32>
    %335 = vector.broadcast %332 : vector<1x32xf32> to vector<8x32xf32>
    %336 = arith.mulf %335, %334 : vector<8x32xf32>
    %337 = vector.broadcast %331 : vector<8x1xf32> to vector<8x32xf32>
    %338 = arith.mulf %336, %337 : vector<8x32xf32>
    %339 = vector.extract_strided_slice %316 {offsets = [1, 0], sizes = [1, 32], strides = [1, 1]} : vector<2x32xf32> to vector<1x32xf32>
    %340 = vector.broadcast %339 : vector<1x32xf32> to vector<8x32xf32>
    %341 = arith.addf %338, %340 : vector<8x32xf32>
    %c2_106 = arith.constant 2 : index
    %c0_107 = arith.constant 0 : index
    %c0_108 = arith.constant 0 : index
    %342 = vector.load %arg6[%c2_106, %c0_107, %c0_108] : memref<4x96x32xbf16, #tpu.memory_space<vmem>>, vector<1x96x32xbf16>
    %343 = vector.shape_cast %342 : vector<1x96x32xbf16> to vector<96x32xbf16>
    %c2_109 = arith.constant 2 : index
    %c0_110 = arith.constant 0 : index
    %c0_111 = arith.constant 0 : index
    %344 = vector.load %arg7[%c2_109, %c0_110, %c0_111] : memref<4x1x128xf32, #tpu.memory_space<vmem>>, vector<1x1x128xf32>
    %345 = vector.shape_cast %344 : vector<1x1x128xf32> to vector<1x128xf32>
    %346 = arith.truncf %341 : vector<8x32xf32> to vector<8x32xbf16>
    %cst_112 = arith.constant dense<0.000000e+00> : vector<8x96xf32>
    %347 = tpu.matmul %346, %343, %cst_112 {dimension_numbers = #tpu.dot_dimension_numbers<[1], [1], [0], [0], [0, 0, 1, 0], [], []>} : vector<8x32xbf16>, vector<96x32xbf16>, vector<8x96xf32> -> vector<8x96xf32>
    %348 = vector.extract_strided_slice %345 {offsets = [0, 0], sizes = [1, 96], strides = [1, 1]} : vector<1x128xf32> to vector<1x96xf32>
    %349 = vector.broadcast %348 : vector<1x96xf32> to vector<8x96xf32>
    %350 = arith.addf %347, %349 : vector<8x96xf32>
    %351 = vector.extract_strided_slice %350 {offsets = [0, 0], sizes = [8, 32], strides = [1, 1]} : vector<8x96xf32> to vector<8x32xf32>
    %352 = vector.extract_strided_slice %350 {offsets = [0, 32], sizes = [8, 32], strides = [1, 1]} : vector<8x96xf32> to vector<8x32xf32>
    %353 = vector.extract_strided_slice %350 {offsets = [0, 64], sizes = [8, 32], strides = [1, 1]} : vector<8x96xf32> to vector<8x32xf32>
    %354 = vector.extract_strided_slice %351 {offsets = [0, 0], sizes = [8, 8], strides = [1, 1]} : vector<8x32xf32> to vector<8x8xf32>
    %355 = arith.truncf %354 : vector<8x8xf32> to vector<8x8xbf16>
    %356 = vector.extract_strided_slice %352 {offsets = [0, 0], sizes = [8, 8], strides = [1, 1]} : vector<8x32xf32> to vector<8x8xf32>
    %357 = arith.truncf %356 : vector<8x8xf32> to vector<8x8xbf16>
    %358 = vector.extract_strided_slice %353 {offsets = [0, 0], sizes = [8, 8], strides = [1, 1]} : vector<8x32xf32> to vector<8x8xf32>
    %359 = arith.truncf %358 : vector<8x8xf32> to vector<8x8xbf16>
    %cst_113 = arith.constant dense<0.000000e+00> : vector<8x8xf32>
    %360 = tpu.matmul %355, %357, %cst_113 {dimension_numbers = #tpu.dot_dimension_numbers<[1], [1], [0], [0], [0, 0, 1, 0], [], []>} : vector<8x8xbf16>, vector<8x8xbf16>, vector<8x8xf32> -> vector<8x8xf32>
    %361 = arith.addf %360, %5 : vector<8x8xf32>
    %cst_114 = arith.constant dense<0xFF800000> : vector<8xf32>
    %362 = vector.multi_reduction <maximumf>, %361, %cst_114 [1] : vector<8x8xf32> to vector<8xf32>
    %363 = vector.shape_cast %362 : vector<8xf32> to vector<8x1xf32>
    %364 = vector.broadcast %363 : vector<8x1xf32> to vector<8x8xf32>
    %365 = arith.subf %361, %364 : vector<8x8xf32>
    %366 = math.exp %365 : vector<8x8xf32>
    %cst_115 = arith.constant dense<0.000000e+00> : vector<8xf32>
    %367 = vector.multi_reduction <add>, %366, %cst_115 [1] : vector<8x8xf32> to vector<8xf32>
    %368 = vector.shape_cast %367 : vector<8xf32> to vector<8x1xf32>
    %369 = tpu.reciprocal %368 {approx = true} : vector<8x1xf32> -> vector<8x1xf32>
    %370 = vector.broadcast %369 : vector<8x1xf32> to vector<8x8xf32>
    %371 = arith.mulf %366, %370 : vector<8x8xf32>
    %372 = arith.truncf %371 : vector<8x8xf32> to vector<8x8xbf16>
    %cst_116 = arith.constant dense<0.000000e+00> : vector<8x8xf32>
    %373 = tpu.matmul %372, %359, %cst_116 {dimension_numbers = #tpu.dot_dimension_numbers<[1], [0], [0], [1], [0, 0, 1, 1], [], []>} : vector<8x8xbf16>, vector<8x8xbf16>, vector<8x8xf32> -> vector<8x8xf32>
    %374 = vector.extract_strided_slice %351 {offsets = [0, 8], sizes = [8, 8], strides = [1, 1]} : vector<8x32xf32> to vector<8x8xf32>
    %375 = arith.truncf %374 : vector<8x8xf32> to vector<8x8xbf16>
    %376 = vector.extract_strided_slice %352 {offsets = [0, 8], sizes = [8, 8], strides = [1, 1]} : vector<8x32xf32> to vector<8x8xf32>
    %377 = arith.truncf %376 : vector<8x8xf32> to vector<8x8xbf16>
    %378 = vector.extract_strided_slice %353 {offsets = [0, 8], sizes = [8, 8], strides = [1, 1]} : vector<8x32xf32> to vector<8x8xf32>
    %379 = arith.truncf %378 : vector<8x8xf32> to vector<8x8xbf16>
    %cst_117 = arith.constant dense<0.000000e+00> : vector<8x8xf32>
    %380 = tpu.matmul %375, %377, %cst_117 {dimension_numbers = #tpu.dot_dimension_numbers<[1], [1], [0], [0], [0, 0, 1, 0], [], []>} : vector<8x8xbf16>, vector<8x8xbf16>, vector<8x8xf32> -> vector<8x8xf32>
    %381 = arith.addf %380, %5 : vector<8x8xf32>
    %cst_118 = arith.constant dense<0xFF800000> : vector<8xf32>
    %382 = vector.multi_reduction <maximumf>, %381, %cst_118 [1] : vector<8x8xf32> to vector<8xf32>
    %383 = vector.shape_cast %382 : vector<8xf32> to vector<8x1xf32>
    %384 = vector.broadcast %383 : vector<8x1xf32> to vector<8x8xf32>
    %385 = arith.subf %381, %384 : vector<8x8xf32>
    %386 = math.exp %385 : vector<8x8xf32>
    %cst_119 = arith.constant dense<0.000000e+00> : vector<8xf32>
    %387 = vector.multi_reduction <add>, %386, %cst_119 [1] : vector<8x8xf32> to vector<8xf32>
    %388 = vector.shape_cast %387 : vector<8xf32> to vector<8x1xf32>
    %389 = tpu.reciprocal %388 {approx = true} : vector<8x1xf32> -> vector<8x1xf32>
    %390 = vector.broadcast %389 : vector<8x1xf32> to vector<8x8xf32>
    %391 = arith.mulf %386, %390 : vector<8x8xf32>
    %392 = arith.truncf %391 : vector<8x8xf32> to vector<8x8xbf16>
    %cst_120 = arith.constant dense<0.000000e+00> : vector<8x8xf32>
    %393 = tpu.matmul %392, %379, %cst_120 {dimension_numbers = #tpu.dot_dimension_numbers<[1], [0], [0], [1], [0, 0, 1, 1], [], []>} : vector<8x8xbf16>, vector<8x8xbf16>, vector<8x8xf32> -> vector<8x8xf32>
    %394 = vector.extract_strided_slice %351 {offsets = [0, 16], sizes = [8, 8], strides = [1, 1]} : vector<8x32xf32> to vector<8x8xf32>
    %395 = arith.truncf %394 : vector<8x8xf32> to vector<8x8xbf16>
    %396 = vector.extract_strided_slice %352 {offsets = [0, 16], sizes = [8, 8], strides = [1, 1]} : vector<8x32xf32> to vector<8x8xf32>
    %397 = arith.truncf %396 : vector<8x8xf32> to vector<8x8xbf16>
    %398 = vector.extract_strided_slice %353 {offsets = [0, 16], sizes = [8, 8], strides = [1, 1]} : vector<8x32xf32> to vector<8x8xf32>
    %399 = arith.truncf %398 : vector<8x8xf32> to vector<8x8xbf16>
    %cst_121 = arith.constant dense<0.000000e+00> : vector<8x8xf32>
    %400 = tpu.matmul %395, %397, %cst_121 {dimension_numbers = #tpu.dot_dimension_numbers<[1], [1], [0], [0], [0, 0, 1, 0], [], []>} : vector<8x8xbf16>, vector<8x8xbf16>, vector<8x8xf32> -> vector<8x8xf32>
    %401 = arith.addf %400, %5 : vector<8x8xf32>
    %cst_122 = arith.constant dense<0xFF800000> : vector<8xf32>
    %402 = vector.multi_reduction <maximumf>, %401, %cst_122 [1] : vector<8x8xf32> to vector<8xf32>
    %403 = vector.shape_cast %402 : vector<8xf32> to vector<8x1xf32>
    %404 = vector.broadcast %403 : vector<8x1xf32> to vector<8x8xf32>
    %405 = arith.subf %401, %404 : vector<8x8xf32>
    %406 = math.exp %405 : vector<8x8xf32>
    %cst_123 = arith.constant dense<0.000000e+00> : vector<8xf32>
    %407 = vector.multi_reduction <add>, %406, %cst_123 [1] : vector<8x8xf32> to vector<8xf32>
    %408 = vector.shape_cast %407 : vector<8xf32> to vector<8x1xf32>
    %409 = tpu.reciprocal %408 {approx = true} : vector<8x1xf32> -> vector<8x1xf32>
    %410 = vector.broadcast %409 : vector<8x1xf32> to vector<8x8xf32>
    %411 = arith.mulf %406, %410 : vector<8x8xf32>
    %412 = arith.truncf %411 : vector<8x8xf32> to vector<8x8xbf16>
    %cst_124 = arith.constant dense<0.000000e+00> : vector<8x8xf32>
    %413 = tpu.matmul %412, %399, %cst_124 {dimension_numbers = #tpu.dot_dimension_numbers<[1], [0], [0], [1], [0, 0, 1, 1], [], []>} : vector<8x8xbf16>, vector<8x8xbf16>, vector<8x8xf32> -> vector<8x8xf32>
    %414 = vector.extract_strided_slice %351 {offsets = [0, 24], sizes = [8, 8], strides = [1, 1]} : vector<8x32xf32> to vector<8x8xf32>
    %415 = arith.truncf %414 : vector<8x8xf32> to vector<8x8xbf16>
    %416 = vector.extract_strided_slice %352 {offsets = [0, 24], sizes = [8, 8], strides = [1, 1]} : vector<8x32xf32> to vector<8x8xf32>
    %417 = arith.truncf %416 : vector<8x8xf32> to vector<8x8xbf16>
    %418 = vector.extract_strided_slice %353 {offsets = [0, 24], sizes = [8, 8], strides = [1, 1]} : vector<8x32xf32> to vector<8x8xf32>
    %419 = arith.truncf %418 : vector<8x8xf32> to vector<8x8xbf16>
    %cst_125 = arith.constant dense<0.000000e+00> : vector<8x8xf32>
    %420 = tpu.matmul %415, %417, %cst_125 {dimension_numbers = #tpu.dot_dimension_numbers<[1], [1], [0], [0], [0, 0, 1, 0], [], []>} : vector<8x8xbf16>, vector<8x8xbf16>, vector<8x8xf32> -> vector<8x8xf32>
    %421 = arith.addf %420, %5 : vector<8x8xf32>
    %cst_126 = arith.constant dense<0xFF800000> : vector<8xf32>
    %422 = vector.multi_reduction <maximumf>, %421, %cst_126 [1] : vector<8x8xf32> to vector<8xf32>
    %423 = vector.shape_cast %422 : vector<8xf32> to vector<8x1xf32>
    %424 = vector.broadcast %423 : vector<8x1xf32> to vector<8x8xf32>
    %425 = arith.subf %421, %424 : vector<8x8xf32>
    %426 = math.exp %425 : vector<8x8xf32>
    %cst_127 = arith.constant dense<0.000000e+00> : vector<8xf32>
    %427 = vector.multi_reduction <add>, %426, %cst_127 [1] : vector<8x8xf32> to vector<8xf32>
    %428 = vector.shape_cast %427 : vector<8xf32> to vector<8x1xf32>
    %429 = tpu.reciprocal %428 {approx = true} : vector<8x1xf32> -> vector<8x1xf32>
    %430 = vector.broadcast %429 : vector<8x1xf32> to vector<8x8xf32>
    %431 = arith.mulf %426, %430 : vector<8x8xf32>
    %432 = arith.truncf %431 : vector<8x8xf32> to vector<8x8xbf16>
    %cst_128 = arith.constant dense<0.000000e+00> : vector<8x8xf32>
    %433 = tpu.matmul %432, %419, %cst_128 {dimension_numbers = #tpu.dot_dimension_numbers<[1], [0], [0], [1], [0, 0, 1, 1], [], []>} : vector<8x8xbf16>, vector<8x8xbf16>, vector<8x8xf32> -> vector<8x8xf32>
    %434 = tpu.concatenate %373, %393, %413, %433 in 1 : vector<8x8xf32>, vector<8x8xf32>, vector<8x8xf32>, vector<8x8xf32> -> vector<8x32xf32>
    %c2_129 = arith.constant 2 : index
    %c0_130 = arith.constant 0 : index
    %c0_131 = arith.constant 0 : index
    %435 = vector.load %arg8[%c2_129, %c0_130, %c0_131] : memref<4x32x32xbf16, #tpu.memory_space<vmem>>, vector<1x32x32xbf16>
    %436 = vector.shape_cast %435 : vector<1x32x32xbf16> to vector<32x32xbf16>
    %437 = arith.truncf %434 : vector<8x32xf32> to vector<8x32xbf16>
    %cst_132 = arith.constant dense<0.000000e+00> : vector<8x32xf32>
    %438 = tpu.matmul %437, %436, %cst_132 {dimension_numbers = #tpu.dot_dimension_numbers<[1], [1], [0], [0], [0, 0, 1, 0], [], []>} : vector<8x32xbf16>, vector<32x32xbf16>, vector<8x32xf32> -> vector<8x32xf32>
    %439 = vector.extract_strided_slice %345 {offsets = [0, 96], sizes = [1, 32], strides = [1, 1]} : vector<1x128xf32> to vector<1x32xf32>
    %440 = vector.broadcast %439 : vector<1x32xf32> to vector<8x32xf32>
    %441 = arith.addf %438, %440 : vector<8x32xf32>
    %442 = arith.addf %314, %441 : vector<8x32xf32>
    %c4 = arith.constant 4 : index
    %c0_133 = arith.constant 0 : index
    %c0_134 = arith.constant 0 : index
    %443 = vector.load %arg5[%c4, %c0_133, %c0_134] : memref<7x2x32xf32, #tpu.memory_space<vmem>>, vector<1x2x32xf32>
    %444 = vector.shape_cast %443 : vector<1x2x32xf32> to vector<2x32xf32>
    %cst_135 = arith.constant dense<0.000000e+00> : vector<8xf32>
    %445 = vector.multi_reduction <add>, %442, %cst_135 [1] : vector<8x32xf32> to vector<8xf32>
    %446 = vector.shape_cast %445 : vector<8xf32> to vector<8x1xf32>
    %cst_136 = arith.constant 3.200000e+01 : f32
    %447 = vector.broadcast %cst_136 : f32 to vector<8x1xf32>
    %448 = arith.divf %446, %447 : vector<8x1xf32>
    %449 = vector.broadcast %448 : vector<8x1xf32> to vector<8x32xf32>
    %450 = arith.subf %442, %449 : vector<8x32xf32>
    %451 = arith.mulf %450, %450 : vector<8x32xf32>
    %cst_137 = arith.constant dense<0.000000e+00> : vector<8xf32>
    %452 = vector.multi_reduction <add>, %451, %cst_137 [1] : vector<8x32xf32> to vector<8xf32>
    %453 = vector.shape_cast %452 : vector<8xf32> to vector<8x1xf32>
    %cst_138 = arith.constant 3.100000e+01 : f32
    %454 = vector.broadcast %cst_138 : f32 to vector<8x1xf32>
    %455 = arith.divf %453, %454 : vector<8x1xf32>
    %456 = math.sqrt %455 : vector<8x1xf32>
    %cst_139 = arith.constant 9.99999997E-7 : f32
    %457 = vector.broadcast %cst_139 : f32 to vector<8x1xf32>
    %458 = arith.addf %456, %457 : vector<8x1xf32>
    %459 = tpu.reciprocal %458 {approx = true} : vector<8x1xf32> -> vector<8x1xf32>
    %460 = vector.extract_strided_slice %444 {offsets = [0, 0], sizes = [1, 32], strides = [1, 1]} : vector<2x32xf32> to vector<1x32xf32>
    %461 = vector.broadcast %448 : vector<8x1xf32> to vector<8x32xf32>
    %462 = arith.subf %442, %461 : vector<8x32xf32>
    %463 = vector.broadcast %460 : vector<1x32xf32> to vector<8x32xf32>
    %464 = arith.mulf %463, %462 : vector<8x32xf32>
    %465 = vector.broadcast %459 : vector<8x1xf32> to vector<8x32xf32>
    %466 = arith.mulf %464, %465 : vector<8x32xf32>
    %467 = vector.extract_strided_slice %444 {offsets = [1, 0], sizes = [1, 32], strides = [1, 1]} : vector<2x32xf32> to vector<1x32xf32>
    %468 = vector.broadcast %467 : vector<1x32xf32> to vector<8x32xf32>
    %469 = arith.addf %466, %468 : vector<8x32xf32>
    %c3_140 = arith.constant 3 : index
    %c0_141 = arith.constant 0 : index
    %c0_142 = arith.constant 0 : index
    %470 = vector.load %arg6[%c3_140, %c0_141, %c0_142] : memref<4x96x32xbf16, #tpu.memory_space<vmem>>, vector<1x96x32xbf16>
    %471 = vector.shape_cast %470 : vector<1x96x32xbf16> to vector<96x32xbf16>
    %c3_143 = arith.constant 3 : index
    %c0_144 = arith.constant 0 : index
    %c0_145 = arith.constant 0 : index
    %472 = vector.load %arg7[%c3_143, %c0_144, %c0_145] : memref<4x1x128xf32, #tpu.memory_space<vmem>>, vector<1x1x128xf32>
    %473 = vector.shape_cast %472 : vector<1x1x128xf32> to vector<1x128xf32>
    %474 = vector.extract_strided_slice %471 {offsets = [0, 0], sizes = [32, 32], strides = [1, 1]} : vector<96x32xbf16> to vector<32x32xbf16>
    %475 = arith.truncf %469 : vector<8x32xf32> to vector<8x32xbf16>
    %cst_146 = arith.constant dense<0.000000e+00> : vector<8x32xf32>
    %476 = tpu.matmul %475, %474, %cst_146 {dimension_numbers = #tpu.dot_dimension_numbers<[1], [1], [0], [0], [0, 0, 1, 0], [], []>} : vector<8x32xbf16>, vector<32x32xbf16>, vector<8x32xf32> -> vector<8x32xf32>
    %477 = vector.extract_strided_slice %473 {offsets = [0, 0], sizes = [1, 32], strides = [1, 1]} : vector<1x128xf32> to vector<1x32xf32>
    %478 = vector.broadcast %477 : vector<1x32xf32> to vector<8x32xf32>
    %479 = arith.addf %476, %478 : vector<8x32xf32>
    %480 = vector.extract_strided_slice %471 {offsets = [32, 0], sizes = [64, 32], strides = [1, 1]} : vector<96x32xbf16> to vector<64x32xbf16>
    %cst_147 = arith.constant dense<0.000000e+00> : vector<8x64xf32>
    %481 = tpu.matmul %3, %480, %cst_147 {dimension_numbers = #tpu.dot_dimension_numbers<[1], [1], [0], [0], [0, 0, 1, 0], [], []>} : vector<8x32xbf16>, vector<64x32xbf16>, vector<8x64xf32> -> vector<8x64xf32>
    %482 = vector.extract_strided_slice %473 {offsets = [0, 32], sizes = [1, 64], strides = [1, 1]} : vector<1x128xf32> to vector<1x64xf32>
    %483 = vector.broadcast %482 : vector<1x64xf32> to vector<8x64xf32>
    %484 = arith.addf %481, %483 : vector<8x64xf32>
    %485 = vector.extract_strided_slice %484 {offsets = [0, 0], sizes = [8, 32], strides = [1, 1]} : vector<8x64xf32> to vector<8x32xf32>
    %486 = vector.extract_strided_slice %484 {offsets = [0, 32], sizes = [8, 32], strides = [1, 1]} : vector<8x64xf32> to vector<8x32xf32>
    %487 = vector.extract_strided_slice %479 {offsets = [0, 0], sizes = [8, 8], strides = [1, 1]} : vector<8x32xf32> to vector<8x8xf32>
    %488 = arith.truncf %487 : vector<8x8xf32> to vector<8x8xbf16>
    %489 = vector.extract_strided_slice %485 {offsets = [0, 0], sizes = [8, 8], strides = [1, 1]} : vector<8x32xf32> to vector<8x8xf32>
    %490 = arith.truncf %489 : vector<8x8xf32> to vector<8x8xbf16>
    %491 = vector.extract_strided_slice %486 {offsets = [0, 0], sizes = [8, 8], strides = [1, 1]} : vector<8x32xf32> to vector<8x8xf32>
    %492 = arith.truncf %491 : vector<8x8xf32> to vector<8x8xbf16>
    %cst_148 = arith.constant dense<0.000000e+00> : vector<8x8xf32>
    %493 = tpu.matmul %488, %490, %cst_148 {dimension_numbers = #tpu.dot_dimension_numbers<[1], [1], [0], [0], [0, 0, 1, 0], [], []>} : vector<8x8xbf16>, vector<8x8xbf16>, vector<8x8xf32> -> vector<8x8xf32>
    %494 = arith.addf %493, %7 : vector<8x8xf32>
    %cst_149 = arith.constant dense<0xFF800000> : vector<8xf32>
    %495 = vector.multi_reduction <maximumf>, %494, %cst_149 [1] : vector<8x8xf32> to vector<8xf32>
    %496 = vector.shape_cast %495 : vector<8xf32> to vector<8x1xf32>
    %497 = vector.broadcast %496 : vector<8x1xf32> to vector<8x8xf32>
    %498 = arith.subf %494, %497 : vector<8x8xf32>
    %499 = math.exp %498 : vector<8x8xf32>
    %cst_150 = arith.constant dense<0.000000e+00> : vector<8xf32>
    %500 = vector.multi_reduction <add>, %499, %cst_150 [1] : vector<8x8xf32> to vector<8xf32>
    %501 = vector.shape_cast %500 : vector<8xf32> to vector<8x1xf32>
    %502 = tpu.reciprocal %501 {approx = true} : vector<8x1xf32> -> vector<8x1xf32>
    %503 = vector.broadcast %502 : vector<8x1xf32> to vector<8x8xf32>
    %504 = arith.mulf %499, %503 : vector<8x8xf32>
    %505 = arith.truncf %504 : vector<8x8xf32> to vector<8x8xbf16>
    %cst_151 = arith.constant dense<0.000000e+00> : vector<8x8xf32>
    %506 = tpu.matmul %505, %492, %cst_151 {dimension_numbers = #tpu.dot_dimension_numbers<[1], [0], [0], [1], [0, 0, 1, 1], [], []>} : vector<8x8xbf16>, vector<8x8xbf16>, vector<8x8xf32> -> vector<8x8xf32>
    %507 = vector.extract_strided_slice %479 {offsets = [0, 8], sizes = [8, 8], strides = [1, 1]} : vector<8x32xf32> to vector<8x8xf32>
    %508 = arith.truncf %507 : vector<8x8xf32> to vector<8x8xbf16>
    %509 = vector.extract_strided_slice %485 {offsets = [0, 8], sizes = [8, 8], strides = [1, 1]} : vector<8x32xf32> to vector<8x8xf32>
    %510 = arith.truncf %509 : vector<8x8xf32> to vector<8x8xbf16>
    %511 = vector.extract_strided_slice %486 {offsets = [0, 8], sizes = [8, 8], strides = [1, 1]} : vector<8x32xf32> to vector<8x8xf32>
    %512 = arith.truncf %511 : vector<8x8xf32> to vector<8x8xbf16>
    %cst_152 = arith.constant dense<0.000000e+00> : vector<8x8xf32>
    %513 = tpu.matmul %508, %510, %cst_152 {dimension_numbers = #tpu.dot_dimension_numbers<[1], [1], [0], [0], [0, 0, 1, 0], [], []>} : vector<8x8xbf16>, vector<8x8xbf16>, vector<8x8xf32> -> vector<8x8xf32>
    %514 = arith.addf %513, %7 : vector<8x8xf32>
    %cst_153 = arith.constant dense<0xFF800000> : vector<8xf32>
    %515 = vector.multi_reduction <maximumf>, %514, %cst_153 [1] : vector<8x8xf32> to vector<8xf32>
    %516 = vector.shape_cast %515 : vector<8xf32> to vector<8x1xf32>
    %517 = vector.broadcast %516 : vector<8x1xf32> to vector<8x8xf32>
    %518 = arith.subf %514, %517 : vector<8x8xf32>
    %519 = math.exp %518 : vector<8x8xf32>
    %cst_154 = arith.constant dense<0.000000e+00> : vector<8xf32>
    %520 = vector.multi_reduction <add>, %519, %cst_154 [1] : vector<8x8xf32> to vector<8xf32>
    %521 = vector.shape_cast %520 : vector<8xf32> to vector<8x1xf32>
    %522 = tpu.reciprocal %521 {approx = true} : vector<8x1xf32> -> vector<8x1xf32>
    %523 = vector.broadcast %522 : vector<8x1xf32> to vector<8x8xf32>
    %524 = arith.mulf %519, %523 : vector<8x8xf32>
    %525 = arith.truncf %524 : vector<8x8xf32> to vector<8x8xbf16>
    %cst_155 = arith.constant dense<0.000000e+00> : vector<8x8xf32>
    %526 = tpu.matmul %525, %512, %cst_155 {dimension_numbers = #tpu.dot_dimension_numbers<[1], [0], [0], [1], [0, 0, 1, 1], [], []>} : vector<8x8xbf16>, vector<8x8xbf16>, vector<8x8xf32> -> vector<8x8xf32>
    %527 = vector.extract_strided_slice %479 {offsets = [0, 16], sizes = [8, 8], strides = [1, 1]} : vector<8x32xf32> to vector<8x8xf32>
    %528 = arith.truncf %527 : vector<8x8xf32> to vector<8x8xbf16>
    %529 = vector.extract_strided_slice %485 {offsets = [0, 16], sizes = [8, 8], strides = [1, 1]} : vector<8x32xf32> to vector<8x8xf32>
    %530 = arith.truncf %529 : vector<8x8xf32> to vector<8x8xbf16>
    %531 = vector.extract_strided_slice %486 {offsets = [0, 16], sizes = [8, 8], strides = [1, 1]} : vector<8x32xf32> to vector<8x8xf32>
    %532 = arith.truncf %531 : vector<8x8xf32> to vector<8x8xbf16>
    %cst_156 = arith.constant dense<0.000000e+00> : vector<8x8xf32>
    %533 = tpu.matmul %528, %530, %cst_156 {dimension_numbers = #tpu.dot_dimension_numbers<[1], [1], [0], [0], [0, 0, 1, 0], [], []>} : vector<8x8xbf16>, vector<8x8xbf16>, vector<8x8xf32> -> vector<8x8xf32>
    %534 = arith.addf %533, %7 : vector<8x8xf32>
    %cst_157 = arith.constant dense<0xFF800000> : vector<8xf32>
    %535 = vector.multi_reduction <maximumf>, %534, %cst_157 [1] : vector<8x8xf32> to vector<8xf32>
    %536 = vector.shape_cast %535 : vector<8xf32> to vector<8x1xf32>
    %537 = vector.broadcast %536 : vector<8x1xf32> to vector<8x8xf32>
    %538 = arith.subf %534, %537 : vector<8x8xf32>
    %539 = math.exp %538 : vector<8x8xf32>
    %cst_158 = arith.constant dense<0.000000e+00> : vector<8xf32>
    %540 = vector.multi_reduction <add>, %539, %cst_158 [1] : vector<8x8xf32> to vector<8xf32>
    %541 = vector.shape_cast %540 : vector<8xf32> to vector<8x1xf32>
    %542 = tpu.reciprocal %541 {approx = true} : vector<8x1xf32> -> vector<8x1xf32>
    %543 = vector.broadcast %542 : vector<8x1xf32> to vector<8x8xf32>
    %544 = arith.mulf %539, %543 : vector<8x8xf32>
    %545 = arith.truncf %544 : vector<8x8xf32> to vector<8x8xbf16>
    %cst_159 = arith.constant dense<0.000000e+00> : vector<8x8xf32>
    %546 = tpu.matmul %545, %532, %cst_159 {dimension_numbers = #tpu.dot_dimension_numbers<[1], [0], [0], [1], [0, 0, 1, 1], [], []>} : vector<8x8xbf16>, vector<8x8xbf16>, vector<8x8xf32> -> vector<8x8xf32>
    %547 = vector.extract_strided_slice %479 {offsets = [0, 24], sizes = [8, 8], strides = [1, 1]} : vector<8x32xf32> to vector<8x8xf32>
    %548 = arith.truncf %547 : vector<8x8xf32> to vector<8x8xbf16>
    %549 = vector.extract_strided_slice %485 {offsets = [0, 24], sizes = [8, 8], strides = [1, 1]} : vector<8x32xf32> to vector<8x8xf32>
    %550 = arith.truncf %549 : vector<8x8xf32> to vector<8x8xbf16>
    %551 = vector.extract_strided_slice %486 {offsets = [0, 24], sizes = [8, 8], strides = [1, 1]} : vector<8x32xf32> to vector<8x8xf32>
    %552 = arith.truncf %551 : vector<8x8xf32> to vector<8x8xbf16>
    %cst_160 = arith.constant dense<0.000000e+00> : vector<8x8xf32>
    %553 = tpu.matmul %548, %550, %cst_160 {dimension_numbers = #tpu.dot_dimension_numbers<[1], [1], [0], [0], [0, 0, 1, 0], [], []>} : vector<8x8xbf16>, vector<8x8xbf16>, vector<8x8xf32> -> vector<8x8xf32>
    %554 = arith.addf %553, %7 : vector<8x8xf32>
    %cst_161 = arith.constant dense<0xFF800000> : vector<8xf32>
    %555 = vector.multi_reduction <maximumf>, %554, %cst_161 [1] : vector<8x8xf32> to vector<8xf32>
    %556 = vector.shape_cast %555 : vector<8xf32> to vector<8x1xf32>
    %557 = vector.broadcast %556 : vector<8x1xf32> to vector<8x8xf32>
    %558 = arith.subf %554, %557 : vector<8x8xf32>
    %559 = math.exp %558 : vector<8x8xf32>
    %cst_162 = arith.constant dense<0.000000e+00> : vector<8xf32>
    %560 = vector.multi_reduction <add>, %559, %cst_162 [1] : vector<8x8xf32> to vector<8xf32>
    %561 = vector.shape_cast %560 : vector<8xf32> to vector<8x1xf32>
    %562 = tpu.reciprocal %561 {approx = true} : vector<8x1xf32> -> vector<8x1xf32>
    %563 = vector.broadcast %562 : vector<8x1xf32> to vector<8x8xf32>
    %564 = arith.mulf %559, %563 : vector<8x8xf32>
    %565 = arith.truncf %564 : vector<8x8xf32> to vector<8x8xbf16>
    %cst_163 = arith.constant dense<0.000000e+00> : vector<8x8xf32>
    %566 = tpu.matmul %565, %552, %cst_163 {dimension_numbers = #tpu.dot_dimension_numbers<[1], [0], [0], [1], [0, 0, 1, 1], [], []>} : vector<8x8xbf16>, vector<8x8xbf16>, vector<8x8xf32> -> vector<8x8xf32>
    %567 = tpu.concatenate %506, %526, %546, %566 in 1 : vector<8x8xf32>, vector<8x8xf32>, vector<8x8xf32>, vector<8x8xf32> -> vector<8x32xf32>
    %c3_164 = arith.constant 3 : index
    %c0_165 = arith.constant 0 : index
    %c0_166 = arith.constant 0 : index
    %568 = vector.load %arg8[%c3_164, %c0_165, %c0_166] : memref<4x32x32xbf16, #tpu.memory_space<vmem>>, vector<1x32x32xbf16>
    %569 = vector.shape_cast %568 : vector<1x32x32xbf16> to vector<32x32xbf16>
    %570 = arith.truncf %567 : vector<8x32xf32> to vector<8x32xbf16>
    %cst_167 = arith.constant dense<0.000000e+00> : vector<8x32xf32>
    %571 = tpu.matmul %570, %569, %cst_167 {dimension_numbers = #tpu.dot_dimension_numbers<[1], [1], [0], [0], [0, 0, 1, 0], [], []>} : vector<8x32xbf16>, vector<32x32xbf16>, vector<8x32xf32> -> vector<8x32xf32>
    %572 = vector.extract_strided_slice %473 {offsets = [0, 96], sizes = [1, 32], strides = [1, 1]} : vector<1x128xf32> to vector<1x32xf32>
    %573 = vector.broadcast %572 : vector<1x32xf32> to vector<8x32xf32>
    %574 = arith.addf %571, %573 : vector<8x32xf32>
    %575 = arith.addf %442, %574 : vector<8x32xf32>
    %c5 = arith.constant 5 : index
    %c0_168 = arith.constant 0 : index
    %c0_169 = arith.constant 0 : index
    %576 = vector.load %arg5[%c5, %c0_168, %c0_169] : memref<7x2x32xf32, #tpu.memory_space<vmem>>, vector<1x2x32xf32>
    %577 = vector.shape_cast %576 : vector<1x2x32xf32> to vector<2x32xf32>
    %cst_170 = arith.constant dense<0.000000e+00> : vector<8xf32>
    %578 = vector.multi_reduction <add>, %575, %cst_170 [1] : vector<8x32xf32> to vector<8xf32>
    %579 = vector.shape_cast %578 : vector<8xf32> to vector<8x1xf32>
    %cst_171 = arith.constant 3.200000e+01 : f32
    %580 = vector.broadcast %cst_171 : f32 to vector<8x1xf32>
    %581 = arith.divf %579, %580 : vector<8x1xf32>
    %582 = vector.broadcast %581 : vector<8x1xf32> to vector<8x32xf32>
    %583 = arith.subf %575, %582 : vector<8x32xf32>
    %584 = arith.mulf %583, %583 : vector<8x32xf32>
    %cst_172 = arith.constant dense<0.000000e+00> : vector<8xf32>
    %585 = vector.multi_reduction <add>, %584, %cst_172 [1] : vector<8x32xf32> to vector<8xf32>
    %586 = vector.shape_cast %585 : vector<8xf32> to vector<8x1xf32>
    %cst_173 = arith.constant 3.100000e+01 : f32
    %587 = vector.broadcast %cst_173 : f32 to vector<8x1xf32>
    %588 = arith.divf %586, %587 : vector<8x1xf32>
    %589 = math.sqrt %588 : vector<8x1xf32>
    %cst_174 = arith.constant 9.99999997E-7 : f32
    %590 = vector.broadcast %cst_174 : f32 to vector<8x1xf32>
    %591 = arith.addf %589, %590 : vector<8x1xf32>
    %592 = tpu.reciprocal %591 {approx = true} : vector<8x1xf32> -> vector<8x1xf32>
    %593 = vector.extract_strided_slice %577 {offsets = [0, 0], sizes = [1, 32], strides = [1, 1]} : vector<2x32xf32> to vector<1x32xf32>
    %594 = vector.broadcast %581 : vector<8x1xf32> to vector<8x32xf32>
    %595 = arith.subf %575, %594 : vector<8x32xf32>
    %596 = vector.broadcast %593 : vector<1x32xf32> to vector<8x32xf32>
    %597 = arith.mulf %596, %595 : vector<8x32xf32>
    %598 = vector.broadcast %592 : vector<8x1xf32> to vector<8x32xf32>
    %599 = arith.mulf %597, %598 : vector<8x32xf32>
    %600 = vector.extract_strided_slice %577 {offsets = [1, 0], sizes = [1, 32], strides = [1, 1]} : vector<2x32xf32> to vector<1x32xf32>
    %601 = vector.broadcast %600 : vector<1x32xf32> to vector<8x32xf32>
    %602 = arith.addf %599, %601 : vector<8x32xf32>
    %c1_175 = arith.constant 1 : index
    %c0_176 = arith.constant 0 : index
    %c0_177 = arith.constant 0 : index
    %603 = vector.load %arg11[%c1_175, %c0_176, %c0_177] : memref<2x1x96xf32, #tpu.memory_space<vmem>>, vector<1x1x96xf32>
    %604 = vector.shape_cast %603 : vector<1x1x96xf32> to vector<1x96xf32>
    %c1_178 = arith.constant 1 : index
    %c0_179 = arith.constant 0 : index
    %c0_180 = arith.constant 0 : index
    %605 = vector.load %arg9[%c1_178, %c0_179, %c0_180] : memref<2x64x32xbf16, #tpu.memory_space<vmem>>, vector<1x64x32xbf16>
    %606 = vector.shape_cast %605 : vector<1x64x32xbf16> to vector<64x32xbf16>
    %607 = arith.truncf %602 : vector<8x32xf32> to vector<8x32xbf16>
    %cst_181 = arith.constant dense<0.000000e+00> : vector<8x64xf32>
    %608 = tpu.matmul %607, %606, %cst_181 {dimension_numbers = #tpu.dot_dimension_numbers<[1], [1], [0], [0], [0, 0, 1, 0], [], []>} : vector<8x32xbf16>, vector<64x32xbf16>, vector<8x64xf32> -> vector<8x64xf32>
    %609 = vector.extract_strided_slice %604 {offsets = [0, 0], sizes = [1, 64], strides = [1, 1]} : vector<1x96xf32> to vector<1x64xf32>
    %610 = vector.broadcast %609 : vector<1x64xf32> to vector<8x64xf32>
    %611 = arith.addf %608, %610 : vector<8x64xf32>
    %cst_182 = arith.constant 0.000000e+00 : f32
    %612 = vector.broadcast %cst_182 : f32 to vector<8x64xf32>
    %613 = arith.maximumf %611, %612 : vector<8x64xf32>
    %c1_183 = arith.constant 1 : index
    %c0_184 = arith.constant 0 : index
    %c0_185 = arith.constant 0 : index
    %614 = vector.load %arg10[%c1_183, %c0_184, %c0_185] : memref<2x32x64xbf16, #tpu.memory_space<vmem>>, vector<1x32x64xbf16>
    %615 = vector.shape_cast %614 : vector<1x32x64xbf16> to vector<32x64xbf16>
    %616 = arith.truncf %613 : vector<8x64xf32> to vector<8x64xbf16>
    %cst_186 = arith.constant dense<0.000000e+00> : vector<8x32xf32>
    %617 = tpu.matmul %616, %615, %cst_186 {dimension_numbers = #tpu.dot_dimension_numbers<[1], [1], [0], [0], [0, 0, 1, 0], [], []>} : vector<8x64xbf16>, vector<32x64xbf16>, vector<8x32xf32> -> vector<8x32xf32>
    %618 = arith.addf %575, %617 : vector<8x32xf32>
    %619 = vector.extract_strided_slice %604 {offsets = [0, 64], sizes = [1, 32], strides = [1, 1]} : vector<1x96xf32> to vector<1x32xf32>
    %620 = vector.broadcast %619 : vector<1x32xf32> to vector<8x32xf32>
    %621 = arith.addf %618, %620 : vector<8x32xf32>
    %c6 = arith.constant 6 : index
    %c0_187 = arith.constant 0 : index
    %c0_188 = arith.constant 0 : index
    %622 = vector.load %arg5[%c6, %c0_187, %c0_188] : memref<7x2x32xf32, #tpu.memory_space<vmem>>, vector<1x2x32xf32>
    %623 = vector.shape_cast %622 : vector<1x2x32xf32> to vector<2x32xf32>
    %cst_189 = arith.constant dense<0.000000e+00> : vector<8xf32>
    %624 = vector.multi_reduction <add>, %621, %cst_189 [1] : vector<8x32xf32> to vector<8xf32>
    %625 = vector.shape_cast %624 : vector<8xf32> to vector<8x1xf32>
    %cst_190 = arith.constant 3.200000e+01 : f32
    %626 = vector.broadcast %cst_190 : f32 to vector<8x1xf32>
    %627 = arith.divf %625, %626 : vector<8x1xf32>
    %628 = vector.broadcast %627 : vector<8x1xf32> to vector<8x32xf32>
    %629 = arith.subf %621, %628 : vector<8x32xf32>
    %630 = arith.mulf %629, %629 : vector<8x32xf32>
    %cst_191 = arith.constant dense<0.000000e+00> : vector<8xf32>
    %631 = vector.multi_reduction <add>, %630, %cst_191 [1] : vector<8x32xf32> to vector<8xf32>
    %632 = vector.shape_cast %631 : vector<8xf32> to vector<8x1xf32>
    %cst_192 = arith.constant 3.100000e+01 : f32
    %633 = vector.broadcast %cst_192 : f32 to vector<8x1xf32>
    %634 = arith.divf %632, %633 : vector<8x1xf32>
    %635 = math.sqrt %634 : vector<8x1xf32>
    %cst_193 = arith.constant 9.99999997E-7 : f32
    %636 = vector.broadcast %cst_193 : f32 to vector<8x1xf32>
    %637 = arith.addf %635, %636 : vector<8x1xf32>
    %638 = tpu.reciprocal %637 {approx = true} : vector<8x1xf32> -> vector<8x1xf32>
    %639 = vector.extract_strided_slice %623 {offsets = [0, 0], sizes = [1, 32], strides = [1, 1]} : vector<2x32xf32> to vector<1x32xf32>
    %640 = vector.broadcast %627 : vector<8x1xf32> to vector<8x32xf32>
    %641 = arith.subf %621, %640 : vector<8x32xf32>
    %642 = vector.broadcast %639 : vector<1x32xf32> to vector<8x32xf32>
    %643 = arith.mulf %642, %641 : vector<8x32xf32>
    %644 = vector.broadcast %638 : vector<8x1xf32> to vector<8x32xf32>
    %645 = arith.mulf %643, %644 : vector<8x32xf32>
    %646 = vector.extract_strided_slice %623 {offsets = [1, 0], sizes = [1, 32], strides = [1, 1]} : vector<2x32xf32> to vector<1x32xf32>
    %647 = vector.broadcast %646 : vector<1x32xf32> to vector<8x32xf32>
    %648 = arith.addf %645, %647 : vector<8x32xf32>
    %c0_194 = arith.constant 0 : index
    %c0_195 = arith.constant 0 : index
    %c0_196 = arith.constant 0 : index
    %649 = vector.load %arg12[%c0_194, %c0_195, %c0_196] : memref<1x8x32xf32, #tpu.memory_space<vmem>>, vector<1x8x32xf32>
    %650 = vector.shape_cast %649 : vector<1x8x32xf32> to vector<8x32xf32>
    %651 = vector.shape_cast %648 : vector<8x32xf32> to vector<1x8x32xf32>
    tpu.vector_store %arg12[%c0_194, %c0_195, %c0_196], %651 {strides = array<i32>} : memref<1x8x32xf32, #tpu.memory_space<vmem>>, vector<1x8x32xf32>,
    return
  }
  func.func @transform_0(%arg0: i32) -> (i32, i32, i32) {
    %c0_i32 = arith.constant 0 : i32
    %c0_i32_0 = arith.constant 0 : i32
    %c0_i32_1 = arith.constant 0 : i32
    return %arg0, %c0_i32, %c0_i32_0 : i32, i32, i32
  }
  func.func @transform_1(%arg0: i32) -> (i32, i32, i32) {
    %c0_i32 = arith.constant 0 : i32
    %c0_i32_0 = arith.constant 0 : i32
    %c0_i32_1 = arith.constant 0 : i32
    return %arg0, %c0_i32, %c0_i32_0 : i32, i32, i32
  }
  func.func @transform_2(%arg0: i32) -> (i32, i32, i32) {
    %c0_i32 = arith.constant 0 : i32
    %c0_i32_0 = arith.constant 0 : i32
    %c0_i32_1 = arith.constant 0 : i32
    return %arg0, %c0_i32, %c0_i32_0 : i32, i32, i32
  }
  func.func @transform_3(%arg0: i32) -> (i32, i32, i32) {
    %c0_i32 = arith.constant 0 : i32
    %c0_i32_0 = arith.constant 0 : i32
    %c0_i32_1 = arith.constant 0 : i32
    return %arg0, %c0_i32, %c0_i32_0 : i32, i32, i32
  }
  func.func @transform_4(%arg0: i32) -> (i32, i32, i32) {
    %c0_i32 = arith.constant 0 : i32
    %c0_i32_0 = arith.constant 0 : i32
    %c0_i32_1 = arith.constant 0 : i32
    %c0_i32_2 = arith.constant 0 : i32
    return %c0_i32, %c0_i32_0, %c0_i32_1 : i32, i32, i32
  }
  func.func @transform_5(%arg0: i32) -> (i32, i32, i32) {
    %c0_i32 = arith.constant 0 : i32
    %c0_i32_0 = arith.constant 0 : i32
    %c0_i32_1 = arith.constant 0 : i32
    %c0_i32_2 = arith.constant 0 : i32
    return %c0_i32, %c0_i32_0, %c0_i32_1 : i32, i32, i32
  }
  func.func @transform_6(%arg0: i32) -> (i32, i32, i32) {
    %c0_i32 = arith.constant 0 : i32
    %c0_i32_0 = arith.constant 0 : i32
    %c0_i32_1 = arith.constant 0 : i32
    %c0_i32_2 = arith.constant 0 : i32
    return %c0_i32, %c0_i32_0, %c0_i32_1 : i32, i32, i32
  }
  func.func @transform_7(%arg0: i32) -> (i32, i32, i32) {
    %c0_i32 = arith.constant 0 : i32
    %c0_i32_0 = arith.constant 0 : i32
    %c0_i32_1 = arith.constant 0 : i32
    %c0_i32_2 = arith.constant 0 : i32
    return %c0_i32, %c0_i32_0, %c0_i32_1 : i32, i32, i32
  }
  func.func @transform_8(%arg0: i32) -> (i32, i32, i32) {
    %c0_i32 = arith.constant 0 : i32
    %c0_i32_0 = arith.constant 0 : i32
    %c0_i32_1 = arith.constant 0 : i32
    %c0_i32_2 = arith.constant 0 : i32
    return %c0_i32, %c0_i32_0, %c0_i32_1 : i32, i32, i32
  }
  func.func @transform_9(%arg0: i32) -> (i32, i32, i32) {
    %c0_i32 = arith.constant 0 : i32
    %c0_i32_0 = arith.constant 0 : i32
    %c0_i32_1 = arith.constant 0 : i32
    %c0_i32_2 = arith.constant 0 : i32
    return %c0_i32, %c0_i32_0, %c0_i32_1 : i32, i32, i32
  }
  func.func @transform_10(%arg0: i32) -> (i32, i32, i32) {
    %c0_i32 = arith.constant 0 : i32
    %c0_i32_0 = arith.constant 0 : i32
    %c0_i32_1 = arith.constant 0 : i32
    %c0_i32_2 = arith.constant 0 : i32
    return %c0_i32, %c0_i32_0, %c0_i32_1 : i32, i32, i32
  }
  func.func @transform_11(%arg0: i32) -> (i32, i32, i32) {
    %c0_i32 = arith.constant 0 : i32
    %c0_i32_0 = arith.constant 0 : i32
    %c0_i32_1 = arith.constant 0 : i32
    return %arg0, %c0_i32, %c0_i32_0 : i32, i32, i32
  }
}

</mosaic_0001>

<llo_original>
// kernel: tpu_custom_call.1
$region0: #{tpu_custom_call.1}
  #allocation0 [shape = 'u32[]', space=smem, size = 0x4, offset = 0x4, fixed_abs, tag = 'smem constant byte address 0x4 - core index']
  #allocation1 [shape = 'u32[144,128]{1,0:T(1,128)}', space=vmem, size = 0x12000, scoped, tag = 'internal scratch']
  %s0 = inlined_call_operand.vmem [shape: f32[2,8,32], index: 0, kind: input, shape index: {}]
  %s1 = inlined_call_operand.vmem [shape: bf16[2,8,32], index: 1, kind: input, shape index: {}]
  %s2 = inlined_call_operand.vmem [shape: f32[2,8,8], index: 2, kind: input, shape index: {}]
  %s3 = inlined_call_operand.vmem [shape: f32[2,8,8], index: 3, kind: input, shape index: {}]
  %s4 = inlined_call_operand.vmem [shape: f32[7,2,32], index: 4, kind: input, shape index: {}]
  %s5 = inlined_call_operand.vmem [shape: bf16[4,96,32], index: 5, kind: input, shape index: {}]
  %s6 = inlined_call_operand.vmem [shape: f32[4,1,128], index: 6, kind: input, shape index: {}]
  %s7 = inlined_call_operand.vmem [shape: bf16[4,32,32], index: 7, kind: input, shape index: {}]
  %s8 = inlined_call_operand.vmem [shape: bf16[2,64,32], index: 8, kind: input, shape index: {}]
  %s9 = inlined_call_operand.vmem [shape: bf16[2,32,64], index: 9, kind: input, shape index: {}]
  %s10 = inlined_call_operand.vmem [shape: f32[2,1,96], index: 10, kind: input, shape index: {}]
  %s11 = inlined_call_operand.hbm [shape: f32[2,8,32], index: 11, kind: output, shape index: {}]
  %s12 = sld [smem:[#allocation0]]
  $region77: #{tpu_custom_call.1} parent=0
    _
  %s14 = ssub.s32 1, %s12
  %s15 = scalar_select 0, %s14, %s12
  $region1: #{tpu_custom_call.1} parent=0
    #allocation2 [shape = 'u8[8192]{0}', space=vmem, size = 0x2000, scoped, tag = 'output window, operand 0']
    #allocation3 [shape = 's32[2]{0}', space=sflag, size = 0x8, scoped, tag = 'scoped memory for tpu_custom_call.1']
    %16 = vsyncpa [#allocation3], 0
    %s17 = scalar_lea.sflag [#allocation3], 1
    %18 = vsyncpa %s17, 0
    loop: start=0, step=1, limit=4
    $region2: #{tpu_custom_call.1} parent=1 // loop_pre_header
      _
    $region3: #{tpu_custom_call.1} parent=1 // loop_header
      %s20 = sphi 0, %s24
      %p21 = scmp.ge.s32.totalorder %s20, 4
      %s30 = sphi 0, %s32
      %s33 = sphi 0, %s30
      %s34 = sphi 0, %s33
      %s50 = sphi 0, %s34
      %s56 = sphi 0, %s58
      %s59 = sphi 0, %s56
      %s60 = sphi 0, %s59
      %s76 = sphi 0, %s60
      %s82 = sphi 0, %s84
      %s85 = sphi 0, %s82
      %s86 = sphi 0, %s85
      %s102 = sphi 0, %s86
      %s108 = sphi 0, %s110
      %s111 = sphi 0, %s108
      %s112 = sphi 0, %s111
      %s128 = sphi 0, %s112
      %s132 = sphi 0, %s132
      %s134 = sphi 0, %s132
      %s135 = sphi 0, %s134
      %s149 = sphi 0, %s135
      %s153 = sphi 0, %s153
      %s155 = sphi 0, %s153
      %s156 = sphi 0, %s155
      %s170 = sphi 0, %s156
      %s174 = sphi 0, %s174
      %s176 = sphi 0, %s174
      %s177 = sphi 0, %s176
      %s191 = sphi 0, %s177
      %s195 = sphi 0, %s195
      %s197 = sphi 0, %s195
      %s198 = sphi 0, %s197
      %s212 = sphi 0, %s198
      %s216 = sphi 0, %s216
      %s218 = sphi 0, %s216
      %s219 = sphi 0, %s218
      %s233 = sphi 0, %s219
      %s237 = sphi 0, %s237
      %s239 = sphi 0, %s237
      %s240 = sphi 0, %s239
      %s254 = sphi 0, %s240
      %s258 = sphi 0, %s258
      %s260 = sphi 0, %s258
      %s261 = sphi 0, %s260
      %s275 = sphi 0, %s261
      %s281 = sphi 0, %s283
      %s284 = sphi 0, %s281
      %s285 = sphi 0, %s284
      %s301 = sphi 0, %s285
    $region4: #{tpu_custom_call.1} parent=1 // loop_header_branch
      %23 = sbr.rel (%p21) target = $region8
    $region5: #{tpu_custom_call.1} parent=1 // loop_body
      %s25 = ssub.s32 %s20, 1
      %s26 = ssub.s32 %s20, 2
      %s27 = sadd.s32 %s20, 1
      %s28 = ssub.s32 %s20, %s27
      %p29 = scmp.eq.s32.totalorder %s28, 0
      %s31 = sadd.s32 %s30, 1
      %s32 = scalar_select %p29, %s30, %s31
      %p35 = pneg %p29
      %p36 = scmp.eq.s32.totalorder %s20, 1
      %p37 = por %p35, %p36
      %p38 = scmp.ne.s32.totalorder %s30, %s33
      %p39 = scmp.eq.s32.totalorder %s20, 0
      %p40 = por %p38, %p39
      %p41 = scmp.ne.s32.totalorder %s30, %s33
      %p42 = scmp.eq.s32.totalorder %s25, 1
      %p43 = por %p41, %p42
      %p44 = scmp.ne.s32.totalorder %s33, %s34
      %p45 = scmp.eq.s32.totalorder %s25, 0
      %p46 = por %p44, %p45
      %p47 = scmp.ne.s32.totalorder %s33, %s34
      %p48 = scmp.eq.s32.totalorder %s26, 1
      %p49 = por %p47, %p48
      %p51 = scmp.ne.s32.totalorder %s34, %s50
      %p52 = scmp.eq.s32.totalorder %s26, 0
      %p53 = por %p51, %p52
      %s54 = ssub.s32 %s20, %s27
      %p55 = scmp.eq.s32.totalorder %s54, 0
      %s57 = sadd.s32 %s56, 1
      %s58 = scalar_select %p55, %s56, %s57
      %p61 = pneg %p55
      %p62 = scmp.eq.s32.totalorder %s20, 1
      %p63 = por %p61, %p62
      %p64 = scmp.ne.s32.totalorder %s56, %s59
      %p65 = scmp.eq.s32.totalorder %s20, 0
      %p66 = por %p64, %p65
      %p67 = scmp.ne.s32.totalorder %s56, %s59
      %p68 = scmp.eq.s32.totalorder %s25, 1
      %p69 = por %p67, %p68
      %p70 = scmp.ne.s32.totalorder %s59, %s60
      %p71 = scmp.eq.s32.totalorder %s25, 0
      %p72 = por %p70, %p71
      %p73 = scmp.ne.s32.totalorder %s59, %s60
      %p74 = scmp.eq.s32.totalorder %s26, 1
      %p75 = por %p73, %p74
      %p77 = scmp.ne.s32.totalorder %s60, %s76
      %p78 = scmp.eq.s32.totalorder %s26, 0
      %p79 = por %p77, %p78
      %s80 = ssub.s32 %s20, %s27
      %p81 = scmp.eq.s32.totalorder %s80, 0
      %s83 = sadd.s32 %s82, 1
      %s84 = scalar_select %p81, %s82, %s83
      %p87 = pneg %p81
      %p88 = scmp.eq.s32.totalorder %s20, 1
      %p89 = por %p87, %p88
      %p90 = scmp.ne.s32.totalorder %s82, %s85
      %p91 = scmp.eq.s32.totalorder %s20, 0
      %p92 = por %p90, %p91
      %p93 = scmp.ne.s32.totalorder %s82, %s85
      %p94 = scmp.eq.s32.totalorder %s25, 1
      %p95 = por %p93, %p94
      %p96 = scmp.ne.s32.totalorder %s85, %s86
      %p97 = scmp.eq.s32.totalorder %s25, 0
      %p98 = por %p96, %p97
      %p99 = scmp.ne.s32.totalorder %s85, %s86
      %p100 = scmp.eq.s32.totalorder %s26, 1
      %p101 = por %p99, %p100
      %p103 = scmp.ne.s32.totalorder %s86, %s102
      %p104 = scmp.eq.s32.totalorder %s26, 0
      %p105 = por %p103, %p104
      %s106 = ssub.s32 %s20, %s27
      %p107 = scmp.eq.s32.totalorder %s106, 0
      %s109 = sadd.s32 %s108, 1
      %s110 = scalar_select %p107, %s108, %s109
      %p113 = pneg %p107
      %p114 = scmp.eq.s32.totalorder %s20, 1
      %p115 = por %p113, %p114
      %p116 = scmp.ne.s32.totalorder %s108, %s111
      %p117 = scmp.eq.s32.totalorder %s20, 0
      %p118 = por %p116, %p117
      %p119 = scmp.ne.s32.totalorder %s108, %s111
      %p120 = scmp.eq.s32.totalorder %s25, 1
      %p121 = por %p119, %p120
      %p122 = scmp.ne.s32.totalorder %s111, %s112
      %p123 = scmp.eq.s32.totalorder %s25, 0
      %p124 = por %p122, %p123
      %p125 = scmp.ne.s32.totalorder %s111, %s112
      %p126 = scmp.eq.s32.totalorder %s26, 1
      %p127 = por %p125, %p126
      %p129 = scmp.ne.s32.totalorder %s112, %s128
      %p130 = scmp.eq.s32.totalorder %s26, 0
      %p131 = por %p129, %p130
      %s133 = sadd.s32 %s132, 1
      %p136 = scmp.eq.s32.totalorder %s20, 1
      %p137 = scmp.ne.s32.totalorder %s132, %s134
      %p138 = scmp.eq.s32.totalorder %s20, 0
      %p139 = por %p137, %p138
      %p140 = scmp.ne.s32.totalorder %s132, %s134
      %p141 = scmp.eq.s32.totalorder %s25, 1
      %p142 = por %p140, %p141
      %p143 = scmp.ne.s32.totalorder %s134, %s135
      %p144 = scmp.eq.s32.totalorder %s25, 0
      %p145 = por %p143, %p144
      %p146 = scmp.ne.s32.totalorder %s134, %s135
      %p147 = scmp.eq.s32.totalorder %s26, 1
      %p148 = por %p146, %p147
      %p150 = scmp.ne.s32.totalorder %s135, %s149
      %p151 = scmp.eq.s32.totalorder %s26, 0
      %p152 = por %p150, %p151
      %s154 = sadd.s32 %s153, 1
      %p157 = scmp.eq.s32.totalorder %s20, 1
      %p158 = scmp.ne.s32.totalorder %s153, %s155
      %p159 = scmp.eq.s32.totalorder %s20, 0
      %p160 = por %p158, %p159
      %p161 = scmp.ne.s32.totalorder %s153, %s155
      %p162 = scmp.eq.s32.totalorder %s25, 1
      %p163 = por %p161, %p162
      %p164 = scmp.ne.s32.totalorder %s155, %s156
      %p165 = scmp.eq.s32.totalorder %s25, 0
      %p166 = por %p164, %p165
      %p167 = scmp.ne.s32.totalorder %s155, %s156
      %p168 = scmp.eq.s32.totalorder %s26, 1
      %p169 = por %p167, %p168
      %p171 = scmp.ne.s32.totalorder %s156, %s170
      %p172 = scmp.eq.s32.totalorder %s26, 0
      %p173 = por %p171, %p172
      %s175 = sadd.s32 %s174, 1
      %p178 = scmp.eq.s32.totalorder %s20, 1
      %p179 = scmp.ne.s32.totalorder %s174, %s176
      %p180 = scmp.eq.s32.totalorder %s20, 0
      %p181 = por %p179, %p180
      %p182 = scmp.ne.s32.totalorder %s174, %s176
      %p183 = scmp.eq.s32.totalorder %s25, 1
      %p184 = por %p182, %p183
      %p185 = scmp.ne.s32.totalorder %s176, %s177
      %p186 = scmp.eq.s32.totalorder %s25, 0
      %p187 = por %p185, %p186
      %p188 = scmp.ne.s32.totalorder %s176, %s177
      %p189 = scmp.eq.s32.totalorder %s26, 1
      %p190 = por %p188, %p189
      %p192 = scmp.ne.s32.totalorder %s177, %s191
      %p193 = scmp.eq.s32.totalorder %s26, 0
      %p194 = por %p192, %p193
      %s196 = sadd.s32 %s195, 1
      %p199 = scmp.eq.s32.totalorder %s20, 1
      %p200 = scmp.ne.s32.totalorder %s195, %s197
      %p201 = scmp.eq.s32.totalorder %s20, 0
      %p202 = por %p200, %p201
      %p203 = scmp.ne.s32.totalorder %s195, %s197
      %p204 = scmp.eq.s32.totalorder %s25, 1
      %p205 = por %p203, %p204
      %p206 = scmp.ne.s32.totalorder %s197, %s198
      %p207 = scmp.eq.s32.totalorder %s25, 0
      %p208 = por %p206, %p207
      %p209 = scmp.ne.s32.totalorder %s197, %s198
      %p210 = scmp.eq.s32.totalorder %s26, 1
      %p211 = por %p209, %p210
      %p213 = scmp.ne.s32.totalorder %s198, %s212
      %p214 = scmp.eq.s32.totalorder %s26, 0
      %p215 = por %p213, %p214
      %s217 = sadd.s32 %s216, 1
      %p220 = scmp.eq.s32.totalorder %s20, 1
      %p221 = scmp.ne.s32.totalorder %s216, %s218
      %p222 = scmp.eq.s32.totalorder %s20, 0
      %p223 = por %p221, %p222
      %p224 = scmp.ne.s32.totalorder %s216, %s218
      %p225 = scmp.eq.s32.totalorder %s25, 1
      %p226 = por %p224, %p225
      %p227 = scmp.ne.s32.totalorder %s218, %s219
      %p228 = scmp.eq.s32.totalorder %s25, 0
      %p229 = por %p227, %p228
      %p230 = scmp.ne.s32.totalorder %s218, %s219
      %p231 = scmp.eq.s32.totalorder %s26, 1
      %p232 = por %p230, %p231
      %p234 = scmp.ne.s32.totalorder %s219, %s233
      %p235 = scmp.eq.s32.totalorder %s26, 0
      %p236 = por %p234, %p235
      %s238 = sadd.s32 %s237, 1
      %p241 = scmp.eq.s32.totalorder %s20, 1
      %p242 = scmp.ne.s32.totalorder %s237, %s239
      %p243 = scmp.eq.s32.totalorder %s20, 0
      %p244 = por %p242, %p243
      %p245 = scmp.ne.s32.totalorder %s237, %s239
      %p246 = scmp.eq.s32.totalorder %s25, 1
      %p247 = por %p245, %p246
      %p248 = scmp.ne.s32.totalorder %s239, %s240
      %p249 = scmp.eq.s32.totalorder %s25, 0
      %p250 = por %p248, %p249
      %p251 = scmp.ne.s32.totalorder %s239, %s240
      %p252 = scmp.eq.s32.totalorder %s26, 1
      %p253 = por %p251, %p252
      %p255 = scmp.ne.s32.totalorder %s240, %s254
      %p256 = scmp.eq.s32.totalorder %s26, 0
      %p257 = por %p255, %p256
      %s259 = sadd.s32 %s258, 1
      %p262 = scmp.eq.s32.totalorder %s20, 1
      %p263 = scmp.ne.s32.totalorder %s258, %s260
      %p264 = scmp.eq.s32.totalorder %s20, 0
      %p265 = por %p263, %p264
      %p266 = scmp.ne.s32.totalorder %s258, %s260
      %p267 = scmp.eq.s32.totalorder %s25, 1
      %p268 = por %p266, %p267
      %p269 = scmp.ne.s32.totalorder %s260, %s261
      %p270 = scmp.eq.s32.totalorder %s25, 0
      %p271 = por %p269, %p270
      %p272 = scmp.ne.s32.totalorder %s260, %s261
      %p273 = scmp.eq.s32.totalorder %s26, 1
      %p274 = por %p272, %p273
      %p276 = scmp.ne.s32.totalorder %s261, %s275
      %p277 = scmp.eq.s32.totalorder %s26, 0
      %p278 = por %p276, %p277
      %s279 = ssub.s32 %s20, %s27
      %p280 = scmp.eq.s32.totalorder %s279, 0
      %s282 = sadd.s32 %s281, 1
      %s283 = scalar_select %p280, %s281, %s282
      %p286 = pneg %p280
      %p287 = scmp.eq.s32.totalorder %s20, 1
      %p288 = por %p286, %p287
      %p289 = scmp.ne.s32.totalorder %s281, %s284
      %p290 = scmp.eq.s32.totalorder %s20, 0
      %p291 = por %p289, %p290
      %p292 = scmp.ne.s32.totalorder %s281, %s284
      %p293 = scmp.eq.s32.totalorder %s25, 1
      %p294 = por %p292, %p293
      %p295 = scmp.ne.s32.totalorder %s284, %s285
      %p296 = scmp.eq.s32.totalorder %s25, 0
      %p297 = por %p295, %p296
      %p298 = scmp.ne.s32.totalorder %s284, %s285
      %p299 = scmp.eq.s32.totalorder %s26, 1
      %p300 = por %p298, %p299
      %p302 = scmp.ne.s32.totalorder %s285, %s301
      %p303 = scmp.eq.s32.totalorder %s26, 0
      %p304 = por %p302, %p303
      %p305 = scmp.le.s32.totalorder 1, %s20
      %p306 = scmp.lt.s32.totalorder %s20, 3
      %p307 = pnand %p305, %p306
      %p308 = pneg %p307
      // Predicated region
      $region9: #{tpu_custom_call.1} parent=5 // pred_check
        _
      $region10: #{tpu_custom_call.1} parent=5 // pred_check_branch
        %310 = sbr.rel (%p307) target = $region12
      $region11: #{tpu_custom_call.1} parent=5 // pred_region
        %s311 = ssub.s32 %s20, 1
        // Predicated region
        $region13: #{tpu_custom_call.1} parent=11 // pred_check
          %p312 = pneg %p145
        $region14: #{tpu_custom_call.1} parent=11 // pred_check_branch
          %314 = sbr.rel (%p312) target = $region16
        $region15: #{tpu_custom_call.1} parent=11 // pred_region
          _
        $region16: #{tpu_custom_call.1} parent=11 // pred_fallthru
          _
        // Predicated region
        $region17: #{tpu_custom_call.1} parent=11 // pred_check
          %p315 = pneg %p166
        $region18: #{tpu_custom_call.1} parent=11 // pred_check_branch
          %317 = sbr.rel (%p315) target = $region20
        $region19: #{tpu_custom_call.1} parent=11 // pred_region
          _
        $region20: #{tpu_custom_call.1} parent=11 // pred_fallthru
          _
        // Predicated region
        $region21: #{tpu_custom_call.1} parent=11 // pred_check
          %p318 = pneg %p187
        $region22: #{tpu_custom_call.1} parent=11 // pred_check_branch
          %320 = sbr.rel (%p318) target = $region24
        $region23: #{tpu_custom_call.1} parent=11 // pred_region
          _
        $region24: #{tpu_custom_call.1} parent=11 // pred_fallthru
          _
        // Predicated region
        $region25: #{tpu_custom_call.1} parent=11 // pred_check
          %p321 = pneg %p208
        $region26: #{tpu_custom_call.1} parent=11 // pred_check_branch
          %323 = sbr.rel (%p321) target = $region28
        $region27: #{tpu_custom_call.1} parent=11 // pred_region
          _
        $region28: #{tpu_custom_call.1} parent=11 // pred_fallthru
          _
        // Predicated region
        $region29: #{tpu_custom_call.1} parent=11 // pred_check
          %p324 = pneg %p229
        $region30: #{tpu_custom_call.1} parent=11 // pred_check_branch
          %326 = sbr.rel (%p324) target = $region32
        $region31: #{tpu_custom_call.1} parent=11 // pred_region
          _
        $region32: #{tpu_custom_call.1} parent=11 // pred_fallthru
          _
        // Predicated region
        $region33: #{tpu_custom_call.1} parent=11 // pred_check
          %p327 = pneg %p250
        $region34: #{tpu_custom_call.1} parent=11 // pred_check_branch
          %329 = sbr.rel (%p327) target = $region36
        $region35: #{tpu_custom_call.1} parent=11 // pred_region
          _
        $region36: #{tpu_custom_call.1} parent=11 // pred_fallthru
          _
        // Predicated region
        $region37: #{tpu_custom_call.1} parent=11 // pred_check
          %p330 = pneg %p271
        $region38: #{tpu_custom_call.1} parent=11 // pred_check_branch
          %332 = sbr.rel (%p330) target = $region40
        $region39: #{tpu_custom_call.1} parent=11 // pred_region
          _
        $region40: #{tpu_custom_call.1} parent=11 // pred_fallthru
          _
      $region12: #{tpu_custom_call.1} parent=5 // pred_fallthru
        _
      %p333 = scmp.lt.s32.totalorder %s20, 2
      // Predicated region
      $region41: #{tpu_custom_call.1} parent=5 // pred_check
        %p334 = pneg %p333
      $region42: #{tpu_custom_call.1} parent=5 // pred_check_branch
        %336 = sbr.rel (%p334) target = $region44
      $region43: #{tpu_custom_call.1} parent=5 // pred_region
        // Predicated region
        $region45: #{tpu_custom_call.1} parent=43 // pred_check
          %p337 = pneg %p40
        $region46: #{tpu_custom_call.1} parent=43 // pred_check_branch
          %339 = sbr.rel (%p337) target = $region48
        $region47: #{tpu_custom_call.1} parent=43 // pred_region
          %p340 = scmp.lt.s32.totalorder %s20, 1
          %s341 = scalar_select %p340, %s20, 1
          %s342 = smul.addr %s341, 8
          %s343 = scalar_lea.vmem %s0, %s342
        $region48: #{tpu_custom_call.1} parent=43 // pred_fallthru
          _
        // Predicated region
        $region49: #{tpu_custom_call.1} parent=43 // pred_check
          %p344 = pneg %p66
        $region50: #{tpu_custom_call.1} parent=43 // pred_check_branch
          %346 = sbr.rel (%p344) target = $region52
        $region51: #{tpu_custom_call.1} parent=43 // pred_region
          %p347 = scmp.lt.s32.totalorder %s20, 1
          %s348 = scalar_select %p347, %s20, 1
          %s349 = smul.addr %s348, 4
          %s350 = scalar_lea.vmem %s1, %s349
        $region52: #{tpu_custom_call.1} parent=43 // pred_fallthru
          _
        // Predicated region
        $region53: #{tpu_custom_call.1} parent=43 // pred_check
          %p351 = pneg %p92
        $region54: #{tpu_custom_call.1} parent=43 // pred_check_branch
          %353 = sbr.rel (%p351) target = $region56
        $region55: #{tpu_custom_call.1} parent=43 // pred_region
          %p354 = scmp.lt.s32.totalorder %s20, 1
          %s355 = scalar_select %p354, %s20, 1
          %s356 = smul.addr %s355, 8
          %s357 = scalar_lea.vmem %s2, %s356
        $region56: #{tpu_custom_call.1} parent=43 // pred_fallthru
          _
        // Predicated region
        $region57: #{tpu_custom_call.1} parent=43 // pred_check
          %p358 = pneg %p118
        $region58: #{tpu_custom_call.1} parent=43 // pred_check_branch
          %360 = sbr.rel (%p358) target = $region60
        $region59: #{tpu_custom_call.1} parent=43 // pred_region
          %p361 = scmp.lt.s32.totalorder %s20, 1
          %s362 = scalar_select %p361, %s20, 1
          %s363 = smul.addr %s362, 8
          %s364 = scalar_lea.vmem %s3, %s363
        $region60: #{tpu_custom_call.1} parent=43 // pred_fallthru
          _
      $region44: #{tpu_custom_call.1} parent=5 // pred_fallthru
        _
      %p365 = scmp.le.s32.totalorder 1, %s20
      %p366 = scmp.lt.s32.totalorder %s20, 3
      %p367 = pnand %p365, %p366
      %p368 = pneg %p367
      // Predicated region
      $region61: #{tpu_custom_call.1} parent=5 // pred_check
        _
      $region62: #{tpu_custom_call.1} parent=5 // pred_check_branch
        %370 = sbr.rel (%p367) target = $region64
      $region63: #{tpu_custom_call.1} parent=5 // pred_region
        %s371 = ssub.s32 %s20, 1
        %p372 = scmp.lt.s32.totalorder %s25, 1
        %s373 = scalar_select %p372, %s25, 1
        %s374 = smul.addr %s373, 8
        %s375 = scalar_lea.vmem %s0, %s374
        %p376 = pneg %p46
        %p377 = pneg %p43
        %p378 = scmp.lt.s32.totalorder %s25, 1
        %s379 = scalar_select %p378, %s25, 1
        %s380 = smul.addr %s379, 4
        %s381 = scalar_lea.vmem %s1, %s380
        %p382 = pneg %p72
        %p383 = pneg %p69
        %p384 = scmp.lt.s32.totalorder %s25, 1
        %s385 = scalar_select %p384, %s25, 1
        %s386 = smul.addr %s385, 8
        %s387 = scalar_lea.vmem %s2, %s386
        %p388 = pneg %p98
        %p389 = pneg %p95
        %p390 = scmp.lt.s32.totalorder %s25, 1
        %s391 = scalar_select %p390, %s25, 1
        %s392 = smul.addr %s391, 8
        %s393 = scalar_lea.vmem %s3, %s392
        %p394 = pneg %p124
        %p395 = pneg %p121
        %p396 = pneg %p145
        %p397 = pneg %p142
        %p398 = pneg %p166
        %p399 = pneg %p163
        %p400 = pneg %p187
        %p401 = pneg %p184
        %p402 = pneg %p208
        %p403 = pneg %p205
        %p404 = pneg %p229
        %p405 = pneg %p226
        %p406 = pneg %p250
        %p407 = pneg %p247
        %p408 = pneg %p271
        %p409 = pneg %p268
        %p410 = pneg %p297
        %p411 = pneg %p294
        %s412 = sand.u32 %s284, 1
        %s413 = scalar_lea.sflag [#allocation3], %s412
        %s414 = sand.u32 %s284, 1
        %s415 = smul.addr %s414, 8
        %s416 = scalar_lea.vmem [#allocation2], %s415
        %p417 = scmp.lt.s32.totalorder %s25, 1
        %s418 = scalar_select %p417, %s25, 1
        %s419 = smul.addr %s418, 8
        %s420 = scalar_lea.vmem %s0, %s419
        %p421 = scmp.lt.s32.totalorder %s25, 1
        %s422 = scalar_select %p421, %s25, 1
        %s423 = smul.addr %s422, 4
        %s424 = scalar_lea.vmem %s1, %s423
        %p425 = scmp.lt.s32.totalorder %s25, 1
        %s426 = scalar_select %p425, %s25, 1
        %s427 = smul.addr %s426, 8
        %s428 = scalar_lea.vmem %s2, %s427
        %p429 = scmp.lt.s32.totalorder %s25, 1
        %s430 = scalar_select %p429, %s25, 1
        %s431 = smul.addr %s430, 8
        %s432 = scalar_lea.vmem %s3, %s431
        %v434 = vld [vmem:[%s420] sm:$0xff]
        %v435 = vld [vmem:[%s424] sm:$0xf]
        %v436 = vld [vmem:[%s428] sm:$0xff]
        %v437 = vld [vmem:[%s432] sm:$0xff]
        %v438 = vld [vmem:[%s4] sm:$0x3]
        %vm439 = vcmask 261120
        %v440 = vsel %vm439, %v434, 0.0
        %441 = vadd.xlane.f32.xlu0 %v440
        %v442 = vpop.xlane.xlu0 %441
        %v443 = vrcp.pop 32.0
        %v444 = vmul.f32 %v442, %v443
        %v445 = vsub.f32 %v434, %v444
        %v446 = vmul.f32 %v445, %v445
        %v447 = vsel %vm439, %v446, 0.0
        %448 = vadd.xlane.f32.xlu0 %v447
        %v449 = vpop.xlane.xlu0 %448
        %v450 = vrcp.pop 31.0
        %v451 = vmul.f32 %v449, %v450
        %v452 = vrsqrt.pop %v451
        %v453 = vmul.f32 %v451, %v452
        %vm454 = vcmp.eq.f32.partialorder %v451, inf
        %v455 = vsel %vm454, %v451, %v453
        %vm456 = vcmp.eq.f32.partialorder %v451, 0.0
        %v457 = vand.u32 %v451, 2147483648
        %v458 = vsel %vm456, %v457, %v455
        %v459 = vadd.f32 %v458, 1e-06
        %v460 = vrcp.pop %v459
        %v461 = vlaneseq
        %v462 = vshrl.u32 %v461, 7
        %v463 = vsub.s32 0, %v462
        %v464 = vrot.slane %v438, %v463
        %v465 = vmul.f32 %v464, %v445
        %v466 = vmul.f32 %v465, %v460
        %v467 = vlaneseq
        %v468 = vshrl.u32 %v467, 7
        %v469 = vsub.s32 1, %v468
        %v470 = vrot.slane %v438, %v469
        %v471 = vadd.f32 %v466, %v470
        %v472 = vld [vmem:[%s5] sm:$0xf]
        %v473 = vld [vmem:[%s5 + $0x4] sm:$0xf]
        %v474 = vld [vmem:[%s5 + $0x8] sm:$0xf]
        %v475 = vld [vmem:[%s5 + $0xc] sm:$0xf]
        %v476 = vld [vmem:[%s5 + $0x10] sm:$0xf]
        %v477 = vld [vmem:[%s5 + $0x14] sm:$0xf]
        %v478 = vld [vmem:[%s5 + $0x18] sm:$0xf]
        %v479 = vld [vmem:[%s5 + $0x1c] sm:$0xf]
        %v480 = vld [vmem:[%s5 + $0x20] sm:$0xf]
        %v481 = vld [vmem:[%s5 + $0x24] sm:$0xf]
        %v482 = vld [vmem:[%s5 + $0x28] sm:$0xf]
        %v483 = vld [vmem:[%s5 + $0x2c] sm:$0xf]
        %v484 = vld [vmem:[%s6] sm:$0x1]
        %v485 = vpack.c.bf16 %v471, %v471
        %v487 = vlaneseq
        %v488 = vshrl.u32 %v487, 7
        %v489 = vsub.s32 0, %v488
        %v490 = vrot.slane %v484, %v489
        %v504 = vunpack.c.l.b16 %v472
        %v505 = vunpack.c.l.b16 %v473
        %v506 = vunpack.c.l.b16 %v474
        %v507 = vunpack.c.l.b16 %v475
        %v508 = vunpack.c.l.b16 %v476
        %v509 = vunpack.c.l.b16 %v477
        %v510 = vunpack.c.l.b16 %v478
        %v511 = vunpack.c.l.b16 %v479
        %v512 = vunpack.c.l.b16 %v480
        %v513 = vunpack.c.l.b16 %v481
        %v514 = vunpack.c.l.b16 %v482
        %v515 = vunpack.c.l.b16 %v483
        %v516 = vpack.c.b16 %v505, %v504
        %v517 = vpack.c.b16 %v507, %v506
        %v518 = vpack.c.b16 %v509, %v508
        %v519 = vpack.c.b16 %v511, %v510
        %v520 = vpack.c.b16 %v513, %v512
        %v521 = vpack.c.b16 %v515, %v514
        %v523 = vsel %vm439, %v485, 0
        %v526 = vsel %vm439, %v516, 0
        %v529 = vsel %vm439, %v517, 0
        %v532 = vsel %vm439, %v518, 0
        %v535 = vsel %vm439, %v519, 0
        %v538 = vsel %vm439, %v520, 0
        %v541 = vsel %vm439, %v521, 0
        %543 = vmatprep.subr.bf16.mxu0 0
        %544 = vmatpush1.bf16.xpose.msra.mxu0 %v526
        %545 = vmatprep.subr.bf16.mxu0 0
        %546 = vmatpush1.bf16.xpose.msra.mxu0 %v529
        %547 = vmatprep.subr.bf16.mxu0 0
        %548 = vmatpush1.bf16.xpose.msra.mxu0 %v532
        %549 = vmatprep.subr.bf16.mxu0 0
        %550 = vmatpush1.bf16.xpose.msra.mxu0 %v535
        %551 = vmatprep.subr.bf16.mxu0 0
        %552 = vmatpush1.bf16.xpose.msra.mxu0 %v538
        %553 = vmatprep.subr.bf16.mxu0 0
        %554 = vmatpush1.bf16.xpose.msra.mxu0 %v541
        %555 = vmatprep.subr.bf16.mxu0 0
        %556 = vmatpush1.bf16.xpose.msra.mxu0 0
        %557 = vmatprep.subr.bf16.mxu0 0
        %558 = vmatpush1.bf16.xpose.msra.mxu0 0
        %559 = vmatprep.subr.bf16.mxu0 0
        %560 = vmatpush1.bf16.xpose.msra.mxu0 0
        %561 = vmatprep.subr.bf16.mxu0 0
        %562 = vmatpush1.bf16.xpose.msra.mxu0 0
        %563 = vmatprep.subr.bf16.mxu0 0
        %564 = vmatpush1.bf16.xpose.msra.mxu0 0
        %565 = vmatprep.subr.bf16.mxu0 0
        %566 = vmatpush1.bf16.xpose.msra.mxu0 0
        %567 = vmatprep.subr.bf16.mxu0 0
        %568 = vmatpush1.bf16.xpose.msra.mxu0 0
        %569 = vmatprep.subr.bf16.mxu0 0
        %570 = vmatpush1.bf16.xpose.msra.mxu0 0
        %571 = vmatprep.subr.bf16.mxu0 0
        %572 = vmatpush1.bf16.xpose.msra.mxu0 0
        %573 = vmatprep.subr.bf16.mxu0 0
        %574 = vmatpush1.bf16.xpose.msra.mxu0 0
        %575 = vmatprep.mubr.bf16.mxu0 0
        %576 = vmatmul.mubr.bf16.gmra.mrb[0].mxu0 %v523
        %v577 = vpop.f32.mrb[0].mxu0
        %v578 = vadd.f32 %v490, %v577
        %v579 = vpop.f32.mrb[0].mxu0
        %v580 = vpop.f32.mrb[0].mxu0
        %v581 = vpop.f32.mrb[0].mxu0
        %582 = vdwg.mxu0
        %v583 = vpack.c.bf16 %v578, %v578
        %585 = vrot.lane.b32.xlu0 %v583, 96
        %v586 = vpop.permute.xlu0 %585
        %vm587 = vcmask 64512
        %v589 = vsel %vm587, %v583, 0
        %v592 = vsel %vm587, %v586, 0
        %594 = vmatprep.subr.bf16.mxu0 0
        %595 = vmatpush1.bf16.xpose.msra.mxu0 %v592
        %596 = vmatprep.subr.bf16.mxu0 0
        %597 = vmatpush1.bf16.xpose.msra.mxu0 0
        %598 = vmatprep.subr.bf16.mxu0 0
        %599 = vmatpush1.bf16.xpose.msra.mxu0 0
        %600 = vmatprep.subr.bf16.mxu0 0
        %601 = vmatpush1.bf16.xpose.msra.mxu0 0
        %602 = vmatprep.subr.bf16.mxu0 0
        %603 = vmatpush1.bf16.xpose.msra.mxu0 0
        %604 = vmatprep.subr.bf16.mxu0 0
        %605 = vmatpush1.bf16.xpose.msra.mxu0 0
        %606 = vmatprep.subr.bf16.mxu0 0
        %607 = vmatpush1.bf16.xpose.msra.mxu0 0
        %608 = vmatprep.subr.bf16.mxu0 0
        %609 = vmatpush1.bf16.xpose.msra.mxu0 0
        %610 = vmatprep.subr.bf16.mxu0 0
        %611 = vmatpush1.bf16.xpose.msra.mxu0 0
        %612 = vmatprep.subr.bf16.mxu0 0
        %613 = vmatpush1.bf16.xpose.msra.mxu0 0
        %614 = vmatprep.subr.bf16.mxu0 0
        %615 = vmatpush1.bf16.xpose.msra.mxu0 0
        %616 = vmatprep.subr.bf16.mxu0 0
        %617 = vmatpush1.bf16.xpose.msra.mxu0 0
        %618 = vmatprep.subr.bf16.mxu0 0
        %619 = vmatpush1.bf16.xpose.msra.mxu0 0
        %620 = vmatprep.subr.bf16.mxu0 0
        %621 = vmatpush1.bf16.xpose.msra.mxu0 0
        %622 = vmatprep.subr.bf16.mxu0 0
        %623 = vmatpush1.bf16.xpose.msra.mxu0 0
        %624 = vmatprep.subr.bf16.mxu0 0
        %625 = vmatpush1.bf16.xpose.msra.mxu0 0
        %626 = vmatprep.mubr.bf16.mxu0 0
        %627 = vmatmul.mubr.bf16.gmra.mrb[0].mxu0 %v589
        %v628 = vpop.f32.mrb[0].mxu0
        %v629 = vadd.f32 %v436, %v628
        %v630 = vpop.f32.mrb[0].mxu0
        %v631 = vpop.f32.mrb[0].mxu0
        %v632 = vpop.f32.mrb[0].mxu0
        %633 = vdwg.mxu0
        %v634 = vsel %vm587, %v629, -inf
        %635 = vmax.xlane.f32.xlu0 %v634
        %v636 = vpop.xlane.xlu0 %635
        %v637 = vsub.f32 %v629, %v636
        %v638 = vmul.f32 %v637, 1.442695
        %v639 = vpow.pop %v638
        %v640 = vsel %vm587, %v639, 0.0
        %641 = vadd.xlane.f32.xlu0 %v640
        %v642 = vpop.xlane.xlu0 %641
        %v643 = vrcp.pop %v642
        %v644 = vmul.f32 %v639, %v643
        %v645 = vpack.c.bf16 %v644, %v644
        %646 = vrot.lane.b32.xlu0 %v583, 64
        %v647 = vpop.permute.xlu0 %646
        %v649 = vsel %vm587, %v645, 0
        %vm651 = vcmask 1043456
        %v653 = vsel %vm651, %v647, 0
        %655 = vmatprep.subr.bf16.mxu0 0
        %656 = vmatpush1.bf16.msra.mxu0 %v653
        %657 = vmatprep.subr.bf16.mxu0 0
        %658 = vmatpush1.bf16.msra.mxu0 0
        %659 = vmatprep.subr.bf16.mxu0 0
        %660 = vmatpush1.bf16.msra.mxu0 0
        %661 = vmatprep.subr.bf16.mxu0 0
        %662 = vmatpush1.bf16.msra.mxu0 0
        %663 = vmatprep.subr.bf16.mxu0 0
        %664 = vmatpush1.bf16.msra.mxu0 0
        %665 = vmatprep.subr.bf16.mxu0 0
        %666 = vmatpush1.bf16.msra.mxu0 0
        %667 = vmatprep.subr.bf16.mxu0 0
        %668 = vmatpush1.bf16.msra.mxu0 0
        %669 = vmatprep.subr.bf16.mxu0 0
        %670 = vmatpush1.bf16.msra.mxu0 0
        %671 = vmatprep.subr.bf16.mxu0 0
        %672 = vmatpush1.bf16.msra.mxu0 0
        %673 = vmatprep.subr.bf16.mxu0 0
        %674 = vmatpush1.bf16.msra.mxu0 0
        %675 = vmatprep.subr.bf16.mxu0 0
        %676 = vmatpush1.bf16.msra.mxu0 0
        %677 = vmatprep.subr.bf16.mxu0 0
        %678 = vmatpush1.bf16.msra.mxu0 0
        %679 = vmatprep.subr.bf16.mxu0 0
        %680 = vmatpush1.bf16.msra.mxu0 0
        %681 = vmatprep.subr.bf16.mxu0 0
        %682 = vmatpush1.bf16.msra.mxu0 0
        %683 = vmatprep.subr.bf16.mxu0 0
        %684 = vmatpush1.bf16.msra.mxu0 0
        %685 = vmatprep.subr.bf16.mxu0 0
        %686 = vmatpush1.bf16.msra.mxu0 0
        %687 = vmatprep.mubr.bf16.mxu0 0
        %688 = vmatmul.mubr.bf16.gmra.mrb[0].mxu0 %v649
        %v689 = vpop.f32.mrb[0].mxu0
        %v690 = vadd.f32 0.0, %v689
        %v691 = vpop.f32.mrb[0].mxu0
        %v692 = vpop.f32.mrb[0].mxu0
        %v693 = vpop.f32.mrb[0].mxu0
        %694 = vdwg.mxu0
        %695 = vrot.lane.b32.xlu0 %v583, 120
        %v696 = vpop.permute.xlu0 %695
        %697 = vrot.lane.b32.xlu0 %v583, 88
        %v698 = vpop.permute.xlu0 %697
        %v700 = vsel %vm587, %v696, 0
        %v703 = vsel %vm587, %v698, 0
        %705 = vmatprep.subr.bf16.mxu0 0
        %706 = vmatpush1.bf16.xpose.msra.mxu0 %v703
        %707 = vmatprep.subr.bf16.mxu0 0
        %708 = vmatpush1.bf16.xpose.msra.mxu0 0
        %709 = vmatprep.subr.bf16.mxu0 0
        %710 = vmatpush1.bf16.xpose.msra.mxu0 0
        %711 = vmatprep.subr.bf16.mxu0 0
        %712 = vmatpush1.bf16.xpose.msra.mxu0 0
        %713 = vmatprep.subr.bf16.mxu0 0
        %714 = vmatpush1.bf16.xpose.msra.mxu0 0
        %715 = vmatprep.subr.bf16.mxu0 0
        %716 = vmatpush1.bf16.xpose.msra.mxu0 0
        %717 = vmatprep.subr.bf16.mxu0 0
        %718 = vmatpush1.bf16.xpose.msra.mxu0 0
        %719 = vmatprep.subr.bf16.mxu0 0
        %720 = vmatpush1.bf16.xpose.msra.mxu0 0
        %721 = vmatprep.subr.bf16.mxu0 0
        %722 = vmatpush1.bf16.xpose.msra.mxu0 0
        %723 = vmatprep.subr.bf16.mxu0 0
        %724 = vmatpush1.bf16.xpose.msra.mxu0 0
        %725 = vmatprep.subr.bf16.mxu0 0
        %726 = vmatpush1.bf16.xpose.msra.mxu0 0
        %727 = vmatprep.subr.bf16.mxu0 0
        %728 = vmatpush1.bf16.xpose.msra.mxu0 0
        %729 = vmatprep.subr.bf16.mxu0 0
        %730 = vmatpush1.bf16.xpose.msra.mxu0 0
        %731 = vmatprep.subr.bf16.mxu0 0
        %732 = vmatpush1.bf16.xpose.msra.mxu0 0
        %733 = vmatprep.subr.bf16.mxu0 0
        %734 = vmatpush1.bf16.xpose.msra.mxu0 0
        %735 = vmatprep.subr.bf16.mxu0 0
        %736 = vmatpush1.bf16.xpose.msra.mxu0 0
        %737 = vmatprep.mubr.bf16.mxu0 0
        %738 = vmatmul.mubr.bf16.gmra.mrb[0].mxu0 %v700
        %v739 = vpop.f32.mrb[0].mxu0
        %v740 = vadd.f32 %v436, %v739
        %v741 = vpop.f32.mrb[0].mxu0
        %v742 = vpop.f32.mrb[0].mxu0
        %v743 = vpop.f32.mrb[0].mxu0
        %744 = vdwg.mxu0
        %v745 = vsel %vm587, %v740, -inf
        %746 = vmax.xlane.f32.xlu0 %v745
        %v747 = vpop.xlane.xlu0 %746
        %v748 = vsub.f32 %v740, %v747
        %v749 = vmul.f32 %v748, 1.442695
        %v750 = vpow.pop %v749
        %v751 = vsel %vm587, %v750, 0.0
        %752 = vadd.xlane.f32.xlu0 %v751
        %v753 = vpop.xlane.xlu0 %752
        %v754 = vrcp.pop %v753
        %v755 = vmul.f32 %v750, %v754
        %v756 = vpack.c.bf16 %v755, %v755
        %757 = vrot.lane.b32.xlu0 %v583, 56
        %v758 = vpop.permute.xlu0 %757
        %v760 = vsel %vm587, %v756, 0
        %v763 = vsel %vm651, %v758, 0
        %765 = vmatprep.subr.bf16.mxu0 0
        %766 = vmatpush1.bf16.msra.mxu0 %v763
        %767 = vmatprep.subr.bf16.mxu0 0
        %768 = vmatpush1.bf16.msra.mxu0 0
        %769 = vmatprep.subr.bf16.mxu0 0
        %770 = vmatpush1.bf16.msra.mxu0 0
        %771 = vmatprep.subr.bf16.mxu0 0
        %772 = vmatpush1.bf16.msra.mxu0 0
        %773 = vmatprep.subr.bf16.mxu0 0
        %774 = vmatpush1.bf16.msra.mxu0 0
        %775 = vmatprep.subr.bf16.mxu0 0
        %776 = vmatpush1.bf16.msra.mxu0 0
        %777 = vmatprep.subr.bf16.mxu0 0
        %778 = vmatpush1.bf16.msra.mxu0 0
        %779 = vmatprep.subr.bf16.mxu0 0
        %780 = vmatpush1.bf16.msra.mxu0 0
        %781 = vmatprep.subr.bf16.mxu0 0
        %782 = vmatpush1.bf16.msra.mxu0 0
        %783 = vmatprep.subr.bf16.mxu0 0
        %784 = vmatpush1.bf16.msra.mxu0 0
        %785 = vmatprep.subr.bf16.mxu0 0
        %786 = vmatpush1.bf16.msra.mxu0 0
        %787 = vmatprep.subr.bf16.mxu0 0
        %788 = vmatpush1.bf16.msra.mxu0 0
        %789 = vmatprep.subr.bf16.mxu0 0
        %790 = vmatpush1.bf16.msra.mxu0 0
        %791 = vmatprep.subr.bf16.mxu0 0
        %792 = vmatpush1.bf16.msra.mxu0 0
        %793 = vmatprep.subr.bf16.mxu0 0
        %794 = vmatpush1.bf16.msra.mxu0 0
        %795 = vmatprep.subr.bf16.mxu0 0
        %796 = vmatpush1.bf16.msra.mxu0 0
        %797 = vmatprep.mubr.bf16.mxu0 0
        %798 = vmatmul.mubr.bf16.gmra.mrb[0].mxu0 %v760
        %v799 = vpop.f32.mrb[0].mxu0
        %v800 = vadd.f32 0.0, %v799
        %v801 = vpop.f32.mrb[0].mxu0
        %v802 = vpop.f32.mrb[0].mxu0
        %v803 = vpop.f32.mrb[0].mxu0
        %804 = vdwg.mxu0
        %805 = vrot.lane.b32.xlu0 %v583, 112
        %v806 = vpop.permute.xlu0 %805
        %807 = vrot.lane.b32.xlu0 %v583, 80
        %v808 = vpop.permute.xlu0 %807
        %v810 = vsel %vm587, %v806, 0
        %v813 = vsel %vm587, %v808, 0
        %815 = vmatprep.subr.bf16.mxu0 0
        %816 = vmatpush1.bf16.xpose.msra.mxu0 %v813
        %817 = vmatprep.subr.bf16.mxu0 0
        %818 = vmatpush1.bf16.xpose.msra.mxu0 0
        %819 = vmatprep.subr.bf16.mxu0 0
        %820 = vmatpush1.bf16.xpose.msra.mxu0 0
        %821 = vmatprep.subr.bf16.mxu0 0
        %822 = vmatpush1.bf16.xpose.msra.mxu0 0
        %823 = vmatprep.subr.bf16.mxu0 0
        %824 = vmatpush1.bf16.xpose.msra.mxu0 0
        %825 = vmatprep.subr.bf16.mxu0 0
        %826 = vmatpush1.bf16.xpose.msra.mxu0 0
        %827 = vmatprep.subr.bf16.mxu0 0
        %828 = vmatpush1.bf16.xpose.msra.mxu0 0
        %829 = vmatprep.subr.bf16.mxu0 0
        %830 = vmatpush1.bf16.xpose.msra.mxu0 0
        %831 = vmatprep.subr.bf16.mxu0 0
        %832 = vmatpush1.bf16.xpose.msra.mxu0 0
        %833 = vmatprep.subr.bf16.mxu0 0
        %834 = vmatpush1.bf16.xpose.msra.mxu0 0
        %835 = vmatprep.subr.bf16.mxu0 0
        %836 = vmatpush1.bf16.xpose.msra.mxu0 0
        %837 = vmatprep.subr.bf16.mxu0 0
        %838 = vmatpush1.bf16.xpose.msra.mxu0 0
        %839 = vmatprep.subr.bf16.mxu0 0
        %840 = vmatpush1.bf16.xpose.msra.mxu0 0
        %841 = vmatprep.subr.bf16.mxu0 0
        %842 = vmatpush1.bf16.xpose.msra.mxu0 0
        %843 = vmatprep.subr.bf16.mxu0 0
        %844 = vmatpush1.bf16.xpose.msra.mxu0 0
        %845 = vmatprep.subr.bf16.mxu0 0
        %846 = vmatpush1.bf16.xpose.msra.mxu0 0
        %847 = vmatprep.mubr.bf16.mxu0 0
        %848 = vmatmul.mubr.bf16.gmra.mrb[0].mxu0 %v810
        %v849 = vpop.f32.mrb[0].mxu0
        %v850 = vadd.f32 %v436, %v849
        %v851 = vpop.f32.mrb[0].mxu0
        %v852 = vpop.f32.mrb[0].mxu0
        %v853 = vpop.f32.mrb[0].mxu0
        %854 = vdwg.mxu0
        %v855 = vsel %vm587, %v850, -inf
        %856 = vmax.xlane.f32.xlu0 %v855
        %v857 = vpop.xlane.xlu0 %856
        %v858 = vsub.f32 %v850, %v857
        %v859 = vmul.f32 %v858, 1.442695
        %v860 = vpow.pop %v859
        %v861 = vsel %vm587, %v860, 0.0
        %862 = vadd.xlane.f32.xlu0 %v861
        %v863 = vpop.xlane.xlu0 %862
        %v864 = vrcp.pop %v863
        %v865 = vmul.f32 %v860, %v864
        %v866 = vpack.c.bf16 %v865, %v865
        %867 = vrot.lane.b32.xlu0 %v583, 48
        %v868 = vpop.permute.xlu0 %867
        %v870 = vsel %vm587, %v866, 0
        %v873 = vsel %vm651, %v868, 0
        %875 = vmatprep.subr.bf16.mxu0 0
        %876 = vmatpush1.bf16.msra.mxu0 %v873
        %877 = vmatprep.subr.bf16.mxu0 0
        %878 = vmatpush1.bf16.msra.mxu0 0
        %879 = vmatprep.subr.bf16.mxu0 0
        %880 = vmatpush1.bf16.msra.mxu0 0
        %881 = vmatprep.subr.bf16.mxu0 0
        %882 = vmatpush1.bf16.msra.mxu0 0
        %883 = vmatprep.subr.bf16.mxu0 0
        %884 = vmatpush1.bf16.msra.mxu0 0
        %885 = vmatprep.subr.bf16.mxu0 0
        %886 = vmatpush1.bf16.msra.mxu0 0
        %887 = vmatprep.subr.bf16.mxu0 0
        %888 = vmatpush1.bf16.msra.mxu0 0
        %889 = vmatprep.subr.bf16.mxu0 0
        %890 = vmatpush1.bf16.msra.mxu0 0
        %891 = vmatprep.subr.bf16.mxu0 0
        %892 = vmatpush1.bf16.msra.mxu0 0
        %893 = vmatprep.subr.bf16.mxu0 0
        %894 = vmatpush1.bf16.msra.mxu0 0
        %895 = vmatprep.subr.bf16.mxu0 0
        %896 = vmatpush1.bf16.msra.mxu0 0
        %897 = vmatprep.subr.bf16.mxu0 0
        %898 = vmatpush1.bf16.msra.mxu0 0
        %899 = vmatprep.subr.bf16.mxu0 0
        %900 = vmatpush1.bf16.msra.mxu0 0
        %901 = vmatprep.subr.bf16.mxu0 0
        %902 = vmatpush1.bf16.msra.mxu0 0
        %903 = vmatprep.subr.bf16.mxu0 0
        %904 = vmatpush1.bf16.msra.mxu0 0
        %905 = vmatprep.subr.bf16.mxu0 0
        %906 = vmatpush1.bf16.msra.mxu0 0
        %907 = vmatprep.mubr.bf16.mxu0 0
        %908 = vmatmul.mubr.bf16.gmra.mrb[0].mxu0 %v870
        %v909 = vpop.f32.mrb[0].mxu0
        %v910 = vadd.f32 0.0, %v909
        %v911 = vpop.f32.mrb[0].mxu0
        %v912 = vpop.f32.mrb[0].mxu0
        %v913 = vpop.f32.mrb[0].mxu0
        %914 = vdwg.mxu0
        %915 = vrot.lane.b32.xlu0 %v583, 104
        %v916 = vpop.permute.xlu0 %915
        %917 = vrot.lane.b32.xlu0 %v583, 72
        %v918 = vpop.permute.xlu0 %917
        %v920 = vsel %vm587, %v916, 0
        %v923 = vsel %vm587, %v918, 0
        %925 = vmatprep.subr.bf16.mxu0 0
        %926 = vmatpush1.bf16.xpose.msra.mxu0 %v923
        %927 = vmatprep.subr.bf16.mxu0 0
        %928 = vmatpush1.bf16.xpose.msra.mxu0 0
        %929 = vmatprep.subr.bf16.mxu0 0
        %930 = vmatpush1.bf16.xpose.msra.mxu0 0
        %931 = vmatprep.subr.bf16.mxu0 0
        %932 = vmatpush1.bf16.xpose.msra.mxu0 0
        %933 = vmatprep.subr.bf16.mxu0 0
        %934 = vmatpush1.bf16.xpose.msra.mxu0 0
        %935 = vmatprep.subr.bf16.mxu0 0
        %936 = vmatpush1.bf16.xpose.msra.mxu0 0
        %937 = vmatprep.subr.bf16.mxu0 0
        %938 = vmatpush1.bf16.xpose.msra.mxu0 0
        %939 = vmatprep.subr.bf16.mxu0 0
        %940 = vmatpush1.bf16.xpose.msra.mxu0 0
        %941 = vmatprep.subr.bf16.mxu0 0
        %942 = vmatpush1.bf16.xpose.msra.mxu0 0
        %943 = vmatprep.subr.bf16.mxu0 0
        %944 = vmatpush1.bf16.xpose.msra.mxu0 0
        %945 = vmatprep.subr.bf16.mxu0 0
        %946 = vmatpush1.bf16.xpose.msra.mxu0 0
        %947 = vmatprep.subr.bf16.mxu0 0
        %948 = vmatpush1.bf16.xpose.msra.mxu0 0
        %949 = vmatprep.subr.bf16.mxu0 0
        %950 = vmatpush1.bf16.xpose.msra.mxu0 0
        %951 = vmatprep.subr.bf16.mxu0 0
        %952 = vmatpush1.bf16.xpose.msra.mxu0 0
        %953 = vmatprep.subr.bf16.mxu0 0
        %954 = vmatpush1.bf16.xpose.msra.mxu0 0
        %955 = vmatprep.subr.bf16.mxu0 0
        %956 = vmatpush1.bf16.xpose.msra.mxu0 0
        %957 = vmatprep.mubr.bf16.mxu0 0
        %958 = vmatmul.mubr.bf16.gmra.mrb[0].mxu0 %v920
        %v959 = vpop.f32.mrb[0].mxu0
        %v960 = vadd.f32 %v436, %v959
        %v961 = vpop.f32.mrb[0].mxu0
        %v962 = vpop.f32.mrb[0].mxu0
        %v963 = vpop.f32.mrb[0].mxu0
        %964 = vdwg.mxu0
        %v965 = vsel %vm587, %v960, -inf
        %966 = vmax.xlane.f32.xlu0 %v965
        %v967 = vpop.xlane.xlu0 %966
        %v968 = vsub.f32 %v960, %v967
        %v969 = vmul.f32 %v968, 1.442695
        %v970 = vpow.pop %v969
        %v971 = vsel %vm587, %v970, 0.0
        %972 = vadd.xlane.f32.xlu0 %v971
        %v973 = vpop.xlane.xlu0 %972
        %v974 = vrcp.pop %v973
        %v975 = vmul.f32 %v970, %v974
        %v976 = vpack.c.bf16 %v975, %v975
        %977 = vrot.lane.b32.xlu0 %v583, 40
        %v978 = vpop.permute.xlu0 %977
        %v980 = vsel %vm587, %v976, 0
        %v983 = vsel %vm651, %v978, 0
        %985 = vmatprep.subr.bf16.mxu0 0
        %986 = vmatpush1.bf16.msra.mxu0 %v983
        %987 = vmatprep.subr.bf16.mxu0 0
        %988 = vmatpush1.bf16.msra.mxu0 0
        %989 = vmatprep.subr.bf16.mxu0 0
        %990 = vmatpush1.bf16.msra.mxu0 0
        %991 = vmatprep.subr.bf16.mxu0 0
        %992 = vmatpush1.bf16.msra.mxu0 0
        %993 = vmatprep.subr.bf16.mxu0 0
        %994 = vmatpush1.bf16.msra.mxu0 0
        %995 = vmatprep.subr.bf16.mxu0 0
        %996 = vmatpush1.bf16.msra.mxu0 0
        %997 = vmatprep.subr.bf16.mxu0 0
        %998 = vmatpush1.bf16.msra.mxu0 0
        %999 = vmatprep.subr.bf16.mxu0 0
        %1000 = vmatpush1.bf16.msra.mxu0 0
        %1001 = vmatprep.subr.bf16.mxu0 0
        %1002 = vmatpush1.bf16.msra.mxu0 0
        %1003 = vmatprep.subr.bf16.mxu0 0
        %1004 = vmatpush1.bf16.msra.mxu0 0
        %1005 = vmatprep.subr.bf16.mxu0 0
        %1006 = vmatpush1.bf16.msra.mxu0 0
        %1007 = vmatprep.subr.bf16.mxu0 0
        %1008 = vmatpush1.bf16.msra.mxu0 0
        %1009 = vmatprep.subr.bf16.mxu0 0
        %1010 = vmatpush1.bf16.msra.mxu0 0
        %1011 = vmatprep.subr.bf16.mxu0 0
        %1012 = vmatpush1.bf16.msra.mxu0 0
        %1013 = vmatprep.subr.bf16.mxu0 0
        %1014 = vmatpush1.bf16.msra.mxu0 0
        %1015 = vmatprep.subr.bf16.mxu0 0
        %1016 = vmatpush1.bf16.msra.mxu0 0
        %1017 = vmatprep.mubr.bf16.mxu0 0
        %1018 = vmatmul.mubr.bf16.gmra.mrb[0].mxu0 %v980
        %v1019 = vpop.f32.mrb[0].mxu0
        %v1020 = vadd.f32 0.0, %v1019
        %v1021 = vpop.f32.mrb[0].mxu0
        %v1022 = vpop.f32.mrb[0].mxu0
        %v1023 = vpop.f32.mrb[0].mxu0
        %1024 = vdwg.mxu0
        %1026 = vrot.lane.b32.xlu0 %v800, 8
        %v1027 = vpop.permute.xlu0 %1026
        %1030 = vrot.lane.b32.xlu0 %v910, 16
        %v1031 = vpop.permute.xlu0 %1030
        %1034 = vrot.lane.b32.xlu0 %v1020, 24
        %v1035 = vpop.permute.xlu0 %1034
        %v1037 = vsel %vm587, %v690, %v1027
        %vm1038 = vcmask 130048
        %v1039 = vsel %vm1038, %v1037, %v1031
        %vm1040 = vcmask 195584
        %v1041 = vsel %vm1040, %v1039, %v1035
        %v1042 = vld [vmem:[%s7] sm:$0xf]
        %v1043 = vld [vmem:[%s7 + $0x4] sm:$0xf]
        %v1044 = vld [vmem:[%s7 + $0x8] sm:$0xf]
        %v1045 = vld [vmem:[%s7 + $0xc] sm:$0xf]
        %v1046 = vpack.c.bf16 %v1041, %v1041
        %v1051 = vunpack.c.l.b16 %v1042
        %v1052 = vunpack.c.l.b16 %v1043
        %v1053 = vunpack.c.l.b16 %v1044
        %v1054 = vunpack.c.l.b16 %v1045
        %v1055 = vpack.c.b16 %v1052, %v1051
        %v1056 = vpack.c.b16 %v1054, %v1053
        %1057 = vrot.lane.b32.xlu0 %v490, 32
        %v1058 = vpop.permute.xlu0 %1057
        %v1061 = vsel %vm439, %v1046, 0
        %v1064 = vsel %vm439, %v1055, 0
        %v1067 = vsel %vm439, %v1056, 0
        %1069 = vmatprep.subr.bf16.mxu0 0
        %1070 = vmatpush1.bf16.xpose.msra.mxu0 %v1064
        %1071 = vmatprep.subr.bf16.mxu0 0
        %1072 = vmatpush1.bf16.xpose.msra.mxu0 %v1067
        %1073 = vmatprep.subr.bf16.mxu0 0
        %1074 = vmatpush1.bf16.xpose.msra.mxu0 0
        %1075 = vmatprep.subr.bf16.mxu0 0
        %1076 = vmatpush1.bf16.xpose.msra.mxu0 0
        %1077 = vmatprep.subr.bf16.mxu0 0
        %1078 = vmatpush1.bf16.xpose.msra.mxu0 0
        %1079 = vmatprep.subr.bf16.mxu0 0
        %1080 = vmatpush1.bf16.xpose.msra.mxu0 0
        %1081 = vmatprep.subr.bf16.mxu0 0
        %1082 = vmatpush1.bf16.xpose.msra.mxu0 0
        %1083 = vmatprep.subr.bf16.mxu0 0
        %1084 = vmatpush1.bf16.xpose.msra.mxu0 0
        %1085 = vmatprep.subr.bf16.mxu0 0
        %1086 = vmatpush1.bf16.xpose.msra.mxu0 0
        %1087 = vmatprep.subr.bf16.mxu0 0
        %1088 = vmatpush1.bf16.xpose.msra.mxu0 0
        %1089 = vmatprep.subr.bf16.mxu0 0
        %1090 = vmatpush1.bf16.xpose.msra.mxu0 0
        %1091 = vmatprep.subr.bf16.mxu0 0
        %1092 = vmatpush1.bf16.xpose.msra.mxu0 0
        %1093 = vmatprep.subr.bf16.mxu0 0
        %1094 = vmatpush1.bf16.xpose.msra.mxu0 0
        %1095 = vmatprep.subr.bf16.mxu0 0
        %1096 = vmatpush1.bf16.xpose.msra.mxu0 0
        %1097 = vmatprep.subr.bf16.mxu0 0
        %1098 = vmatpush1.bf16.xpose.msra.mxu0 0
        %1099 = vmatprep.subr.bf16.mxu0 0
        %1100 = vmatpush1.bf16.xpose.msra.mxu0 0
        %1101 = vmatprep.mubr.bf16.mxu0 0
        %1102 = vmatmul.mubr.bf16.gmra.mrb[0].mxu0 %v1061
        %v1103 = vpop.f32.mrb[0].mxu0
        %v1104 = vadd.f32 %v1058, %v1103
        %v1105 = vpop.f32.mrb[0].mxu0
        %v1106 = vpop.f32.mrb[0].mxu0
        %v1107 = vpop.f32.mrb[0].mxu0
        %1108 = vdwg.mxu0
        %v1109 = vadd.f32 %v434, %v1104
        %s1110 = scalar_lea.vmem %s4, 2
        %v1111 = vld [vmem:[%s1110] sm:$0x3]
        %v1112 = vsel %vm439, %v1109, 0.0
        %1113 = vadd.xlane.f32.xlu0 %v1112
        %v1114 = vpop.xlane.xlu0 %1113
        %v1115 = vmul.f32 %v1114, %v443
        %v1116 = vsub.f32 %v1109, %v1115
        %v1117 = vmul.f32 %v1116, %v1116
        %v1118 = vsel %vm439, %v1117, 0.0
        %1119 = vadd.xlane.f32.xlu0 %v1118
        %v1120 = vpop.xlane.xlu0 %1119
        %v1121 = vmul.f32 %v1120, %v450
        %v1122 = vrsqrt.pop %v1121
        %v1123 = vmul.f32 %v1121, %v1122
        %vm1124 = vcmp.eq.f32.partialorder %v1121, inf
        %v1125 = vsel %vm1124, %v1121, %v1123
        %vm1126 = vcmp.eq.f32.partialorder %v1121, 0.0
        %v1127 = vand.u32 %v1121, 2147483648
        %v1128 = vsel %vm1126, %v1127, %v1125
        %v1129 = vadd.f32 %v1128, 1e-06
        %v1130 = vrcp.pop %v1129
        %v1131 = vlaneseq
        %v1132 = vshrl.u32 %v1131, 7
        %v1133 = vsub.s32 0, %v1132
        %v1134 = vrot.slane %v1111, %v1133
        %v1135 = vmul.f32 %v1134, %v1116
        %v1136 = vmul.f32 %v1135, %v1130
        %v1137 = vlaneseq
        %v1138 = vshrl.u32 %v1137, 7
        %v1139 = vsub.s32 1, %v1138
        %v1140 = vrot.slane %v1111, %v1139
        %v1141 = vadd.f32 %v1136, %v1140
        %s1142 = scalar_lea.vmem %s5, 48
        %v1143 = vld [vmem:[%s1142] sm:$0xf]
        %v1144 = vld [vmem:[%s1142 + $0x4] sm:$0xf]
        %v1145 = vld [vmem:[%s1142 + $0x8] sm:$0xf]
        %v1146 = vld [vmem:[%s1142 + $0xc] sm:$0xf]
        %v1147 = vld [vmem:[%s1142 + $0x10] sm:$0xf]
        %v1148 = vld [vmem:[%s1142 + $0x14] sm:$0xf]
        %v1149 = vld [vmem:[%s1142 + $0x18] sm:$0xf]
        %v1150 = vld [vmem:[%s1142 + $0x1c] sm:$0xf]
        %v1151 = vld [vmem:[%s1142 + $0x20] sm:$0xf]
        %v1152 = vld [vmem:[%s1142 + $0x24] sm:$0xf]
        %v1153 = vld [vmem:[%s1142 + $0x28] sm:$0xf]
        %v1154 = vld [vmem:[%s1142 + $0x2c] sm:$0xf]
        %s1155 = scalar_lea.vmem %s6, 1
        %v1156 = vld [vmem:[%s1155] sm:$0x1]
        %v1157 = vpack.c.bf16 %v1141, %v1141
        %v1159 = vlaneseq
        %v1160 = vshrl.u32 %v1159, 7
        %v1161 = vsub.s32 0, %v1160
        %v1162 = vrot.slane %v1156, %v1161
        %v1168 = vunpack.c.l.b16 %v1143
        %v1169 = vunpack.c.l.b16 %v1144
        %v1170 = vunpack.c.l.b16 %v1145
        %v1171 = vunpack.c.l.b16 %v1146
        %v1172 = vpack.c.b16 %v1169, %v1168
        %v1173 = vpack.c.b16 %v1171, %v1170
        %v1175 = vsel %vm439, %v1157, 0
        %v1178 = vsel %vm439, %v1172, 0
        %v1181 = vsel %vm439, %v1173, 0
        %1183 = vmatprep.subr.bf16.mxu0 0
        %1184 = vmatpush1.bf16.xpose.msra.mxu0 %v1178
        %1185 = vmatprep.subr.bf16.mxu0 0
        %1186 = vmatpush1.bf16.xpose.msra.mxu0 %v1181
        %1187 = vmatprep.subr.bf16.mxu0 0
        %1188 = vmatpush1.bf16.xpose.msra.mxu0 0
        %1189 = vmatprep.subr.bf16.mxu0 0
        %1190 = vmatpush1.bf16.xpose.msra.mxu0 0
        %1191 = vmatprep.subr.bf16.mxu0 0
        %1192 = vmatpush1.bf16.xpose.msra.mxu0 0
        %1193 = vmatprep.subr.bf16.mxu0 0
        %1194 = vmatpush1.bf16.xpose.msra.mxu0 0
        %1195 = vmatprep.subr.bf16.mxu0 0
        %1196 = vmatpush1.bf16.xpose.msra.mxu0 0
        %1197 = vmatprep.subr.bf16.mxu0 0
        %1198 = vmatpush1.bf16.xpose.msra.mxu0 0
        %1199 = vmatprep.subr.bf16.mxu0 0
        %1200 = vmatpush1.bf16.xpose.msra.mxu0 0
        %1201 = vmatprep.subr.bf16.mxu0 0
        %1202 = vmatpush1.bf16.xpose.msra.mxu0 0
        %1203 = vmatprep.subr.bf16.mxu0 0
        %1204 = vmatpush1.bf16.xpose.msra.mxu0 0
        %1205 = vmatprep.subr.bf16.mxu0 0
        %1206 = vmatpush1.bf16.xpose.msra.mxu0 0
        %1207 = vmatprep.subr.bf16.mxu0 0
        %1208 = vmatpush1.bf16.xpose.msra.mxu0 0
        %1209 = vmatprep.subr.bf16.mxu0 0
        %1210 = vmatpush1.bf16.xpose.msra.mxu0 0
        %1211 = vmatprep.subr.bf16.mxu0 0
        %1212 = vmatpush1.bf16.xpose.msra.mxu0 0
        %1213 = vmatprep.subr.bf16.mxu0 0
        %1214 = vmatpush1.bf16.xpose.msra.mxu0 0
        %1215 = vmatprep.mubr.bf16.mxu0 0
        %1216 = vmatmul.mubr.bf16.gmra.mrb[0].mxu0 %v1175
        %v1217 = vpop.f32.mrb[0].mxu0
        %v1218 = vadd.f32 %v1162, %v1217
        %v1219 = vpop.f32.mrb[0].mxu0
        %v1220 = vpop.f32.mrb[0].mxu0
        %v1221 = vpop.f32.mrb[0].mxu0
        %1222 = vdwg.mxu0
        %v1231 = vunpack.c.l.b16 %v1147
        %v1232 = vunpack.c.l.b16 %v1148
        %v1233 = vunpack.c.l.b16 %v1149
        %v1234 = vunpack.c.l.b16 %v1150
        %v1235 = vunpack.c.l.b16 %v1151
        %v1236 = vunpack.c.l.b16 %v1152
        %v1237 = vunpack.c.l.b16 %v1153
        %v1238 = vunpack.c.l.b16 %v1154
        %v1239 = vpack.c.b16 %v1232, %v1231
        %v1240 = vpack.c.b16 %v1234, %v1233
        %v1241 = vpack.c.b16 %v1236, %v1235
        %v1242 = vpack.c.b16 %v1238, %v1237
        %1243 = vrot.lane.b32.xlu0 %v1162, 96
        %v1244 = vpop.permute.xlu0 %1243
        %v1247 = vsel %vm439, %v435, 0
        %v1250 = vsel %vm439, %v1239, 0
        %v1253 = vsel %vm439, %v1240, 0
        %v1256 = vsel %vm439, %v1241, 0
        %v1259 = vsel %vm439, %v1242, 0
        %1261 = vmatprep.subr.bf16.mxu0 0
        %1262 = vmatpush1.bf16.xpose.msra.mxu0 %v1250
        %1263 = vmatprep.subr.bf16.mxu0 0
        %1264 = vmatpush1.bf16.xpose.msra.mxu0 %v1253
        %1265 = vmatprep.subr.bf16.mxu0 0
        %1266 = vmatpush1.bf16.xpose.msra.mxu0 %v1256
        %1267 = vmatprep.subr.bf16.mxu0 0
        %1268 = vmatpush1.bf16.xpose.msra.mxu0 %v1259
        %1269 = vmatprep.subr.bf16.mxu0 0
        %1270 = vmatpush1.bf16.xpose.msra.mxu0 0
        %1271 = vmatprep.subr.bf16.mxu0 0
        %1272 = vmatpush1.bf16.xpose.msra.mxu0 0
        %1273 = vmatprep.subr.bf16.mxu0 0
        %1274 = vmatpush1.bf16.xpose.msra.mxu0 0
        %1275 = vmatprep.subr.bf16.mxu0 0
        %1276 = vmatpush1.bf16.xpose.msra.mxu0 0
        %1277 = vmatprep.subr.bf16.mxu0 0
        %1278 = vmatpush1.bf16.xpose.msra.mxu0 0
        %1279 = vmatprep.subr.bf16.mxu0 0
        %1280 = vmatpush1.bf16.xpose.msra.mxu0 0
        %1281 = vmatprep.subr.bf16.mxu0 0
        %1282 = vmatpush1.bf16.xpose.msra.mxu0 0
        %1283 = vmatprep.subr.bf16.mxu0 0
        %1284 = vmatpush1.bf16.xpose.msra.mxu0 0
        %1285 = vmatprep.subr.bf16.mxu0 0
        %1286 = vmatpush1.bf16.xpose.msra.mxu0 0
        %1287 = vmatprep.subr.bf16.mxu0 0
        %1288 = vmatpush1.bf16.xpose.msra.mxu0 0
        %1289 = vmatprep.subr.bf16.mxu0 0
        %1290 = vmatpush1.bf16.xpose.msra.mxu0 0
        %1291 = vmatprep.subr.bf16.mxu0 0
        %1292 = vmatpush1.bf16.xpose.msra.mxu0 0
        %1293 = vmatprep.mubr.bf16.mxu0 0
        %1294 = vmatmul.mubr.bf16.gmra.mrb[0].mxu0 %v1247
        %v1295 = vpop.f32.mrb[0].mxu0
        %v1296 = vadd.f32 %v1244, %v1295
        %v1297 = vpop.f32.mrb[0].mxu0
        %v1298 = vpop.f32.mrb[0].mxu0
        %v1299 = vpop.f32.mrb[0].mxu0
        %1300 = vdwg.mxu0
        %v1301 = vpack.c.bf16 %v1218, %v1218
        %v1302 = vpack.c.bf16 %v1296, %v1296
        %v1304 = vsel %vm587, %v1301, 0
        %v1307 = vsel %vm587, %v1302, 0
        %1309 = vmatprep.subr.bf16.mxu0 0
        %1310 = vmatpush1.bf16.xpose.msra.mxu0 %v1307
        %1311 = vmatprep.subr.bf16.mxu0 0
        %1312 = vmatpush1.bf16.xpose.msra.mxu0 0
        %1313 = vmatprep.subr.bf16.mxu0 0
        %1314 = vmatpush1.bf16.xpose.msra.mxu0 0
        %1315 = vmatprep.subr.bf16.mxu0 0
        %1316 = vmatpush1.bf16.xpose.msra.mxu0 0
        %1317 = vmatprep.subr.bf16.mxu0 0
        %1318 = vmatpush1.bf16.xpose.msra.mxu0 0
        %1319 = vmatprep.subr.bf16.mxu0 0
        %1320 = vmatpush1.bf16.xpose.msra.mxu0 0
        %1321 = vmatprep.subr.bf16.mxu0 0
        %1322 = vmatpush1.bf16.xpose.msra.mxu0 0
        %1323 = vmatprep.subr.bf16.mxu0 0
        %1324 = vmatpush1.bf16.xpose.msra.mxu0 0
        %1325 = vmatprep.subr.bf16.mxu0 0
        %1326 = vmatpush1.bf16.xpose.msra.mxu0 0
        %1327 = vmatprep.subr.bf16.mxu0 0
        %1328 = vmatpush1.bf16.xpose.msra.mxu0 0
        %1329 = vmatprep.subr.bf16.mxu0 0
        %1330 = vmatpush1.bf16.xpose.msra.mxu0 0
        %1331 = vmatprep.subr.bf16.mxu0 0
        %1332 = vmatpush1.bf16.xpose.msra.mxu0 0
        %1333 = vmatprep.subr.bf16.mxu0 0
        %1334 = vmatpush1.bf16.xpose.msra.mxu0 0
        %1335 = vmatprep.subr.bf16.mxu0 0
        %1336 = vmatpush1.bf16.xpose.msra.mxu0 0
        %1337 = vmatprep.subr.bf16.mxu0 0
        %1338 = vmatpush1.bf16.xpose.msra.mxu0 0
        %1339 = vmatprep.subr.bf16.mxu0 0
        %1340 = vmatpush1.bf16.xpose.msra.mxu0 0
        %1341 = vmatprep.mubr.bf16.mxu0 0
        %1342 = vmatmul.mubr.bf16.gmra.mrb[0].mxu0 %v1304
        %v1343 = vpop.f32.mrb[0].mxu0
        %v1344 = vadd.f32 %v437, %v1343
        %v1345 = vpop.f32.mrb[0].mxu0
        %v1346 = vpop.f32.mrb[0].mxu0
        %v1347 = vpop.f32.mrb[0].mxu0
        %1348 = vdwg.mxu0
        %v1349 = vsel %vm587, %v1344, -inf
        %1350 = vmax.xlane.f32.xlu0 %v1349
        %v1351 = vpop.xlane.xlu0 %1350
        %v1352 = vsub.f32 %v1344, %v1351
        %v1353 = vmul.f32 %v1352, 1.442695
        %v1354 = vpow.pop %v1353
        %v1355 = vsel %vm587, %v1354, 0.0
        %1356 = vadd.xlane.f32.xlu0 %v1355
        %v1357 = vpop.xlane.xlu0 %1356
        %v1358 = vrcp.pop %v1357
        %v1359 = vmul.f32 %v1354, %v1358
        %v1360 = vpack.c.bf16 %v1359, %v1359
        %1362 = vrot.lane.b32.xlu0 %v1302, 96
        %v1363 = vpop.permute.xlu0 %1362
        %v1365 = vsel %vm587, %v1360, 0
        %v1368 = vsel %vm651, %v1363, 0
        %1370 = vmatprep.subr.bf16.mxu0 0
        %1371 = vmatpush1.bf16.msra.mxu0 %v1368
        %1372 = vmatprep.subr.bf16.mxu0 0
        %1373 = vmatpush1.bf16.msra.mxu0 0
        %1374 = vmatprep.subr.bf16.mxu0 0
        %1375 = vmatpush1.bf16.msra.mxu0 0
        %1376 = vmatprep.subr.bf16.mxu0 0
        %1377 = vmatpush1.bf16.msra.mxu0 0
        %1378 = vmatprep.subr.bf16.mxu0 0
        %1379 = vmatpush1.bf16.msra.mxu0 0
        %1380 = vmatprep.subr.bf16.mxu0 0
        %1381 = vmatpush1.bf16.msra.mxu0 0
        %1382 = vmatprep.subr.bf16.mxu0 0
        %1383 = vmatpush1.bf16.msra.mxu0 0
        %1384 = vmatprep.subr.bf16.mxu0 0
        %1385 = vmatpush1.bf16.msra.mxu0 0
        %1386 = vmatprep.subr.bf16.mxu0 0
        %1387 = vmatpush1.bf16.msra.mxu0 0
        %1388 = vmatprep.subr.bf16.mxu0 0
        %1389 = vmatpush1.bf16.msra.mxu0 0
        %1390 = vmatprep.subr.bf16.mxu0 0
        %1391 = vmatpush1.bf16.msra.mxu0 0
        %1392 = vmatprep.subr.bf16.mxu0 0
        %1393 = vmatpush1.bf16.msra.mxu0 0
        %1394 = vmatprep.subr.bf16.mxu0 0
        %1395 = vmatpush1.bf16.msra.mxu0 0
        %1396 = vmatprep.subr.bf16.mxu0 0
        %1397 = vmatpush1.bf16.msra.mxu0 0
        %1398 = vmatprep.subr.bf16.mxu0 0
        %1399 = vmatpush1.bf16.msra.mxu0 0
        %1400 = vmatprep.subr.bf16.mxu0 0
        %1401 = vmatpush1.bf16.msra.mxu0 0
        %1402 = vmatprep.mubr.bf16.mxu0 0
        %1403 = vmatmul.mubr.bf16.gmra.mrb[0].mxu0 %v1365
        %v1404 = vpop.f32.mrb[0].mxu0
        %v1405 = vadd.f32 0.0, %v1404
        %v1406 = vpop.f32.mrb[0].mxu0
        %v1407 = vpop.f32.mrb[0].mxu0
        %v1408 = vpop.f32.mrb[0].mxu0
        %1409 = vdwg.mxu0
        %1411 = vrot.lane.b32.xlu0 %v1301, 120
        %v1412 = vpop.permute.xlu0 %1411
        %1413 = vrot.lane.b32.xlu0 %v1302, 120
        %v1414 = vpop.permute.xlu0 %1413
        %v1416 = vsel %vm587, %v1412, 0
        %v1419 = vsel %vm587, %v1414, 0
        %1421 = vmatprep.subr.bf16.mxu0 0
        %1422 = vmatpush1.bf16.xpose.msra.mxu0 %v1419
        %1423 = vmatprep.subr.bf16.mxu0 0
        %1424 = vmatpush1.bf16.xpose.msra.mxu0 0
        %1425 = vmatprep.subr.bf16.mxu0 0
        %1426 = vmatpush1.bf16.xpose.msra.mxu0 0
        %1427 = vmatprep.subr.bf16.mxu0 0
        %1428 = vmatpush1.bf16.xpose.msra.mxu0 0
        %1429 = vmatprep.subr.bf16.mxu0 0
        %1430 = vmatpush1.bf16.xpose.msra.mxu0 0
        %1431 = vmatprep.subr.bf16.mxu0 0
        %1432 = vmatpush1.bf16.xpose.msra.mxu0 0
        %1433 = vmatprep.subr.bf16.mxu0 0
        %1434 = vmatpush1.bf16.xpose.msra.mxu0 0
        %1435 = vmatprep.subr.bf16.mxu0 0
        %1436 = vmatpush1.bf16.xpose.msra.mxu0 0
        %1437 = vmatprep.subr.bf16.mxu0 0
        %1438 = vmatpush1.bf16.xpose.msra.mxu0 0
        %1439 = vmatprep.subr.bf16.mxu0 0
        %1440 = vmatpush1.bf16.xpose.msra.mxu0 0
        %1441 = vmatprep.subr.bf16.mxu0 0
        %1442 = vmatpush1.bf16.xpose.msra.mxu0 0
        %1443 = vmatprep.subr.bf16.mxu0 0
        %1444 = vmatpush1.bf16.xpose.msra.mxu0 0
        %1445 = vmatprep.subr.bf16.mxu0 0
        %1446 = vmatpush1.bf16.xpose.msra.mxu0 0
        %1447 = vmatprep.subr.bf16.mxu0 0
        %1448 = vmatpush1.bf16.xpose.msra.mxu0 0
        %1449 = vmatprep.subr.bf16.mxu0 0
        %1450 = vmatpush1.bf16.xpose.msra.mxu0 0
        %1451 = vmatprep.subr.bf16.mxu0 0
        %1452 = vmatpush1.bf16.xpose.msra.mxu0 0
        %1453 = vmatprep.mubr.bf16.mxu0 0
        %1454 = vmatmul.mubr.bf16.gmra.mrb[0].mxu0 %v1416
        %v1455 = vpop.f32.mrb[0].mxu0
        %v1456 = vadd.f32 %v437, %v1455
        %v1457 = vpop.f32.mrb[0].mxu0
        %v1458 = vpop.f32.mrb[0].mxu0
        %v1459 = vpop.f32.mrb[0].mxu0
        %1460 = vdwg.mxu0
        %v1461 = vsel %vm587, %v1456, -inf
        %1462 = vmax.xlane.f32.xlu0 %v1461
        %v1463 = vpop.xlane.xlu0 %1462
        %v1464 = vsub.f32 %v1456, %v1463
        %v1465 = vmul.f32 %v1464, 1.442695
        %v1466 = vpow.pop %v1465
        %v1467 = vsel %vm587, %v1466, 0.0
        %1468 = vadd.xlane.f32.xlu0 %v1467
        %v1469 = vpop.xlane.xlu0 %1468
        %v1470 = vrcp.pop %v1469
        %v1471 = vmul.f32 %v1466, %v1470
        %v1472 = vpack.c.bf16 %v1471, %v1471
        %1473 = vrot.lane.b32.xlu0 %v1302, 88
        %v1474 = vpop.permute.xlu0 %1473
        %v1476 = vsel %vm587, %v1472, 0
        %v1479 = vsel %vm651, %v1474, 0
        %1481 = vmatprep.subr.bf16.mxu0 0
        %1482 = vmatpush1.bf16.msra.mxu0 %v1479
        %1483 = vmatprep.subr.bf16.mxu0 0
        %1484 = vmatpush1.bf16.msra.mxu0 0
        %1485 = vmatprep.subr.bf16.mxu0 0
        %1486 = vmatpush1.bf16.msra.mxu0 0
        %1487 = vmatprep.subr.bf16.mxu0 0
        %1488 = vmatpush1.bf16.msra.mxu0 0
        %1489 = vmatprep.subr.bf16.mxu0 0
        %1490 = vmatpush1.bf16.msra.mxu0 0
        %1491 = vmatprep.subr.bf16.mxu0 0
        %1492 = vmatpush1.bf16.msra.mxu0 0
        %1493 = vmatprep.subr.bf16.mxu0 0
        %1494 = vmatpush1.bf16.msra.mxu0 0
        %1495 = vmatprep.subr.bf16.mxu0 0
        %1496 = vmatpush1.bf16.msra.mxu0 0
        %1497 = vmatprep.subr.bf16.mxu0 0
        %1498 = vmatpush1.bf16.msra.mxu0 0
        %1499 = vmatprep.subr.bf16.mxu0 0
        %1500 = vmatpush1.bf16.msra.mxu0 0
        %1501 = vmatprep.subr.bf16.mxu0 0
        %1502 = vmatpush1.bf16.msra.mxu0 0
        %1503 = vmatprep.subr.bf16.mxu0 0
        %1504 = vmatpush1.bf16.msra.mxu0 0
        %1505 = vmatprep.subr.bf16.mxu0 0
        %1506 = vmatpush1.bf16.msra.mxu0 0
        %1507 = vmatprep.subr.bf16.mxu0 0
        %1508 = vmatpush1.bf16.msra.mxu0 0
        %1509 = vmatprep.subr.bf16.mxu0 0
        %1510 = vmatpush1.bf16.msra.mxu0 0
        %1511 = vmatprep.subr.bf16.mxu0 0
        %1512 = vmatpush1.bf16.msra.mxu0 0
        %1513 = vmatprep.mubr.bf16.mxu0 0
        %1514 = vmatmul.mubr.bf16.gmra.mrb[0].mxu0 %v1476
        %v1515 = vpop.f32.mrb[0].mxu0
        %v1516 = vadd.f32 0.0, %v1515
        %v1517 = vpop.f32.mrb[0].mxu0
        %v1518 = vpop.f32.mrb[0].mxu0
        %v1519 = vpop.f32.mrb[0].mxu0
        %1520 = vdwg.mxu0
        %1521 = vrot.lane.b32.xlu0 %v1301, 112
        %v1522 = vpop.permute.xlu0 %1521
        %1523 = vrot.lane.b32.xlu0 %v1302, 112
        %v1524 = vpop.permute.xlu0 %1523
        %v1526 = vsel %vm587, %v1522, 0
        %v1529 = vsel %vm587, %v1524, 0
        %1531 = vmatprep.subr.bf16.mxu0 0
        %1532 = vmatpush1.bf16.xpose.msra.mxu0 %v1529
        %1533 = vmatprep.subr.bf16.mxu0 0
        %1534 = vmatpush1.bf16.xpose.msra.mxu0 0
        %1535 = vmatprep.subr.bf16.mxu0 0
        %1536 = vmatpush1.bf16.xpose.msra.mxu0 0
        %1537 = vmatprep.subr.bf16.mxu0 0
        %1538 = vmatpush1.bf16.xpose.msra.mxu0 0
        %1539 = vmatprep.subr.bf16.mxu0 0
        %1540 = vmatpush1.bf16.xpose.msra.mxu0 0
        %1541 = vmatprep.subr.bf16.mxu0 0
        %1542 = vmatpush1.bf16.xpose.msra.mxu0 0
        %1543 = vmatprep.subr.bf16.mxu0 0
        %1544 = vmatpush1.bf16.xpose.msra.mxu0 0
        %1545 = vmatprep.subr.bf16.mxu0 0
        %1546 = vmatpush1.bf16.xpose.msra.mxu0 0
        %1547 = vmatprep.subr.bf16.mxu0 0
        %1548 = vmatpush1.bf16.xpose.msra.mxu0 0
        %1549 = vmatprep.subr.bf16.mxu0 0
        %1550 = vmatpush1.bf16.xpose.msra.mxu0 0
        %1551 = vmatprep.subr.bf16.mxu0 0
        %1552 = vmatpush1.bf16.xpose.msra.mxu0 0
        %1553 = vmatprep.subr.bf16.mxu0 0
        %1554 = vmatpush1.bf16.xpose.msra.mxu0 0
        %1555 = vmatprep.subr.bf16.mxu0 0
        %1556 = vmatpush1.bf16.xpose.msra.mxu0 0
        %1557 = vmatprep.subr.bf16.mxu0 0
        %1558 = vmatpush1.bf16.xpose.msra.mxu0 0
        %1559 = vmatprep.subr.bf16.mxu0 0
        %1560 = vmatpush1.bf16.xpose.msra.mxu0 0
        %1561 = vmatprep.subr.bf16.mxu0 0
        %1562 = vmatpush1.bf16.xpose.msra.mxu0 0
        %1563 = vmatprep.mubr.bf16.mxu0 0
        %1564 = vmatmul.mubr.bf16.gmra.mrb[0].mxu0 %v1526
        %v1565 = vpop.f32.mrb[0].mxu0
        %v1566 = vadd.f32 %v437, %v1565
        %v1567 = vpop.f32.mrb[0].mxu0
        %v1568 = vpop.f32.mrb[0].mxu0
        %v1569 = vpop.f32.mrb[0].mxu0
        %1570 = vdwg.mxu0
        %v1571 = vsel %vm587, %v1566, -inf
        %1572 = vmax.xlane.f32.xlu0 %v1571
        %v1573 = vpop.xlane.xlu0 %1572
        %v1574 = vsub.f32 %v1566, %v1573
        %v1575 = vmul.f32 %v1574, 1.442695
        %v1576 = vpow.pop %v1575
        %v1577 = vsel %vm587, %v1576, 0.0
        %1578 = vadd.xlane.f32.xlu0 %v1577
        %v1579 = vpop.xlane.xlu0 %1578
        %v1580 = vrcp.pop %v1579
        %v1581 = vmul.f32 %v1576, %v1580
        %v1582 = vpack.c.bf16 %v1581, %v1581
        %1583 = vrot.lane.b32.xlu0 %v1302, 80
        %v1584 = vpop.permute.xlu0 %1583
        %v1586 = vsel %vm587, %v1582, 0
        %v1589 = vsel %vm651, %v1584, 0
        %1591 = vmatprep.subr.bf16.mxu0 0
        %1592 = vmatpush1.bf16.msra.mxu0 %v1589
        %1593 = vmatprep.subr.bf16.mxu0 0
        %1594 = vmatpush1.bf16.msra.mxu0 0
        %1595 = vmatprep.subr.bf16.mxu0 0
        %1596 = vmatpush1.bf16.msra.mxu0 0
        %1597 = vmatprep.subr.bf16.mxu0 0
        %1598 = vmatpush1.bf16.msra.mxu0 0
        %1599 = vmatprep.subr.bf16.mxu0 0
        %1600 = vmatpush1.bf16.msra.mxu0 0
        %1601 = vmatprep.subr.bf16.mxu0 0
        %1602 = vmatpush1.bf16.msra.mxu0 0
        %1603 = vmatprep.subr.bf16.mxu0 0
        %1604 = vmatpush1.bf16.msra.mxu0 0
        %1605 = vmatprep.subr.bf16.mxu0 0
        %1606 = vmatpush1.bf16.msra.mxu0 0
        %1607 = vmatprep.subr.bf16.mxu0 0
        %1608 = vmatpush1.bf16.msra.mxu0 0
        %1609 = vmatprep.subr.bf16.mxu0 0
        %1610 = vmatpush1.bf16.msra.mxu0 0
        %1611 = vmatprep.subr.bf16.mxu0 0
        %1612 = vmatpush1.bf16.msra.mxu0 0
        %1613 = vmatprep.subr.bf16.mxu0 0
        %1614 = vmatpush1.bf16.msra.mxu0 0
        %1615 = vmatprep.subr.bf16.mxu0 0
        %1616 = vmatpush1.bf16.msra.mxu0 0
        %1617 = vmatprep.subr.bf16.mxu0 0
        %1618 = vmatpush1.bf16.msra.mxu0 0
        %1619 = vmatprep.subr.bf16.mxu0 0
        %1620 = vmatpush1.bf16.msra.mxu0 0
        %1621 = vmatprep.subr.bf16.mxu0 0
        %1622 = vmatpush1.bf16.msra.mxu0 0
        %1623 = vmatprep.mubr.bf16.mxu0 0
        %1624 = vmatmul.mubr.bf16.gmra.mrb[0].mxu0 %v1586
        %v1625 = vpop.f32.mrb[0].mxu0
        %v1626 = vadd.f32 0.0, %v1625
        %v1627 = vpop.f32.mrb[0].mxu0
        %v1628 = vpop.f32.mrb[0].mxu0
        %v1629 = vpop.f32.mrb[0].mxu0
        %1630 = vdwg.mxu0
        %1631 = vrot.lane.b32.xlu0 %v1301, 104
        %v1632 = vpop.permute.xlu0 %1631
        %1633 = vrot.lane.b32.xlu0 %v1302, 104
        %v1634 = vpop.permute.xlu0 %1633
        %v1636 = vsel %vm587, %v1632, 0
        %v1639 = vsel %vm587, %v1634, 0
        %1641 = vmatprep.subr.bf16.mxu0 0
        %1642 = vmatpush1.bf16.xpose.msra.mxu0 %v1639
        %1643 = vmatprep.subr.bf16.mxu0 0
        %1644 = vmatpush1.bf16.xpose.msra.mxu0 0
        %1645 = vmatprep.subr.bf16.mxu0 0
        %1646 = vmatpush1.bf16.xpose.msra.mxu0 0
        %1647 = vmatprep.subr.bf16.mxu0 0
        %1648 = vmatpush1.bf16.xpose.msra.mxu0 0
        %1649 = vmatprep.subr.bf16.mxu0 0
        %1650 = vmatpush1.bf16.xpose.msra.mxu0 0
        %1651 = vmatprep.subr.bf16.mxu0 0
        %1652 = vmatpush1.bf16.xpose.msra.mxu0 0
        %1653 = vmatprep.subr.bf16.mxu0 0
        %1654 = vmatpush1.bf16.xpose.msra.mxu0 0
        %1655 = vmatprep.subr.bf16.mxu0 0
        %1656 = vmatpush1.bf16.xpose.msra.mxu0 0
        %1657 = vmatprep.subr.bf16.mxu0 0
        %1658 = vmatpush1.bf16.xpose.msra.mxu0 0
        %1659 = vmatprep.subr.bf16.mxu0 0
        %1660 = vmatpush1.bf16.xpose.msra.mxu0 0
        %1661 = vmatprep.subr.bf16.mxu0 0
        %1662 = vmatpush1.bf16.xpose.msra.mxu0 0
        %1663 = vmatprep.subr.bf16.mxu0 0
        %1664 = vmatpush1.bf16.xpose.msra.mxu0 0
        %1665 = vmatprep.subr.bf16.mxu0 0
        %1666 = vmatpush1.bf16.xpose.msra.mxu0 0
        %1667 = vmatprep.subr.bf16.mxu0 0
        %1668 = vmatpush1.bf16.xpose.msra.mxu0 0
        %1669 = vmatprep.subr.bf16.mxu0 0
        %1670 = vmatpush1.bf16.xpose.msra.mxu0 0
        %1671 = vmatprep.subr.bf16.mxu0 0
        %1672 = vmatpush1.bf16.xpose.msra.mxu0 0
        %1673 = vmatprep.mubr.bf16.mxu0 0
        %1674 = vmatmul.mubr.bf16.gmra.mrb[0].mxu0 %v1636
        %v1675 = vpop.f32.mrb[0].mxu0
        %v1676 = vadd.f32 %v437, %v1675
        %v1677 = vpop.f32.mrb[0].mxu0
        %v1678 = vpop.f32.mrb[0].mxu0
        %v1679 = vpop.f32.mrb[0].mxu0
        %1680 = vdwg.mxu0
        %v1681 = vsel %vm587, %v1676, -inf
        %1682 = vmax.xlane.f32.xlu0 %v1681
        %v1683 = vpop.xlane.xlu0 %1682
        %v1684 = vsub.f32 %v1676, %v1683
        %v1685 = vmul.f32 %v1684, 1.442695
        %v1686 = vpow.pop %v1685
        %v1687 = vsel %vm587, %v1686, 0.0
        %1688 = vadd.xlane.f32.xlu0 %v1687
        %v1689 = vpop.xlane.xlu0 %1688
        %v1690 = vrcp.pop %v1689
        %v1691 = vmul.f32 %v1686, %v1690
        %v1692 = vpack.c.bf16 %v1691, %v1691
        %1693 = vrot.lane.b32.xlu0 %v1302, 72
        %v1694 = vpop.permute.xlu0 %1693
        %v1696 = vsel %vm587, %v1692, 0
        %v1699 = vsel %vm651, %v1694, 0
        %1701 = vmatprep.subr.bf16.mxu0 0
        %1702 = vmatpush1.bf16.msra.mxu0 %v1699
        %1703 = vmatprep.subr.bf16.mxu0 0
        %1704 = vmatpush1.bf16.msra.mxu0 0
        %1705 = vmatprep.subr.bf16.mxu0 0
        %1706 = vmatpush1.bf16.msra.mxu0 0
        %1707 = vmatprep.subr.bf16.mxu0 0
        %1708 = vmatpush1.bf16.msra.mxu0 0
        %1709 = vmatprep.subr.bf16.mxu0 0
        %1710 = vmatpush1.bf16.msra.mxu0 0
        %1711 = vmatprep.subr.bf16.mxu0 0
        %1712 = vmatpush1.bf16.msra.mxu0 0
        %1713 = vmatprep.subr.bf16.mxu0 0
        %1714 = vmatpush1.bf16.msra.mxu0 0
        %1715 = vmatprep.subr.bf16.mxu0 0
        %1716 = vmatpush1.bf16.msra.mxu0 0
        %1717 = vmatprep.subr.bf16.mxu0 0
        %1718 = vmatpush1.bf16.msra.mxu0 0
        %1719 = vmatprep.subr.bf16.mxu0 0
        %1720 = vmatpush1.bf16.msra.mxu0 0
        %1721 = vmatprep.subr.bf16.mxu0 0
        %1722 = vmatpush1.bf16.msra.mxu0 0
        %1723 = vmatprep.subr.bf16.mxu0 0
        %1724 = vmatpush1.bf16.msra.mxu0 0
        %1725 = vmatprep.subr.bf16.mxu0 0
        %1726 = vmatpush1.bf16.msra.mxu0 0
        %1727 = vmatprep.subr.bf16.mxu0 0
        %1728 = vmatpush1.bf16.msra.mxu0 0
        %1729 = vmatprep.subr.bf16.mxu0 0
        %1730 = vmatpush1.bf16.msra.mxu0 0
        %1731 = vmatprep.subr.bf16.mxu0 0
        %1732 = vmatpush1.bf16.msra.mxu0 0
        %1733 = vmatprep.mubr.bf16.mxu0 0
        %1734 = vmatmul.mubr.bf16.gmra.mrb[0].mxu0 %v1696
        %v1735 = vpop.f32.mrb[0].mxu0
        %v1736 = vadd.f32 0.0, %v1735
        %v1737 = vpop.f32.mrb[0].mxu0
        %v1738 = vpop.f32.mrb[0].mxu0
        %v1739 = vpop.f32.mrb[0].mxu0
        %1740 = vdwg.mxu0
        %1742 = vrot.lane.b32.xlu0 %v1516, 8
        %v1743 = vpop.permute.xlu0 %1742
        %1746 = vrot.lane.b32.xlu0 %v1626, 16
        %v1747 = vpop.permute.xlu0 %1746
        %1750 = vrot.lane.b32.xlu0 %v1736, 24
        %v1751 = vpop.permute.xlu0 %1750
        %v1753 = vsel %vm587, %v1405, %v1743
        %v1754 = vsel %vm1038, %v1753, %v1747
        %v1755 = vsel %vm1040, %v1754, %v1751
        %s1756 = scalar_lea.vmem %s7, 16
        %v1757 = vld [vmem:[%s1756] sm:$0xf]
        %v1758 = vld [vmem:[%s1756 + $0x4] sm:$0xf]
        %v1759 = vld [vmem:[%s1756 + $0x8] sm:$0xf]
        %v1760 = vld [vmem:[%s1756 + $0xc] sm:$0xf]
        %v1761 = vpack.c.bf16 %v1755, %v1755
        %v1766 = vunpack.c.l.b16 %v1757
        %v1767 = vunpack.c.l.b16 %v1758
        %v1768 = vunpack.c.l.b16 %v1759
        %v1769 = vunpack.c.l.b16 %v1760
        %v1770 = vpack.c.b16 %v1767, %v1766
        %v1771 = vpack.c.b16 %v1769, %v1768
        %1772 = vrot.lane.b32.xlu0 %v1162, 32
        %v1773 = vpop.permute.xlu0 %1772
        %v1776 = vsel %vm439, %v1761, 0
        %v1779 = vsel %vm439, %v1770, 0
        %v1782 = vsel %vm439, %v1771, 0
        %1784 = vmatprep.subr.bf16.mxu0 0
        %1785 = vmatpush1.bf16.xpose.msra.mxu0 %v1779
        %1786 = vmatprep.subr.bf16.mxu0 0
        %1787 = vmatpush1.bf16.xpose.msra.mxu0 %v1782
        %1788 = vmatprep.subr.bf16.mxu0 0
        %1789 = vmatpush1.bf16.xpose.msra.mxu0 0
        %1790 = vmatprep.subr.bf16.mxu0 0
        %1791 = vmatpush1.bf16.xpose.msra.mxu0 0
        %1792 = vmatprep.subr.bf16.mxu0 0
        %1793 = vmatpush1.bf16.xpose.msra.mxu0 0
        %1794 = vmatprep.subr.bf16.mxu0 0
        %1795 = vmatpush1.bf16.xpose.msra.mxu0 0
        %1796 = vmatprep.subr.bf16.mxu0 0
        %1797 = vmatpush1.bf16.xpose.msra.mxu0 0
        %1798 = vmatprep.subr.bf16.mxu0 0
        %1799 = vmatpush1.bf16.xpose.msra.mxu0 0
        %1800 = vmatprep.subr.bf16.mxu0 0
        %1801 = vmatpush1.bf16.xpose.msra.mxu0 0
        %1802 = vmatprep.subr.bf16.mxu0 0
        %1803 = vmatpush1.bf16.xpose.msra.mxu0 0
        %1804 = vmatprep.subr.bf16.mxu0 0
        %1805 = vmatpush1.bf16.xpose.msra.mxu0 0
        %1806 = vmatprep.subr.bf16.mxu0 0
        %1807 = vmatpush1.bf16.xpose.msra.mxu0 0
        %1808 = vmatprep.subr.bf16.mxu0 0
        %1809 = vmatpush1.bf16.xpose.msra.mxu0 0
        %1810 = vmatprep.subr.bf16.mxu0 0
        %1811 = vmatpush1.bf16.xpose.msra.mxu0 0
        %1812 = vmatprep.subr.bf16.mxu0 0
        %1813 = vmatpush1.bf16.xpose.msra.mxu0 0
        %1814 = vmatprep.subr.bf16.mxu0 0
        %1815 = vmatpush1.bf16.xpose.msra.mxu0 0
        %1816 = vmatprep.mubr.bf16.mxu0 0
        %1817 = vmatmul.mubr.bf16.gmra.mrb[0].mxu0 %v1776
        %v1818 = vpop.f32.mrb[0].mxu0
        %v1819 = vadd.f32 %v1773, %v1818
        %v1820 = vpop.f32.mrb[0].mxu0
        %v1821 = vpop.f32.mrb[0].mxu0
        %v1822 = vpop.f32.mrb[0].mxu0
        %1823 = vdwg.mxu0
        %v1824 = vadd.f32 %v1109, %v1819
        %s1825 = scalar_lea.vmem %s4, 4
        %v1826 = vld [vmem:[%s1825] sm:$0x3]
        %v1827 = vsel %vm439, %v1824, 0.0
        %1828 = vadd.xlane.f32.xlu0 %v1827
        %v1829 = vpop.xlane.xlu0 %1828
        %v1830 = vmul.f32 %v1829, %v443
        %v1831 = vsub.f32 %v1824, %v1830
        %v1832 = vmul.f32 %v1831, %v1831
        %v1833 = vsel %vm439, %v1832, 0.0
        %1834 = vadd.xlane.f32.xlu0 %v1833
        %v1835 = vpop.xlane.xlu0 %1834
        %v1836 = vmul.f32 %v1835, %v450
        %v1837 = vrsqrt.pop %v1836
        %v1838 = vmul.f32 %v1836, %v1837
        %vm1839 = vcmp.eq.f32.partialorder %v1836, inf
        %v1840 = vsel %vm1839, %v1836, %v1838
        %vm1841 = vcmp.eq.f32.partialorder %v1836, 0.0
        %v1842 = vand.u32 %v1836, 2147483648
        %v1843 = vsel %vm1841, %v1842, %v1840
        %v1844 = vadd.f32 %v1843, 1e-06
        %v1845 = vrcp.pop %v1844
        %v1846 = vlaneseq
        %v1847 = vshrl.u32 %v1846, 7
        %v1848 = vsub.s32 0, %v1847
        %v1849 = vrot.slane %v1826, %v1848
        %v1850 = vmul.f32 %v1849, %v1831
        %v1851 = vmul.f32 %v1850, %v1845
        %v1852 = vlaneseq
        %v1853 = vshrl.u32 %v1852, 7
        %v1854 = vsub.s32 1, %v1853
        %v1855 = vrot.slane %v1826, %v1854
        %v1856 = vadd.f32 %v1851, %v1855
        %v1857 = vld [vmem:[%s10] sm:$0x1]
        %v1858 = vld [vmem:[%s8] sm:$0xf]
        %v1859 = vld [vmem:[%s8 + $0x4] sm:$0xf]
        %v1860 = vld [vmem:[%s8 + $0x8] sm:$0xf]
        %v1861 = vld [vmem:[%s8 + $0xc] sm:$0xf]
        %v1862 = vld [vmem:[%s8 + $0x10] sm:$0xf]
        %v1863 = vld [vmem:[%s8 + $0x14] sm:$0xf]
        %v1864 = vld [vmem:[%s8 + $0x18] sm:$0xf]
        %v1865 = vld [vmem:[%s8 + $0x1c] sm:$0xf]
        %v1866 = vpack.c.bf16 %v1856, %v1856
        %v1868 = vlaneseq
        %v1869 = vshrl.u32 %v1868, 7
        %v1870 = vsub.s32 0, %v1869
        %v1871 = vrot.slane %v1857, %v1870
        %v1881 = vunpack.c.l.b16 %v1858
        %v1882 = vunpack.c.l.b16 %v1859
        %v1883 = vunpack.c.l.b16 %v1860
        %v1884 = vunpack.c.l.b16 %v1861
        %v1885 = vunpack.c.l.b16 %v1862
        %v1886 = vunpack.c.l.b16 %v1863
        %v1887 = vunpack.c.l.b16 %v1864
        %v1888 = vunpack.c.l.b16 %v1865
        %v1889 = vpack.c.b16 %v1882, %v1881
        %v1890 = vpack.c.b16 %v1884, %v1883
        %v1891 = vpack.c.b16 %v1886, %v1885
        %v1892 = vpack.c.b16 %v1888, %v1887
        %v1894 = vsel %vm439, %v1866, 0
        %v1897 = vsel %vm439, %v1889, 0
        %v1900 = vsel %vm439, %v1890, 0
        %v1903 = vsel %vm439, %v1891, 0
        %v1906 = vsel %vm439, %v1892, 0
        %1908 = vmatprep.subr.bf16.mxu0 0
        %1909 = vmatpush1.bf16.xpose.msra.mxu0 %v1897
        %1910 = vmatprep.subr.bf16.mxu0 0
        %1911 = vmatpush1.bf16.xpose.msra.mxu0 %v1900
        %1912 = vmatprep.subr.bf16.mxu0 0
        %1913 = vmatpush1.bf16.xpose.msra.mxu0 %v1903
        %1914 = vmatprep.subr.bf16.mxu0 0
        %1915 = vmatpush1.bf16.xpose.msra.mxu0 %v1906
        %1916 = vmatprep.subr.bf16.mxu0 0
        %1917 = vmatpush1.bf16.xpose.msra.mxu0 0
        %1918 = vmatprep.subr.bf16.mxu0 0
        %1919 = vmatpush1.bf16.xpose.msra.mxu0 0
        %1920 = vmatprep.subr.bf16.mxu0 0
        %1921 = vmatpush1.bf16.xpose.msra.mxu0 0
        %1922 = vmatprep.subr.bf16.mxu0 0
        %1923 = vmatpush1.bf16.xpose.msra.mxu0 0
        %1924 = vmatprep.subr.bf16.mxu0 0
        %1925 = vmatpush1.bf16.xpose.msra.mxu0 0
        %1926 = vmatprep.subr.bf16.mxu0 0
        %1927 = vmatpush1.bf16.xpose.msra.mxu0 0
        %1928 = vmatprep.subr.bf16.mxu0 0
        %1929 = vmatpush1.bf16.xpose.msra.mxu0 0
        %1930 = vmatprep.subr.bf16.mxu0 0
        %1931 = vmatpush1.bf16.xpose.msra.mxu0 0
        %1932 = vmatprep.subr.bf16.mxu0 0
        %1933 = vmatpush1.bf16.xpose.msra.mxu0 0
        %1934 = vmatprep.subr.bf16.mxu0 0
        %1935 = vmatpush1.bf16.xpose.msra.mxu0 0
        %1936 = vmatprep.subr.bf16.mxu0 0
        %1937 = vmatpush1.bf16.xpose.msra.mxu0 0
        %1938 = vmatprep.subr.bf16.mxu0 0
        %1939 = vmatpush1.bf16.xpose.msra.mxu0 0
        %1940 = vmatprep.mubr.bf16.mxu0 0
        %1941 = vmatmul.mubr.bf16.gmra.mrb[0].mxu0 %v1894
        %v1942 = vpop.f32.mrb[0].mxu0
        %v1943 = vadd.f32 %v1871, %v1942
        %v1944 = vpop.f32.mrb[0].mxu0
        %v1945 = vpop.f32.mrb[0].mxu0
        %v1946 = vpop.f32.mrb[0].mxu0
        %1947 = vdwg.mxu0
        %v1948 = vmax.f32 %v1943, 0.0
        %v1949 = vld [vmem:[%s9] sm:$0xf]
        %v1950 = vld [vmem:[%s9 + $0x4] sm:$0xf]
        %v1951 = vld [vmem:[%s9 + $0x8] sm:$0xf]
        %v1952 = vld [vmem:[%s9 + $0xc] sm:$0xf]
        %v1953 = vpack.c.bf16 %v1948, %v1948
        %v1958 = vunpack.c.l.b16 %v1949
        %v1959 = vunpack.c.l.b16 %v1950
        %v1960 = vunpack.c.l.b16 %v1951
        %v1961 = vunpack.c.l.b16 %v1952
        %v1962 = vpack.c.b16 %v1959, %v1958
        %v1963 = vpack.c.b16 %v1961, %v1960
        %vm1964 = vcmask 523264
        %v1966 = vsel %vm1964, %v1953, 0
        %v1969 = vsel %vm1964, %v1962, 0
        %v1972 = vsel %vm1964, %v1963, 0
        %1974 = vmatprep.subr.bf16.mxu0 0
        %1975 = vmatpush1.bf16.xpose.msra.mxu0 %v1969
        %1976 = vmatprep.subr.bf16.mxu0 0
        %1977 = vmatpush1.bf16.xpose.msra.mxu0 %v1972
        %1978 = vmatprep.subr.bf16.mxu0 0
        %1979 = vmatpush1.bf16.xpose.msra.mxu0 0
        %1980 = vmatprep.subr.bf16.mxu0 0
        %1981 = vmatpush1.bf16.xpose.msra.mxu0 0
        %1982 = vmatprep.subr.bf16.mxu0 0
        %1983 = vmatpush1.bf16.xpose.msra.mxu0 0
        %1984 = vmatprep.subr.bf16.mxu0 0
        %1985 = vmatpush1.bf16.xpose.msra.mxu0 0
        %1986 = vmatprep.subr.bf16.mxu0 0
        %1987 = vmatpush1.bf16.xpose.msra.mxu0 0
        %1988 = vmatprep.subr.bf16.mxu0 0
        %1989 = vmatpush1.bf16.xpose.msra.mxu0 0
        %1990 = vmatprep.subr.bf16.mxu0 0
        %1991 = vmatpush1.bf16.xpose.msra.mxu0 0
        %1992 = vmatprep.subr.bf16.mxu0 0
        %1993 = vmatpush1.bf16.xpose.msra.mxu0 0
        %1994 = vmatprep.subr.bf16.mxu0 0
        %1995 = vmatpush1.bf16.xpose.msra.mxu0 0
        %1996 = vmatprep.subr.bf16.mxu0 0
        %1997 = vmatpush1.bf16.xpose.msra.mxu0 0
        %1998 = vmatprep.subr.bf16.mxu0 0
        %1999 = vmatpush1.bf16.xpose.msra.mxu0 0
        %2000 = vmatprep.subr.bf16.mxu0 0
        %2001 = vmatpush1.bf16.xpose.msra.mxu0 0
        %2002 = vmatprep.subr.bf16.mxu0 0
        %2003 = vmatpush1.bf16.xpose.msra.mxu0 0
        %2004 = vmatprep.subr.bf16.mxu0 0
        %2005 = vmatpush1.bf16.xpose.msra.mxu0 0
        %2006 = vmatprep.mubr.bf16.mxu0 0
        %2007 = vmatmul.mubr.bf16.gmra.mrb[0].mxu0 %v1966
        %v2008 = vpop.f32.mrb[0].mxu0
        %v2009 = vadd.f32 0.0, %v2008
        %v2010 = vpop.f32.mrb[0].mxu0
        %v2011 = vpop.f32.mrb[0].mxu0
        %v2012 = vpop.f32.mrb[0].mxu0
        %2013 = vdwg.mxu0
        %v2014 = vadd.f32 %v1824, %v2009
        %2015 = vrot.lane.b32.xlu0 %v1871, 64
        %v2016 = vpop.permute.xlu0 %2015
        %v2018 = vadd.f32 %v2014, %v2016
        %s2019 = scalar_lea.vmem %s4, 6
        %v2020 = vld [vmem:[%s2019] sm:$0x3]
        %v2021 = vsel %vm439, %v2018, 0.0
        %2022 = vadd.xlane.f32.xlu0 %v2021
        %v2023 = vpop.xlane.xlu0 %2022
        %v2024 = vmul.f32 %v2023, %v443
        %v2025 = vsub.f32 %v2018, %v2024
        %v2026 = vmul.f32 %v2025, %v2025
        %v2027 = vsel %vm439, %v2026, 0.0
        %2028 = vadd.xlane.f32.xlu0 %v2027
        %v2029 = vpop.xlane.xlu0 %2028
        %v2030 = vmul.f32 %v2029, %v450
        %v2031 = vrsqrt.pop %v2030
        %v2032 = vmul.f32 %v2030, %v2031
        %vm2033 = vcmp.eq.f32.partialorder %v2030, inf
        %v2034 = vsel %vm2033, %v2030, %v2032
        %vm2035 = vcmp.eq.f32.partialorder %v2030, 0.0
        %v2036 = vand.u32 %v2030, 2147483648
        %v2037 = vsel %vm2035, %v2036, %v2034
        %v2038 = vadd.f32 %v2037, 1e-06
        %v2039 = vrcp.pop %v2038
        %v2040 = vlaneseq
        %v2041 = vshrl.u32 %v2040, 7
        %v2042 = vsub.s32 0, %v2041
        %v2043 = vrot.slane %v2020, %v2042
        %v2044 = vmul.f32 %v2043, %v2025
        %v2045 = vmul.f32 %v2044, %v2039
        %v2046 = vlaneseq
        %v2047 = vshrl.u32 %v2046, 7
        %v2048 = vsub.s32 1, %v2047
        %v2049 = vrot.slane %v2020, %v2048
        %v2050 = vadd.f32 %v2045, %v2049
        %s2051 = scalar_lea.vmem %s5, 96
        %v2052 = vld [vmem:[%s2051] sm:$0xf]
        %v2053 = vld [vmem:[%s2051 + $0x4] sm:$0xf]
        %v2054 = vld [vmem:[%s2051 + $0x8] sm:$0xf]
        %v2055 = vld [vmem:[%s2051 + $0xc] sm:$0xf]
        %v2056 = vld [vmem:[%s2051 + $0x10] sm:$0xf]
        %v2057 = vld [vmem:[%s2051 + $0x14] sm:$0xf]
        %v2058 = vld [vmem:[%s2051 + $0x18] sm:$0xf]
        %v2059 = vld [vmem:[%s2051 + $0x1c] sm:$0xf]
        %v2060 = vld [vmem:[%s2051 + $0x20] sm:$0xf]
        %v2061 = vld [vmem:[%s2051 + $0x24] sm:$0xf]
        %v2062 = vld [vmem:[%s2051 + $0x28] sm:$0xf]
        %v2063 = vld [vmem:[%s2051 + $0x2c] sm:$0xf]
        %s2064 = scalar_lea.vmem %s6, 2
        %v2065 = vld [vmem:[%s2064] sm:$0x1]
        %v2066 = vpack.c.bf16 %v2050, %v2050
        %v2068 = vlaneseq
        %v2069 = vshrl.u32 %v2068, 7
        %v2070 = vsub.s32 0, %v2069
        %v2071 = vrot.slane %v2065, %v2070
        %v2085 = vunpack.c.l.b16 %v2052
        %v2086 = vunpack.c.l.b16 %v2053
        %v2087 = vunpack.c.l.b16 %v2054
        %v2088 = vunpack.c.l.b16 %v2055
        %v2089 = vunpack.c.l.b16 %v2056
        %v2090 = vunpack.c.l.b16 %v2057
        %v2091 = vunpack.c.l.b16 %v2058
        %v2092 = vunpack.c.l.b16 %v2059
        %v2093 = vunpack.c.l.b16 %v2060
        %v2094 = vunpack.c.l.b16 %v2061
        %v2095 = vunpack.c.l.b16 %v2062
        %v2096 = vunpack.c.l.b16 %v2063
        %v2097 = vpack.c.b16 %v2086, %v2085
        %v2098 = vpack.c.b16 %v2088, %v2087
        %v2099 = vpack.c.b16 %v2090, %v2089
        %v2100 = vpack.c.b16 %v2092, %v2091
        %v2101 = vpack.c.b16 %v2094, %v2093
        %v2102 = vpack.c.b16 %v2096, %v2095
        %v2104 = vsel %vm439, %v2066, 0
        %v2107 = vsel %vm439, %v2097, 0
        %v2110 = vsel %vm439, %v2098, 0
        %v2113 = vsel %vm439, %v2099, 0
        %v2116 = vsel %vm439, %v2100, 0
        %v2119 = vsel %vm439, %v2101, 0
        %v2122 = vsel %vm439, %v2102, 0
        %2124 = vmatprep.subr.bf16.mxu0 0
        %2125 = vmatpush1.bf16.xpose.msra.mxu0 %v2107
        %2126 = vmatprep.subr.bf16.mxu0 0
        %2127 = vmatpush1.bf16.xpose.msra.mxu0 %v2110
        %2128 = vmatprep.subr.bf16.mxu0 0
        %2129 = vmatpush1.bf16.xpose.msra.mxu0 %v2113
        %2130 = vmatprep.subr.bf16.mxu0 0
        %2131 = vmatpush1.bf16.xpose.msra.mxu0 %v2116
        %2132 = vmatprep.subr.bf16.mxu0 0
        %2133 = vmatpush1.bf16.xpose.msra.mxu0 %v2119
        %2134 = vmatprep.subr.bf16.mxu0 0
        %2135 = vmatpush1.bf16.xpose.msra.mxu0 %v2122
        %2136 = vmatprep.subr.bf16.mxu0 0
        %2137 = vmatpush1.bf16.xpose.msra.mxu0 0
        %2138 = vmatprep.subr.bf16.mxu0 0
        %2139 = vmatpush1.bf16.xpose.msra.mxu0 0
        %2140 = vmatprep.subr.bf16.mxu0 0
        %2141 = vmatpush1.bf16.xpose.msra.mxu0 0
        %2142 = vmatprep.subr.bf16.mxu0 0
        %2143 = vmatpush1.bf16.xpose.msra.mxu0 0
        %2144 = vmatprep.subr.bf16.mxu0 0
        %2145 = vmatpush1.bf16.xpose.msra.mxu0 0
        %2146 = vmatprep.subr.bf16.mxu0 0
        %2147 = vmatpush1.bf16.xpose.msra.mxu0 0
        %2148 = vmatprep.subr.bf16.mxu0 0
        %2149 = vmatpush1.bf16.xpose.msra.mxu0 0
        %2150 = vmatprep.subr.bf16.mxu0 0
        %2151 = vmatpush1.bf16.xpose.msra.mxu0 0
        %2152 = vmatprep.subr.bf16.mxu0 0
        %2153 = vmatpush1.bf16.xpose.msra.mxu0 0
        %2154 = vmatprep.subr.bf16.mxu0 0
        %2155 = vmatpush1.bf16.xpose.msra.mxu0 0
        %2156 = vmatprep.mubr.bf16.mxu0 0
        %2157 = vmatmul.mubr.bf16.gmra.mrb[0].mxu0 %v2104
        %v2158 = vpop.f32.mrb[0].mxu0
        %v2159 = vadd.f32 %v2071, %v2158
        %v2160 = vpop.f32.mrb[0].mxu0
        %v2161 = vpop.f32.mrb[0].mxu0
        %v2162 = vpop.f32.mrb[0].mxu0
        %2163 = vdwg.mxu0
        %v2164 = vpack.c.bf16 %v2159, %v2159
        %2166 = vrot.lane.b32.xlu0 %v2164, 96
        %v2167 = vpop.permute.xlu0 %2166
        %v2169 = vsel %vm587, %v2164, 0
        %v2172 = vsel %vm587, %v2167, 0
        %2174 = vmatprep.subr.bf16.mxu0 0
        %2175 = vmatpush1.bf16.xpose.msra.mxu0 %v2172
        %2176 = vmatprep.subr.bf16.mxu0 0
        %2177 = vmatpush1.bf16.xpose.msra.mxu0 0
        %2178 = vmatprep.subr.bf16.mxu0 0
        %2179 = vmatpush1.bf16.xpose.msra.mxu0 0
        %2180 = vmatprep.subr.bf16.mxu0 0
        %2181 = vmatpush1.bf16.xpose.msra.mxu0 0
        %2182 = vmatprep.subr.bf16.mxu0 0
        %2183 = vmatpush1.bf16.xpose.msra.mxu0 0
        %2184 = vmatprep.subr.bf16.mxu0 0
        %2185 = vmatpush1.bf16.xpose.msra.mxu0 0
        %2186 = vmatprep.subr.bf16.mxu0 0
        %2187 = vmatpush1.bf16.xpose.msra.mxu0 0
        %2188 = vmatprep.subr.bf16.mxu0 0
        %2189 = vmatpush1.bf16.xpose.msra.mxu0 0
        %2190 = vmatprep.subr.bf16.mxu0 0
        %2191 = vmatpush1.bf16.xpose.msra.mxu0 0
        %2192 = vmatprep.subr.bf16.mxu0 0
        %2193 = vmatpush1.bf16.xpose.msra.mxu0 0
        %2194 = vmatprep.subr.bf16.mxu0 0
        %2195 = vmatpush1.bf16.xpose.msra.mxu0 0
        %2196 = vmatprep.subr.bf16.mxu0 0
        %2197 = vmatpush1.bf16.xpose.msra.mxu0 0
        %2198 = vmatprep.subr.bf16.mxu0 0
        %2199 = vmatpush1.bf16.xpose.msra.mxu0 0
        %2200 = vmatprep.subr.bf16.mxu0 0
        %2201 = vmatpush1.bf16.xpose.msra.mxu0 0
        %2202 = vmatprep.subr.bf16.mxu0 0
        %2203 = vmatpush1.bf16.xpose.msra.mxu0 0
        %2204 = vmatprep.subr.bf16.mxu0 0
        %2205 = vmatpush1.bf16.xpose.msra.mxu0 0
        %2206 = vmatprep.mubr.bf16.mxu0 0
        %2207 = vmatmul.mubr.bf16.gmra.mrb[0].mxu0 %v2169
        %v2208 = vpop.f32.mrb[0].mxu0
        %v2209 = vadd.f32 %v436, %v2208
        %v2210 = vpop.f32.mrb[0].mxu0
        %v2211 = vpop.f32.mrb[0].mxu0
        %v2212 = vpop.f32.mrb[0].mxu0
        %2213 = vdwg.mxu0
        %v2214 = vsel %vm587, %v2209, -inf
        %2215 = vmax.xlane.f32.xlu0 %v2214
        %v2216 = vpop.xlane.xlu0 %2215
        %v2217 = vsub.f32 %v2209, %v2216
        %v2218 = vmul.f32 %v2217, 1.442695
        %v2219 = vpow.pop %v2218
        %v2220 = vsel %vm587, %v2219, 0.0
        %2221 = vadd.xlane.f32.xlu0 %v2220
        %v2222 = vpop.xlane.xlu0 %2221
        %v2223 = vrcp.pop %v2222
        %v2224 = vmul.f32 %v2219, %v2223
        %v2225 = vpack.c.bf16 %v2224, %v2224
        %2226 = vrot.lane.b32.xlu0 %v2164, 64
        %v2227 = vpop.permute.xlu0 %2226
        %v2229 = vsel %vm587, %v2225, 0
        %v2232 = vsel %vm651, %v2227, 0
        %2234 = vmatprep.subr.bf16.mxu0 0
        %2235 = vmatpush1.bf16.msra.mxu0 %v2232
        %2236 = vmatprep.subr.bf16.mxu0 0
        %2237 = vmatpush1.bf16.msra.mxu0 0
        %2238 = vmatprep.subr.bf16.mxu0 0
        %2239 = vmatpush1.bf16.msra.mxu0 0
        %2240 = vmatprep.subr.bf16.mxu0 0
        %2241 = vmatpush1.bf16.msra.mxu0 0
        %2242 = vmatprep.subr.bf16.mxu0 0
        %2243 = vmatpush1.bf16.msra.mxu0 0
        %2244 = vmatprep.subr.bf16.mxu0 0
        %2245 = vmatpush1.bf16.msra.mxu0 0
        %2246 = vmatprep.subr.bf16.mxu0 0
        %2247 = vmatpush1.bf16.msra.mxu0 0
        %2248 = vmatprep.subr.bf16.mxu0 0
        %2249 = vmatpush1.bf16.msra.mxu0 0
        %2250 = vmatprep.subr.bf16.mxu0 0
        %2251 = vmatpush1.bf16.msra.mxu0 0
        %2252 = vmatprep.subr.bf16.mxu0 0
        %2253 = vmatpush1.bf16.msra.mxu0 0
        %2254 = vmatprep.subr.bf16.mxu0 0
        %2255 = vmatpush1.bf16.msra.mxu0 0
        %2256 = vmatprep.subr.bf16.mxu0 0
        %2257 = vmatpush1.bf16.msra.mxu0 0
        %2258 = vmatprep.subr.bf16.mxu0 0
        %2259 = vmatpush1.bf16.msra.mxu0 0
        %2260 = vmatprep.subr.bf16.mxu0 0
        %2261 = vmatpush1.bf16.msra.mxu0 0
        %2262 = vmatprep.subr.bf16.mxu0 0
        %2263 = vmatpush1.bf16.msra.mxu0 0
        %2264 = vmatprep.subr.bf16.mxu0 0
        %2265 = vmatpush1.bf16.msra.mxu0 0
        %2266 = vmatprep.mubr.bf16.mxu0 0
        %2267 = vmatmul.mubr.bf16.gmra.mrb[0].mxu0 %v2229
        %v2268 = vpop.f32.mrb[0].mxu0
        %v2269 = vadd.f32 0.0, %v2268
        %v2270 = vpop.f32.mrb[0].mxu0
        %v2271 = vpop.f32.mrb[0].mxu0
        %v2272 = vpop.f32.mrb[0].mxu0
        %2273 = vdwg.mxu0
        %2274 = vrot.lane.b32.xlu0 %v2164, 120
        %v2275 = vpop.permute.xlu0 %2274
        %2276 = vrot.lane.b32.xlu0 %v2164, 88
        %v2277 = vpop.permute.xlu0 %2276
        %v2279 = vsel %vm587, %v2275, 0
        %v2282 = vsel %vm587, %v2277, 0
        %2284 = vmatprep.subr.bf16.mxu0 0
        %2285 = vmatpush1.bf16.xpose.msra.mxu0 %v2282
        %2286 = vmatprep.subr.bf16.mxu0 0
        %2287 = vmatpush1.bf16.xpose.msra.mxu0 0
        %2288 = vmatprep.subr.bf16.mxu0 0
        %2289 = vmatpush1.bf16.xpose.msra.mxu0 0
        %2290 = vmatprep.subr.bf16.mxu0 0
        %2291 = vmatpush1.bf16.xpose.msra.mxu0 0
        %2292 = vmatprep.subr.bf16.mxu0 0
        %2293 = vmatpush1.bf16.xpose.msra.mxu0 0
        %2294 = vmatprep.subr.bf16.mxu0 0
        %2295 = vmatpush1.bf16.xpose.msra.mxu0 0
        %2296 = vmatprep.subr.bf16.mxu0 0
        %2297 = vmatpush1.bf16.xpose.msra.mxu0 0
        %2298 = vmatprep.subr.bf16.mxu0 0
        %2299 = vmatpush1.bf16.xpose.msra.mxu0 0
        %2300 = vmatprep.subr.bf16.mxu0 0
        %2301 = vmatpush1.bf16.xpose.msra.mxu0 0
        %2302 = vmatprep.subr.bf16.mxu0 0
        %2303 = vmatpush1.bf16.xpose.msra.mxu0 0
        %2304 = vmatprep.subr.bf16.mxu0 0
        %2305 = vmatpush1.bf16.xpose.msra.mxu0 0
        %2306 = vmatprep.subr.bf16.mxu0 0
        %2307 = vmatpush1.bf16.xpose.msra.mxu0 0
        %2308 = vmatprep.subr.bf16.mxu0 0
        %2309 = vmatpush1.bf16.xpose.msra.mxu0 0
        %2310 = vmatprep.subr.bf16.mxu0 0
        %2311 = vmatpush1.bf16.xpose.msra.mxu0 0
        %2312 = vmatprep.subr.bf16.mxu0 0
        %2313 = vmatpush1.bf16.xpose.msra.mxu0 0
        %2314 = vmatprep.subr.bf16.mxu0 0
        %2315 = vmatpush1.bf16.xpose.msra.mxu0 0
        %2316 = vmatprep.mubr.bf16.mxu0 0
        %2317 = vmatmul.mubr.bf16.gmra.mrb[0].mxu0 %v2279
        %v2318 = vpop.f32.mrb[0].mxu0
        %v2319 = vadd.f32 %v436, %v2318
        %v2320 = vpop.f32.mrb[0].mxu0
        %v2321 = vpop.f32.mrb[0].mxu0
        %v2322 = vpop.f32.mrb[0].mxu0
        %2323 = vdwg.mxu0
        %v2324 = vsel %vm587, %v2319, -inf
        %2325 = vmax.xlane.f32.xlu0 %v2324
        %v2326 = vpop.xlane.xlu0 %2325
        %v2327 = vsub.f32 %v2319, %v2326
        %v2328 = vmul.f32 %v2327, 1.442695
        %v2329 = vpow.pop %v2328
        %v2330 = vsel %vm587, %v2329, 0.0
        %2331 = vadd.xlane.f32.xlu0 %v2330
        %v2332 = vpop.xlane.xlu0 %2331
        %v2333 = vrcp.pop %v2332
        %v2334 = vmul.f32 %v2329, %v2333
        %v2335 = vpack.c.bf16 %v2334, %v2334
        %2336 = vrot.lane.b32.xlu0 %v2164, 56
        %v2337 = vpop.permute.xlu0 %2336
        %v2339 = vsel %vm587, %v2335, 0
        %v2342 = vsel %vm651, %v2337, 0
        %2344 = vmatprep.subr.bf16.mxu0 0
        %2345 = vmatpush1.bf16.msra.mxu0 %v2342
        %2346 = vmatprep.subr.bf16.mxu0 0
        %2347 = vmatpush1.bf16.msra.mxu0 0
        %2348 = vmatprep.subr.bf16.mxu0 0
        %2349 = vmatpush1.bf16.msra.mxu0 0
        %2350 = vmatprep.subr.bf16.mxu0 0
        %2351 = vmatpush1.bf16.msra.mxu0 0
        %2352 = vmatprep.subr.bf16.mxu0 0
        %2353 = vmatpush1.bf16.msra.mxu0 0
        %2354 = vmatprep.subr.bf16.mxu0 0
        %2355 = vmatpush1.bf16.msra.mxu0 0
        %2356 = vmatprep.subr.bf16.mxu0 0
        %2357 = vmatpush1.bf16.msra.mxu0 0
        %2358 = vmatprep.subr.bf16.mxu0 0
        %2359 = vmatpush1.bf16.msra.mxu0 0
        %2360 = vmatprep.subr.bf16.mxu0 0
        %2361 = vmatpush1.bf16.msra.mxu0 0
        %2362 = vmatprep.subr.bf16.mxu0 0
        %2363 = vmatpush1.bf16.msra.mxu0 0
        %2364 = vmatprep.subr.bf16.mxu0 0
        %2365 = vmatpush1.bf16.msra.mxu0 0
        %2366 = vmatprep.subr.bf16.mxu0 0
        %2367 = vmatpush1.bf16.msra.mxu0 0
        %2368 = vmatprep.subr.bf16.mxu0 0
        %2369 = vmatpush1.bf16.msra.mxu0 0
        %2370 = vmatprep.subr.bf16.mxu0 0
        %2371 = vmatpush1.bf16.msra.mxu0 0
        %2372 = vmatprep.subr.bf16.mxu0 0
        %2373 = vmatpush1.bf16.msra.mxu0 0
        %2374 = vmatprep.subr.bf16.mxu0 0
        %2375 = vmatpush1.bf16.msra.mxu0 0
        %2376 = vmatprep.mubr.bf16.mxu0 0
        %2377 = vmatmul.mubr.bf16.gmra.mrb[0].mxu0 %v2339
        %v2378 = vpop.f32.mrb[0].mxu0
        %v2379 = vadd.f32 0.0, %v2378
        %v2380 = vpop.f32.mrb[0].mxu0
        %v2381 = vpop.f32.mrb[0].mxu0
        %v2382 = vpop.f32.mrb[0].mxu0
        %2383 = vdwg.mxu0
        %2384 = vrot.lane.b32.xlu0 %v2164, 112
        %v2385 = vpop.permute.xlu0 %2384
        %2386 = vrot.lane.b32.xlu0 %v2164, 80
        %v2387 = vpop.permute.xlu0 %2386
        %v2389 = vsel %vm587, %v2385, 0
        %v2392 = vsel %vm587, %v2387, 0
        %2394 = vmatprep.subr.bf16.mxu0 0
        %2395 = vmatpush1.bf16.xpose.msra.mxu0 %v2392
        %2396 = vmatprep.subr.bf16.mxu0 0
        %2397 = vmatpush1.bf16.xpose.msra.mxu0 0
        %2398 = vmatprep.subr.bf16.mxu0 0
        %2399 = vmatpush1.bf16.xpose.msra.mxu0 0
        %2400 = vmatprep.subr.bf16.mxu0 0
        %2401 = vmatpush1.bf16.xpose.msra.mxu0 0
        %2402 = vmatprep.subr.bf16.mxu0 0
        %2403 = vmatpush1.bf16.xpose.msra.mxu0 0
        %2404 = vmatprep.subr.bf16.mxu0 0
        %2405 = vmatpush1.bf16.xpose.msra.mxu0 0
        %2406 = vmatprep.subr.bf16.mxu0 0
        %2407 = vmatpush1.bf16.xpose.msra.mxu0 0
        %2408 = vmatprep.subr.bf16.mxu0 0
        %2409 = vmatpush1.bf16.xpose.msra.mxu0 0
        %2410 = vmatprep.subr.bf16.mxu0 0
        %2411 = vmatpush1.bf16.xpose.msra.mxu0 0
        %2412 = vmatprep.subr.bf16.mxu0 0
        %2413 = vmatpush1.bf16.xpose.msra.mxu0 0
        %2414 = vmatprep.subr.bf16.mxu0 0
        %2415 = vmatpush1.bf16.xpose.msra.mxu0 0
        %2416 = vmatprep.subr.bf16.mxu0 0
        %2417 = vmatpush1.bf16.xpose.msra.mxu0 0
        %2418 = vmatprep.subr.bf16.mxu0 0
        %2419 = vmatpush1.bf16.xpose.msra.mxu0 0
        %2420 = vmatprep.subr.bf16.mxu0 0
        %2421 = vmatpush1.bf16.xpose.msra.mxu0 0
        %2422 = vmatprep.subr.bf16.mxu0 0
        %2423 = vmatpush1.bf16.xpose.msra.mxu0 0
        %2424 = vmatprep.subr.bf16.mxu0 0
        %2425 = vmatpush1.bf16.xpose.msra.mxu0 0
        %2426 = vmatprep.mubr.bf16.mxu0 0
        %2427 = vmatmul.mubr.bf16.gmra.mrb[0].mxu0 %v2389
        %v2428 = vpop.f32.mrb[0].mxu0
        %v2429 = vadd.f32 %v436, %v2428
        %v2430 = vpop.f32.mrb[0].mxu0
        %v2431 = vpop.f32.mrb[0].mxu0
        %v2432 = vpop.f32.mrb[0].mxu0
        %2433 = vdwg.mxu0
        %v2434 = vsel %vm587, %v2429, -inf
        %2435 = vmax.xlane.f32.xlu0 %v2434
        %v2436 = vpop.xlane.xlu0 %2435
        %v2437 = vsub.f32 %v2429, %v2436
        %v2438 = vmul.f32 %v2437, 1.442695
        %v2439 = vpow.pop %v2438
        %v2440 = vsel %vm587, %v2439, 0.0
        %2441 = vadd.xlane.f32.xlu0 %v2440
        %v2442 = vpop.xlane.xlu0 %2441
        %v2443 = vrcp.pop %v2442
        %v2444 = vmul.f32 %v2439, %v2443
        %v2445 = vpack.c.bf16 %v2444, %v2444
        %2446 = vrot.lane.b32.xlu0 %v2164, 48
        %v2447 = vpop.permute.xlu0 %2446
        %v2449 = vsel %vm587, %v2445, 0
        %v2452 = vsel %vm651, %v2447, 0
        %2454 = vmatprep.subr.bf16.mxu0 0
        %2455 = vmatpush1.bf16.msra.mxu0 %v2452
        %2456 = vmatprep.subr.bf16.mxu0 0
        %2457 = vmatpush1.bf16.msra.mxu0 0
        %2458 = vmatprep.subr.bf16.mxu0 0
        %2459 = vmatpush1.bf16.msra.mxu0 0
        %2460 = vmatprep.subr.bf16.mxu0 0
        %2461 = vmatpush1.bf16.msra.mxu0 0
        %2462 = vmatprep.subr.bf16.mxu0 0
        %2463 = vmatpush1.bf16.msra.mxu0 0
        %2464 = vmatprep.subr.bf16.mxu0 0
        %2465 = vmatpush1.bf16.msra.mxu0 0
        %2466 = vmatprep.subr.bf16.mxu0 0
        %2467 = vmatpush1.bf16.msra.mxu0 0
        %2468 = vmatprep.subr.bf16.mxu0 0
        %2469 = vmatpush1.bf16.msra.mxu0 0
        %2470 = vmatprep.subr.bf16.mxu0 0
        %2471 = vmatpush1.bf16.msra.mxu0 0
        %2472 = vmatprep.subr.bf16.mxu0 0
        %2473 = vmatpush1.bf16.msra.mxu0 0
        %2474 = vmatprep.subr.bf16.mxu0 0
        %2475 = vmatpush1.bf16.msra.mxu0 0
        %2476 = vmatprep.subr.bf16.mxu0 0
        %2477 = vmatpush1.bf16.msra.mxu0 0
        %2478 = vmatprep.subr.bf16.mxu0 0
        %2479 = vmatpush1.bf16.msra.mxu0 0
        %2480 = vmatprep.subr.bf16.mxu0 0
        %2481 = vmatpush1.bf16.msra.mxu0 0
        %2482 = vmatprep.subr.bf16.mxu0 0
        %2483 = vmatpush1.bf16.msra.mxu0 0
        %2484 = vmatprep.subr.bf16.mxu0 0
        %2485 = vmatpush1.bf16.msra.mxu0 0
        %2486 = vmatprep.mubr.bf16.mxu0 0
        %2487 = vmatmul.mubr.bf16.gmra.mrb[0].mxu0 %v2449
        %v2488 = vpop.f32.mrb[0].mxu0
        %v2489 = vadd.f32 0.0, %v2488
        %v2490 = vpop.f32.mrb[0].mxu0
        %v2491 = vpop.f32.mrb[0].mxu0
        %v2492 = vpop.f32.mrb[0].mxu0
        %2493 = vdwg.mxu0
        %2494 = vrot.lane.b32.xlu0 %v2164, 104
        %v2495 = vpop.permute.xlu0 %2494
        %2496 = vrot.lane.b32.xlu0 %v2164, 72
        %v2497 = vpop.permute.xlu0 %2496
        %v2499 = vsel %vm587, %v2495, 0
        %v2502 = vsel %vm587, %v2497, 0
        %2504 = vmatprep.subr.bf16.mxu0 0
        %2505 = vmatpush1.bf16.xpose.msra.mxu0 %v2502
        %2506 = vmatprep.subr.bf16.mxu0 0
        %2507 = vmatpush1.bf16.xpose.msra.mxu0 0
        %2508 = vmatprep.subr.bf16.mxu0 0
        %2509 = vmatpush1.bf16.xpose.msra.mxu0 0
        %2510 = vmatprep.subr.bf16.mxu0 0
        %2511 = vmatpush1.bf16.xpose.msra.mxu0 0
        %2512 = vmatprep.subr.bf16.mxu0 0
        %2513 = vmatpush1.bf16.xpose.msra.mxu0 0
        %2514 = vmatprep.subr.bf16.mxu0 0
        %2515 = vmatpush1.bf16.xpose.msra.mxu0 0
        %2516 = vmatprep.subr.bf16.mxu0 0
        %2517 = vmatpush1.bf16.xpose.msra.mxu0 0
        %2518 = vmatprep.subr.bf16.mxu0 0
        %2519 = vmatpush1.bf16.xpose.msra.mxu0 0
        %2520 = vmatprep.subr.bf16.mxu0 0
        %2521 = vmatpush1.bf16.xpose.msra.mxu0 0
        %2522 = vmatprep.subr.bf16.mxu0 0
        %2523 = vmatpush1.bf16.xpose.msra.mxu0 0
        %2524 = vmatprep.subr.bf16.mxu0 0
        %2525 = vmatpush1.bf16.xpose.msra.mxu0 0
        %2526 = vmatprep.subr.bf16.mxu0 0
        %2527 = vmatpush1.bf16.xpose.msra.mxu0 0
        %2528 = vmatprep.subr.bf16.mxu0 0
        %2529 = vmatpush1.bf16.xpose.msra.mxu0 0
        %2530 = vmatprep.subr.bf16.mxu0 0
        %2531 = vmatpush1.bf16.xpose.msra.mxu0 0
        %2532 = vmatprep.subr.bf16.mxu0 0
        %2533 = vmatpush1.bf16.xpose.msra.mxu0 0
        %2534 = vmatprep.subr.bf16.mxu0 0
        %2535 = vmatpush1.bf16.xpose.msra.mxu0 0
        %2536 = vmatprep.mubr.bf16.mxu0 0
        %2537 = vmatmul.mubr.bf16.gmra.mrb[0].mxu0 %v2499
        %v2538 = vpop.f32.mrb[0].mxu0
        %v2539 = vadd.f32 %v436, %v2538
        %v2540 = vpop.f32.mrb[0].mxu0
        %v2541 = vpop.f32.mrb[0].mxu0
        %v2542 = vpop.f32.mrb[0].mxu0
        %2543 = vdwg.mxu0
        %v2544 = vsel %vm587, %v2539, -inf
        %2545 = vmax.xlane.f32.xlu0 %v2544
        %v2546 = vpop.xlane.xlu0 %2545
        %v2547 = vsub.f32 %v2539, %v2546
        %v2548 = vmul.f32 %v2547, 1.442695
        %v2549 = vpow.pop %v2548
        %v2550 = vsel %vm587, %v2549, 0.0
        %2551 = vadd.xlane.f32.xlu0 %v2550
        %v2552 = vpop.xlane.xlu0 %2551
        %v2553 = vrcp.pop %v2552
        %v2554 = vmul.f32 %v2549, %v2553
        %v2555 = vpack.c.bf16 %v2554, %v2554
        %2556 = vrot.lane.b32.xlu0 %v2164, 40
        %v2557 = vpop.permute.xlu0 %2556
        %v2559 = vsel %vm587, %v2555, 0
        %v2562 = vsel %vm651, %v2557, 0
        %2564 = vmatprep.subr.bf16.mxu0 0
        %2565 = vmatpush1.bf16.msra.mxu0 %v2562
        %2566 = vmatprep.subr.bf16.mxu0 0
        %2567 = vmatpush1.bf16.msra.mxu0 0
        %2568 = vmatprep.subr.bf16.mxu0 0
        %2569 = vmatpush1.bf16.msra.mxu0 0
        %2570 = vmatprep.subr.bf16.mxu0 0
        %2571 = vmatpush1.bf16.msra.mxu0 0
        %2572 = vmatprep.subr.bf16.mxu0 0
        %2573 = vmatpush1.bf16.msra.mxu0 0
        %2574 = vmatprep.subr.bf16.mxu0 0
        %2575 = vmatpush1.bf16.msra.mxu0 0
        %2576 = vmatprep.subr.bf16.mxu0 0
        %2577 = vmatpush1.bf16.msra.mxu0 0
        %2578 = vmatprep.subr.bf16.mxu0 0
        %2579 = vmatpush1.bf16.msra.mxu0 0
        %2580 = vmatprep.subr.bf16.mxu0 0
        %2581 = vmatpush1.bf16.msra.mxu0 0
        %2582 = vmatprep.subr.bf16.mxu0 0
        %2583 = vmatpush1.bf16.msra.mxu0 0
        %2584 = vmatprep.subr.bf16.mxu0 0
        %2585 = vmatpush1.bf16.msra.mxu0 0
        %2586 = vmatprep.subr.bf16.mxu0 0
        %2587 = vmatpush1.bf16.msra.mxu0 0
        %2588 = vmatprep.subr.bf16.mxu0 0
        %2589 = vmatpush1.bf16.msra.mxu0 0
        %2590 = vmatprep.subr.bf16.mxu0 0
        %2591 = vmatpush1.bf16.msra.mxu0 0
        %2592 = vmatprep.subr.bf16.mxu0 0
        %2593 = vmatpush1.bf16.msra.mxu0 0
        %2594 = vmatprep.subr.bf16.mxu0 0
        %2595 = vmatpush1.bf16.msra.mxu0 0
        %2596 = vmatprep.mubr.bf16.mxu0 0
        %2597 = vmatmul.mubr.bf16.gmra.mrb[0].mxu0 %v2559
        %v2598 = vpop.f32.mrb[0].mxu0
        %v2599 = vadd.f32 0.0, %v2598
        %v2600 = vpop.f32.mrb[0].mxu0
        %v2601 = vpop.f32.mrb[0].mxu0
        %v2602 = vpop.f32.mrb[0].mxu0
        %2603 = vdwg.mxu0
        %2605 = vrot.lane.b32.xlu0 %v2379, 8
        %v2606 = vpop.permute.xlu0 %2605
        %2609 = vrot.lane.b32.xlu0 %v2489, 16
        %v2610 = vpop.permute.xlu0 %2609
        %2613 = vrot.lane.b32.xlu0 %v2599, 24
        %v2614 = vpop.permute.xlu0 %2613
        %v2616 = vsel %vm587, %v2269, %v2606
        %v2617 = vsel %vm1038, %v2616, %v2610
        %v2618 = vsel %vm1040, %v2617, %v2614
        %s2619 = scalar_lea.vmem %s7, 32
        %v2620 = vld [vmem:[%s2619] sm:$0xf]
        %v2621 = vld [vmem:[%s2619 + $0x4] sm:$0xf]
        %v2622 = vld [vmem:[%s2619 + $0x8] sm:$0xf]
        %v2623 = vld [vmem:[%s2619 + $0xc] sm:$0xf]
        %v2624 = vpack.c.bf16 %v2618, %v2618
        %v2629 = vunpack.c.l.b16 %v2620
        %v2630 = vunpack.c.l.b16 %v2621
        %v2631 = vunpack.c.l.b16 %v2622
        %v2632 = vunpack.c.l.b16 %v2623
        %v2633 = vpack.c.b16 %v2630, %v2629
        %v2634 = vpack.c.b16 %v2632, %v2631
        %2635 = vrot.lane.b32.xlu0 %v2071, 32
        %v2636 = vpop.permute.xlu0 %2635
        %v2639 = vsel %vm439, %v2624, 0
        %v2642 = vsel %vm439, %v2633, 0
        %v2645 = vsel %vm439, %v2634, 0
        %2647 = vmatprep.subr.bf16.mxu0 0
        %2648 = vmatpush1.bf16.xpose.msra.mxu0 %v2642
        %2649 = vmatprep.subr.bf16.mxu0 0
        %2650 = vmatpush1.bf16.xpose.msra.mxu0 %v2645
        %2651 = vmatprep.subr.bf16.mxu0 0
        %2652 = vmatpush1.bf16.xpose.msra.mxu0 0
        %2653 = vmatprep.subr.bf16.mxu0 0
        %2654 = vmatpush1.bf16.xpose.msra.mxu0 0
        %2655 = vmatprep.subr.bf16.mxu0 0
        %2656 = vmatpush1.bf16.xpose.msra.mxu0 0
        %2657 = vmatprep.subr.bf16.mxu0 0
        %2658 = vmatpush1.bf16.xpose.msra.mxu0 0
        %2659 = vmatprep.subr.bf16.mxu0 0
        %2660 = vmatpush1.bf16.xpose.msra.mxu0 0
        %2661 = vmatprep.subr.bf16.mxu0 0
        %2662 = vmatpush1.bf16.xpose.msra.mxu0 0
        %2663 = vmatprep.subr.bf16.mxu0 0
        %2664 = vmatpush1.bf16.xpose.msra.mxu0 0
        %2665 = vmatprep.subr.bf16.mxu0 0
        %2666 = vmatpush1.bf16.xpose.msra.mxu0 0
        %2667 = vmatprep.subr.bf16.mxu0 0
        %2668 = vmatpush1.bf16.xpose.msra.mxu0 0
        %2669 = vmatprep.subr.bf16.mxu0 0
        %2670 = vmatpush1.bf16.xpose.msra.mxu0 0
        %2671 = vmatprep.subr.bf16.mxu0 0
        %2672 = vmatpush1.bf16.xpose.msra.mxu0 0
        %2673 = vmatprep.subr.bf16.mxu0 0
        %2674 = vmatpush1.bf16.xpose.msra.mxu0 0
        %2675 = vmatprep.subr.bf16.mxu0 0
        %2676 = vmatpush1.bf16.xpose.msra.mxu0 0
        %2677 = vmatprep.subr.bf16.mxu0 0
        %2678 = vmatpush1.bf16.xpose.msra.mxu0 0
        %2679 = vmatprep.mubr.bf16.mxu0 0
        %2680 = vmatmul.mubr.bf16.gmra.mrb[0].mxu0 %v2639
        %v2681 = vpop.f32.mrb[0].mxu0
        %v2682 = vadd.f32 %v2636, %v2681
        %v2683 = vpop.f32.mrb[0].mxu0
        %v2684 = vpop.f32.mrb[0].mxu0
        %v2685 = vpop.f32.mrb[0].mxu0
        %2686 = vdwg.mxu0
        %v2687 = vadd.f32 %v2018, %v2682
        %s2688 = scalar_lea.vmem %s4, 8
        %v2689 = vld [vmem:[%s2688] sm:$0x3]
        %v2690 = vsel %vm439, %v2687, 0.0
        %2691 = vadd.xlane.f32.xlu0 %v2690
        %v2692 = vpop.xlane.xlu0 %2691
        %v2693 = vmul.f32 %v2692, %v443
        %v2694 = vsub.f32 %v2687, %v2693
        %v2695 = vmul.f32 %v2694, %v2694
        %v2696 = vsel %vm439, %v2695, 0.0
        %2697 = vadd.xlane.f32.xlu0 %v2696
        %v2698 = vpop.xlane.xlu0 %2697
        %v2699 = vmul.f32 %v2698, %v450
        %v2700 = vrsqrt.pop %v2699
        %v2701 = vmul.f32 %v2699, %v2700
        %vm2702 = vcmp.eq.f32.partialorder %v2699, inf
        %v2703 = vsel %vm2702, %v2699, %v2701
        %vm2704 = vcmp.eq.f32.partialorder %v2699, 0.0
        %v2705 = vand.u32 %v2699, 2147483648
        %v2706 = vsel %vm2704, %v2705, %v2703
        %v2707 = vadd.f32 %v2706, 1e-06
        %v2708 = vrcp.pop %v2707
        %v2709 = vlaneseq
        %v2710 = vshrl.u32 %v2709, 7
        %v2711 = vsub.s32 0, %v2710
        %v2712 = vrot.slane %v2689, %v2711
        %v2713 = vmul.f32 %v2712, %v2694
        %v2714 = vmul.f32 %v2713, %v2708
        %v2715 = vlaneseq
        %v2716 = vshrl.u32 %v2715, 7
        %v2717 = vsub.s32 1, %v2716
        %v2718 = vrot.slane %v2689, %v2717
        %v2719 = vadd.f32 %v2714, %v2718
        %s2720 = scalar_lea.vmem %s5, 144
        %v2721 = vld [vmem:[%s2720] sm:$0xf]
        %v2722 = vld [vmem:[%s2720 + $0x4] sm:$0xf]
        %v2723 = vld [vmem:[%s2720 + $0x8] sm:$0xf]
        %v2724 = vld [vmem:[%s2720 + $0xc] sm:$0xf]
        %v2725 = vld [vmem:[%s2720 + $0x10] sm:$0xf]
        %v2726 = vld [vmem:[%s2720 + $0x14] sm:$0xf]
        %v2727 = vld [vmem:[%s2720 + $0x18] sm:$0xf]
        %v2728 = vld [vmem:[%s2720 + $0x1c] sm:$0xf]
        %v2729 = vld [vmem:[%s2720 + $0x20] sm:$0xf]
        %v2730 = vld [vmem:[%s2720 + $0x24] sm:$0xf]
        %v2731 = vld [vmem:[%s2720 + $0x28] sm:$0xf]
        %v2732 = vld [vmem:[%s2720 + $0x2c] sm:$0xf]
        %s2733 = scalar_lea.vmem %s6, 3
        %v2734 = vld [vmem:[%s2733] sm:$0x1]
        %v2735 = vpack.c.bf16 %v2719, %v2719
        %v2737 = vlaneseq
        %v2738 = vshrl.u32 %v2737, 7
        %v2739 = vsub.s32 0, %v2738
        %v2740 = vrot.slane %v2734, %v2739
        %v2746 = vunpack.c.l.b16 %v2721
        %v2747 = vunpack.c.l.b16 %v2722
        %v2748 = vunpack.c.l.b16 %v2723
        %v2749 = vunpack.c.l.b16 %v2724
        %v2750 = vpack.c.b16 %v2747, %v2746
        %v2751 = vpack.c.b16 %v2749, %v2748
        %v2753 = vsel %vm439, %v2735, 0
        %v2756 = vsel %vm439, %v2750, 0
        %v2759 = vsel %vm439, %v2751, 0
        %2761 = vmatprep.subr.bf16.mxu0 0
        %2762 = vmatpush1.bf16.xpose.msra.mxu0 %v2756
        %2763 = vmatprep.subr.bf16.mxu0 0
        %2764 = vmatpush1.bf16.xpose.msra.mxu0 %v2759
        %2765 = vmatprep.subr.bf16.mxu0 0
        %2766 = vmatpush1.bf16.xpose.msra.mxu0 0
        %2767 = vmatprep.subr.bf16.mxu0 0
        %2768 = vmatpush1.bf16.xpose.msra.mxu0 0
        %2769 = vmatprep.subr.bf16.mxu0 0
        %2770 = vmatpush1.bf16.xpose.msra.mxu0 0
        %2771 = vmatprep.subr.bf16.mxu0 0
        %2772 = vmatpush1.bf16.xpose.msra.mxu0 0
        %2773 = vmatprep.subr.bf16.mxu0 0
        %2774 = vmatpush1.bf16.xpose.msra.mxu0 0
        %2775 = vmatprep.subr.bf16.mxu0 0
        %2776 = vmatpush1.bf16.xpose.msra.mxu0 0
        %2777 = vmatprep.subr.bf16.mxu0 0
        %2778 = vmatpush1.bf16.xpose.msra.mxu0 0
        %2779 = vmatprep.subr.bf16.mxu0 0
        %2780 = vmatpush1.bf16.xpose.msra.mxu0 0
        %2781 = vmatprep.subr.bf16.mxu0 0
        %2782 = vmatpush1.bf16.xpose.msra.mxu0 0
        %2783 = vmatprep.subr.bf16.mxu0 0
        %2784 = vmatpush1.bf16.xpose.msra.mxu0 0
        %2785 = vmatprep.subr.bf16.mxu0 0
        %2786 = vmatpush1.bf16.xpose.msra.mxu0 0
        %2787 = vmatprep.subr.bf16.mxu0 0
        %2788 = vmatpush1.bf16.xpose.msra.mxu0 0
        %2789 = vmatprep.subr.bf16.mxu0 0
        %2790 = vmatpush1.bf16.xpose.msra.mxu0 0
        %2791 = vmatprep.subr.bf16.mxu0 0
        %2792 = vmatpush1.bf16.xpose.msra.mxu0 0
        %2793 = vmatprep.mubr.bf16.mxu0 0
        %2794 = vmatmul.mubr.bf16.gmra.mrb[0].mxu0 %v2753
        %v2795 = vpop.f32.mrb[0].mxu0
        %v2796 = vadd.f32 %v2740, %v2795
        %v2797 = vpop.f32.mrb[0].mxu0
        %v2798 = vpop.f32.mrb[0].mxu0
        %v2799 = vpop.f32.mrb[0].mxu0
        %2800 = vdwg.mxu0
        %v2809 = vunpack.c.l.b16 %v2725
        %v2810 = vunpack.c.l.b16 %v2726
        %v2811 = vunpack.c.l.b16 %v2727
        %v2812 = vunpack.c.l.b16 %v2728
        %v2813 = vunpack.c.l.b16 %v2729
        %v2814 = vunpack.c.l.b16 %v2730
        %v2815 = vunpack.c.l.b16 %v2731
        %v2816 = vunpack.c.l.b16 %v2732
        %v2817 = vpack.c.b16 %v2810, %v2809
        %v2818 = vpack.c.b16 %v2812, %v2811
        %v2819 = vpack.c.b16 %v2814, %v2813
        %v2820 = vpack.c.b16 %v2816, %v2815
        %2821 = vrot.lane.b32.xlu0 %v2740, 96
        %v2822 = vpop.permute.xlu0 %2821
        %v2825 = vsel %vm439, %v2817, 0
        %v2828 = vsel %vm439, %v2818, 0
        %v2831 = vsel %vm439, %v2819, 0
        %v2834 = vsel %vm439, %v2820, 0
        %2836 = vmatprep.subr.bf16.mxu0 0
        %2837 = vmatpush1.bf16.xpose.msra.mxu0 %v2825
        %2838 = vmatprep.subr.bf16.mxu0 0
        %2839 = vmatpush1.bf16.xpose.msra.mxu0 %v2828
        %2840 = vmatprep.subr.bf16.mxu0 0
        %2841 = vmatpush1.bf16.xpose.msra.mxu0 %v2831
        %2842 = vmatprep.subr.bf16.mxu0 0
        %2843 = vmatpush1.bf16.xpose.msra.mxu0 %v2834
        %2844 = vmatprep.subr.bf16.mxu0 0
        %2845 = vmatpush1.bf16.xpose.msra.mxu0 0
        %2846 = vmatprep.subr.bf16.mxu0 0
        %2847 = vmatpush1.bf16.xpose.msra.mxu0 0
        %2848 = vmatprep.subr.bf16.mxu0 0
        %2849 = vmatpush1.bf16.xpose.msra.mxu0 0
        %2850 = vmatprep.subr.bf16.mxu0 0
        %2851 = vmatpush1.bf16.xpose.msra.mxu0 0
        %2852 = vmatprep.subr.bf16.mxu0 0
        %2853 = vmatpush1.bf16.xpose.msra.mxu0 0
        %2854 = vmatprep.subr.bf16.mxu0 0
        %2855 = vmatpush1.bf16.xpose.msra.mxu0 0
        %2856 = vmatprep.subr.bf16.mxu0 0
        %2857 = vmatpush1.bf16.xpose.msra.mxu0 0
        %2858 = vmatprep.subr.bf16.mxu0 0
        %2859 = vmatpush1.bf16.xpose.msra.mxu0 0
        %2860 = vmatprep.subr.bf16.mxu0 0
        %2861 = vmatpush1.bf16.xpose.msra.mxu0 0
        %2862 = vmatprep.subr.bf16.mxu0 0
        %2863 = vmatpush1.bf16.xpose.msra.mxu0 0
        %2864 = vmatprep.subr.bf16.mxu0 0
        %2865 = vmatpush1.bf16.xpose.msra.mxu0 0
        %2866 = vmatprep.subr.bf16.mxu0 0
        %2867 = vmatpush1.bf16.xpose.msra.mxu0 0
        %2868 = vmatprep.mubr.bf16.mxu0 0
        %2869 = vmatmul.mubr.bf16.gmra.mrb[0].mxu0 %v1247
        %v2870 = vpop.f32.mrb[0].mxu0
        %v2871 = vadd.f32 %v2822, %v2870
        %v2872 = vpop.f32.mrb[0].mxu0
        %v2873 = vpop.f32.mrb[0].mxu0
        %v2874 = vpop.f32.mrb[0].mxu0
        %2875 = vdwg.mxu0
        %v2876 = vpack.c.bf16 %v2796, %v2796
        %v2877 = vpack.c.bf16 %v2871, %v2871
        %v2879 = vsel %vm587, %v2876, 0
        %v2882 = vsel %vm587, %v2877, 0
        %2884 = vmatprep.subr.bf16.mxu0 0
        %2885 = vmatpush1.bf16.xpose.msra.mxu0 %v2882
        %2886 = vmatprep.subr.bf16.mxu0 0
        %2887 = vmatpush1.bf16.xpose.msra.mxu0 0
        %2888 = vmatprep.subr.bf16.mxu0 0
        %2889 = vmatpush1.bf16.xpose.msra.mxu0 0
        %2890 = vmatprep.subr.bf16.mxu0 0
        %2891 = vmatpush1.bf16.xpose.msra.mxu0 0
        %2892 = vmatprep.subr.bf16.mxu0 0
        %2893 = vmatpush1.bf16.xpose.msra.mxu0 0
        %2894 = vmatprep.subr.bf16.mxu0 0
        %2895 = vmatpush1.bf16.xpose.msra.mxu0 0
        %2896 = vmatprep.subr.bf16.mxu0 0
        %2897 = vmatpush1.bf16.xpose.msra.mxu0 0
        %2898 = vmatprep.subr.bf16.mxu0 0
        %2899 = vmatpush1.bf16.xpose.msra.mxu0 0
        %2900 = vmatprep.subr.bf16.mxu0 0
        %2901 = vmatpush1.bf16.xpose.msra.mxu0 0
        %2902 = vmatprep.subr.bf16.mxu0 0
        %2903 = vmatpush1.bf16.xpose.msra.mxu0 0
        %2904 = vmatprep.subr.bf16.mxu0 0
        %2905 = vmatpush1.bf16.xpose.msra.mxu0 0
        %2906 = vmatprep.subr.bf16.mxu0 0
        %2907 = vmatpush1.bf16.xpose.msra.mxu0 0
        %2908 = vmatprep.subr.bf16.mxu0 0
        %2909 = vmatpush1.bf16.xpose.msra.mxu0 0
        %2910 = vmatprep.subr.bf16.mxu0 0
        %2911 = vmatpush1.bf16.xpose.msra.mxu0 0
        %2912 = vmatprep.subr.bf16.mxu0 0
        %2913 = vmatpush1.bf16.xpose.msra.mxu0 0
        %2914 = vmatprep.subr.bf16.mxu0 0
        %2915 = vmatpush1.bf16.xpose.msra.mxu0 0
        %2916 = vmatprep.mubr.bf16.mxu0 0
        %2917 = vmatmul.mubr.bf16.gmra.mrb[0].mxu0 %v2879
        %v2918 = vpop.f32.mrb[0].mxu0
        %v2919 = vadd.f32 %v437, %v2918
        %v2920 = vpop.f32.mrb[0].mxu0
        %v2921 = vpop.f32.mrb[0].mxu0
        %v2922 = vpop.f32.mrb[0].mxu0
        %2923 = vdwg.mxu0
        %v2924 = vsel %vm587, %v2919, -inf
        %2925 = vmax.xlane.f32.xlu0 %v2924
        %v2926 = vpop.xlane.xlu0 %2925
        %v2927 = vsub.f32 %v2919, %v2926
        %v2928 = vmul.f32 %v2927, 1.442695
        %v2929 = vpow.pop %v2928
        %v2930 = vsel %vm587, %v2929, 0.0
        %2931 = vadd.xlane.f32.xlu0 %v2930
        %v2932 = vpop.xlane.xlu0 %2931
        %v2933 = vrcp.pop %v2932
        %v2934 = vmul.f32 %v2929, %v2933
        %v2935 = vpack.c.bf16 %v2934, %v2934
        %2937 = vrot.lane.b32.xlu0 %v2877, 96
        %v2938 = vpop.permute.xlu0 %2937
        %v2940 = vsel %vm587, %v2935, 0
        %v2943 = vsel %vm651, %v2938, 0
        %2945 = vmatprep.subr.bf16.mxu0 0
        %2946 = vmatpush1.bf16.msra.mxu0 %v2943
        %2947 = vmatprep.subr.bf16.mxu0 0
        %2948 = vmatpush1.bf16.msra.mxu0 0
        %2949 = vmatprep.subr.bf16.mxu0 0
        %2950 = vmatpush1.bf16.msra.mxu0 0
        %2951 = vmatprep.subr.bf16.mxu0 0
        %2952 = vmatpush1.bf16.msra.mxu0 0
        %2953 = vmatprep.subr.bf16.mxu0 0
        %2954 = vmatpush1.bf16.msra.mxu0 0
        %2955 = vmatprep.subr.bf16.mxu0 0
        %2956 = vmatpush1.bf16.msra.mxu0 0
        %2957 = vmatprep.subr.bf16.mxu0 0
        %2958 = vmatpush1.bf16.msra.mxu0 0
        %2959 = vmatprep.subr.bf16.mxu0 0
        %2960 = vmatpush1.bf16.msra.mxu0 0
        %2961 = vmatprep.subr.bf16.mxu0 0
        %2962 = vmatpush1.bf16.msra.mxu0 0
        %2963 = vmatprep.subr.bf16.mxu0 0
        %2964 = vmatpush1.bf16.msra.mxu0 0
        %2965 = vmatprep.subr.bf16.mxu0 0
        %2966 = vmatpush1.bf16.msra.mxu0 0
        %2967 = vmatprep.subr.bf16.mxu0 0
        %2968 = vmatpush1.bf16.msra.mxu0 0
        %2969 = vmatprep.subr.bf16.mxu0 0
        %2970 = vmatpush1.bf16.msra.mxu0 0
        %2971 = vmatprep.subr.bf16.mxu0 0
        %2972 = vmatpush1.bf16.msra.mxu0 0
        %2973 = vmatprep.subr.bf16.mxu0 0
        %2974 = vmatpush1.bf16.msra.mxu0 0
        %2975 = vmatprep.subr.bf16.mxu0 0
        %2976 = vmatpush1.bf16.msra.mxu0 0
        %2977 = vmatprep.mubr.bf16.mxu0 0
        %2978 = vmatmul.mubr.bf16.gmra.mrb[0].mxu0 %v2940
        %v2979 = vpop.f32.mrb[0].mxu0
        %v2980 = vadd.f32 0.0, %v2979
        %v2981 = vpop.f32.mrb[0].mxu0
        %v2982 = vpop.f32.mrb[0].mxu0
        %v2983 = vpop.f32.mrb[0].mxu0
        %2984 = vdwg.mxu0
        %2986 = vrot.lane.b32.xlu0 %v2876, 120
        %v2987 = vpop.permute.xlu0 %2986
        %2988 = vrot.lane.b32.xlu0 %v2877, 120
        %v2989 = vpop.permute.xlu0 %2988
        %v2991 = vsel %vm587, %v2987, 0
        %v2994 = vsel %vm587, %v2989, 0
        %2996 = vmatprep.subr.bf16.mxu0 0
        %2997 = vmatpush1.bf16.xpose.msra.mxu0 %v2994
        %2998 = vmatprep.subr.bf16.mxu0 0
        %2999 = vmatpush1.bf16.xpose.msra.mxu0 0
        %3000 = vmatprep.subr.bf16.mxu0 0
        %3001 = vmatpush1.bf16.xpose.msra.mxu0 0
        %3002 = vmatprep.subr.bf16.mxu0 0
        %3003 = vmatpush1.bf16.xpose.msra.mxu0 0
        %3004 = vmatprep.subr.bf16.mxu0 0
        %3005 = vmatpush1.bf16.xpose.msra.mxu0 0
        %3006 = vmatprep.subr.bf16.mxu0 0
        %3007 = vmatpush1.bf16.xpose.msra.mxu0 0
        %3008 = vmatprep.subr.bf16.mxu0 0
        %3009 = vmatpush1.bf16.xpose.msra.mxu0 0
        %3010 = vmatprep.subr.bf16.mxu0 0
        %3011 = vmatpush1.bf16.xpose.msra.mxu0 0
        %3012 = vmatprep.subr.bf16.mxu0 0
        %3013 = vmatpush1.bf16.xpose.msra.mxu0 0
        %3014 = vmatprep.subr.bf16.mxu0 0
        %3015 = vmatpush1.bf16.xpose.msra.mxu0 0
        %3016 = vmatprep.subr.bf16.mxu0 0
        %3017 = vmatpush1.bf16.xpose.msra.mxu0 0
        %3018 = vmatprep.subr.bf16.mxu0 0
        %3019 = vmatpush1.bf16.xpose.msra.mxu0 0
        %3020 = vmatprep.subr.bf16.mxu0 0
        %3021 = vmatpush1.bf16.xpose.msra.mxu0 0
        %3022 = vmatprep.subr.bf16.mxu0 0
        %3023 = vmatpush1.bf16.xpose.msra.mxu0 0
        %3024 = vmatprep.subr.bf16.mxu0 0
        %3025 = vmatpush1.bf16.xpose.msra.mxu0 0
        %3026 = vmatprep.subr.bf16.mxu0 0
        %3027 = vmatpush1.bf16.xpose.msra.mxu0 0
        %3028 = vmatprep.mubr.bf16.mxu0 0
        %3029 = vmatmul.mubr.bf16.gmra.mrb[0].mxu0 %v2991
        %v3030 = vpop.f32.mrb[0].mxu0
        %v3031 = vadd.f32 %v437, %v3030
        %v3032 = vpop.f32.mrb[0].mxu0
        %v3033 = vpop.f32.mrb[0].mxu0
        %v3034 = vpop.f32.mrb[0].mxu0
        %3035 = vdwg.mxu0
        %v3036 = vsel %vm587, %v3031, -inf
        %3037 = vmax.xlane.f32.xlu0 %v3036
        %v3038 = vpop.xlane.xlu0 %3037
        %v3039 = vsub.f32 %v3031, %v3038
        %v3040 = vmul.f32 %v3039, 1.442695
        %v3041 = vpow.pop %v3040
        %v3042 = vsel %vm587, %v3041, 0.0
        %3043 = vadd.xlane.f32.xlu0 %v3042
        %v3044 = vpop.xlane.xlu0 %3043
        %v3045 = vrcp.pop %v3044
        %v3046 = vmul.f32 %v3041, %v3045
        %v3047 = vpack.c.bf16 %v3046, %v3046
        %3048 = vrot.lane.b32.xlu0 %v2877, 88
        %v3049 = vpop.permute.xlu0 %3048
        %v3051 = vsel %vm587, %v3047, 0
        %v3054 = vsel %vm651, %v3049, 0
        %3056 = vmatprep.subr.bf16.mxu0 0
        %3057 = vmatpush1.bf16.msra.mxu0 %v3054
        %3058 = vmatprep.subr.bf16.mxu0 0
        %3059 = vmatpush1.bf16.msra.mxu0 0
        %3060 = vmatprep.subr.bf16.mxu0 0
        %3061 = vmatpush1.bf16.msra.mxu0 0
        %3062 = vmatprep.subr.bf16.mxu0 0
        %3063 = vmatpush1.bf16.msra.mxu0 0
        %3064 = vmatprep.subr.bf16.mxu0 0
        %3065 = vmatpush1.bf16.msra.mxu0 0
        %3066 = vmatprep.subr.bf16.mxu0 0
        %3067 = vmatpush1.bf16.msra.mxu0 0
        %3068 = vmatprep.subr.bf16.mxu0 0
        %3069 = vmatpush1.bf16.msra.mxu0 0
        %3070 = vmatprep.subr.bf16.mxu0 0
        %3071 = vmatpush1.bf16.msra.mxu0 0
        %3072 = vmatprep.subr.bf16.mxu0 0
        %3073 = vmatpush1.bf16.msra.mxu0 0
        %3074 = vmatprep.subr.bf16.mxu0 0
        %3075 = vmatpush1.bf16.msra.mxu0 0
        %3076 = vmatprep.subr.bf16.mxu0 0
        %3077 = vmatpush1.bf16.msra.mxu0 0
        %3078 = vmatprep.subr.bf16.mxu0 0
        %3079 = vmatpush1.bf16.msra.mxu0 0
        %3080 = vmatprep.subr.bf16.mxu0 0
        %3081 = vmatpush1.bf16.msra.mxu0 0
        %3082 = vmatprep.subr.bf16.mxu0 0
        %3083 = vmatpush1.bf16.msra.mxu0 0
        %3084 = vmatprep.subr.bf16.mxu0 0
        %3085 = vmatpush1.bf16.msra.mxu0 0
        %3086 = vmatprep.subr.bf16.mxu0 0
        %3087 = vmatpush1.bf16.msra.mxu0 0
        %3088 = vmatprep.mubr.bf16.mxu0 0
        %3089 = vmatmul.mubr.bf16.gmra.mrb[0].mxu0 %v3051
        %v3090 = vpop.f32.mrb[0].mxu0
        %v3091 = vadd.f32 0.0, %v3090
        %v3092 = vpop.f32.mrb[0].mxu0
        %v3093 = vpop.f32.mrb[0].mxu0
        %v3094 = vpop.f32.mrb[0].mxu0
        %3095 = vdwg.mxu0
        %3096 = vrot.lane.b32.xlu0 %v2876, 112
        %v3097 = vpop.permute.xlu0 %3096
        %3098 = vrot.lane.b32.xlu0 %v2877, 112
        %v3099 = vpop.permute.xlu0 %3098
        %v3101 = vsel %vm587, %v3097, 0
        %v3104 = vsel %vm587, %v3099, 0
        %3106 = vmatprep.subr.bf16.mxu0 0
        %3107 = vmatpush1.bf16.xpose.msra.mxu0 %v3104
        %3108 = vmatprep.subr.bf16.mxu0 0
        %3109 = vmatpush1.bf16.xpose.msra.mxu0 0
        %3110 = vmatprep.subr.bf16.mxu0 0
        %3111 = vmatpush1.bf16.xpose.msra.mxu0 0
        %3112 = vmatprep.subr.bf16.mxu0 0
        %3113 = vmatpush1.bf16.xpose.msra.mxu0 0
        %3114 = vmatprep.subr.bf16.mxu0 0
        %3115 = vmatpush1.bf16.xpose.msra.mxu0 0
        %3116 = vmatprep.subr.bf16.mxu0 0
        %3117 = vmatpush1.bf16.xpose.msra.mxu0 0
        %3118 = vmatprep.subr.bf16.mxu0 0
        %3119 = vmatpush1.bf16.xpose.msra.mxu0 0
        %3120 = vmatprep.subr.bf16.mxu0 0
        %3121 = vmatpush1.bf16.xpose.msra.mxu0 0
        %3122 = vmatprep.subr.bf16.mxu0 0
        %3123 = vmatpush1.bf16.xpose.msra.mxu0 0
        %3124 = vmatprep.subr.bf16.mxu0 0
        %3125 = vmatpush1.bf16.xpose.msra.mxu0 0
        %3126 = vmatprep.subr.bf16.mxu0 0
        %3127 = vmatpush1.bf16.xpose.msra.mxu0 0
        %3128 = vmatprep.subr.bf16.mxu0 0
        %3129 = vmatpush1.bf16.xpose.msra.mxu0 0
        %3130 = vmatprep.subr.bf16.mxu0 0
        %3131 = vmatpush1.bf16.xpose.msra.mxu0 0
        %3132 = vmatprep.subr.bf16.mxu0 0
        %3133 = vmatpush1.bf16.xpose.msra.mxu0 0
        %3134 = vmatprep.subr.bf16.mxu0 0
        %3135 = vmatpush1.bf16.xpose.msra.mxu0 0
        %3136 = vmatprep.subr.bf16.mxu0 0
        %3137 = vmatpush1.bf16.xpose.msra.mxu0 0
        %3138 = vmatprep.mubr.bf16.mxu0 0
        %3139 = vmatmul.mubr.bf16.gmra.mrb[0].mxu0 %v3101
        %v3140 = vpop.f32.mrb[0].mxu0
        %v3141 = vadd.f32 %v437, %v3140
        %v3142 = vpop.f32.mrb[0].mxu0
        %v3143 = vpop.f32.mrb[0].mxu0
        %v3144 = vpop.f32.mrb[0].mxu0
        %3145 = vdwg.mxu0
        %v3146 = vsel %vm587, %v3141, -inf
        %3147 = vmax.xlane.f32.xlu0 %v3146
        %v3148 = vpop.xlane.xlu0 %3147
        %v3149 = vsub.f32 %v3141, %v3148
        %v3150 = vmul.f32 %v3149, 1.442695
        %v3151 = vpow.pop %v3150
        %v3152 = vsel %vm587, %v3151, 0.0
        %3153 = vadd.xlane.f32.xlu0 %v3152
        %v3154 = vpop.xlane.xlu0 %3153
        %v3155 = vrcp.pop %v3154
        %v3156 = vmul.f32 %v3151, %v3155
        %v3157 = vpack.c.bf16 %v3156, %v3156
        %3158 = vrot.lane.b32.xlu0 %v2877, 80
        %v3159 = vpop.permute.xlu0 %3158
        %v3161 = vsel %vm587, %v3157, 0
        %v3164 = vsel %vm651, %v3159, 0
        %3166 = vmatprep.subr.bf16.mxu0 0
        %3167 = vmatpush1.bf16.msra.mxu0 %v3164
        %3168 = vmatprep.subr.bf16.mxu0 0
        %3169 = vmatpush1.bf16.msra.mxu0 0
        %3170 = vmatprep.subr.bf16.mxu0 0
        %3171 = vmatpush1.bf16.msra.mxu0 0
        %3172 = vmatprep.subr.bf16.mxu0 0
        %3173 = vmatpush1.bf16.msra.mxu0 0
        %3174 = vmatprep.subr.bf16.mxu0 0
        %3175 = vmatpush1.bf16.msra.mxu0 0
        %3176 = vmatprep.subr.bf16.mxu0 0
        %3177 = vmatpush1.bf16.msra.mxu0 0
        %3178 = vmatprep.subr.bf16.mxu0 0
        %3179 = vmatpush1.bf16.msra.mxu0 0
        %3180 = vmatprep.subr.bf16.mxu0 0
        %3181 = vmatpush1.bf16.msra.mxu0 0
        %3182 = vmatprep.subr.bf16.mxu0 0
        %3183 = vmatpush1.bf16.msra.mxu0 0
        %3184 = vmatprep.subr.bf16.mxu0 0
        %3185 = vmatpush1.bf16.msra.mxu0 0
        %3186 = vmatprep.subr.bf16.mxu0 0
        %3187 = vmatpush1.bf16.msra.mxu0 0
        %3188 = vmatprep.subr.bf16.mxu0 0
        %3189 = vmatpush1.bf16.msra.mxu0 0
        %3190 = vmatprep.subr.bf16.mxu0 0
        %3191 = vmatpush1.bf16.msra.mxu0 0
        %3192 = vmatprep.subr.bf16.mxu0 0
        %3193 = vmatpush1.bf16.msra.mxu0 0
        %3194 = vmatprep.subr.bf16.mxu0 0
        %3195 = vmatpush1.bf16.msra.mxu0 0
        %3196 = vmatprep.subr.bf16.mxu0 0
        %3197 = vmatpush1.bf16.msra.mxu0 0
        %3198 = vmatprep.mubr.bf16.mxu0 0
        %3199 = vmatmul.mubr.bf16.gmra.mrb[0].mxu0 %v3161
        %v3200 = vpop.f32.mrb[0].mxu0
        %v3201 = vadd.f32 0.0, %v3200
        %v3202 = vpop.f32.mrb[0].mxu0
        %v3203 = vpop.f32.mrb[0].mxu0
        %v3204 = vpop.f32.mrb[0].mxu0
        %3205 = vdwg.mxu0
        %3206 = vrot.lane.b32.xlu0 %v2876, 104
        %v3207 = vpop.permute.xlu0 %3206
        %3208 = vrot.lane.b32.xlu0 %v2877, 104
        %v3209 = vpop.permute.xlu0 %3208
        %v3211 = vsel %vm587, %v3207, 0
        %v3214 = vsel %vm587, %v3209, 0
        %3216 = vmatprep.subr.bf16.mxu0 0
        %3217 = vmatpush1.bf16.xpose.msra.mxu0 %v3214
        %3218 = vmatprep.subr.bf16.mxu0 0
        %3219 = vmatpush1.bf16.xpose.msra.mxu0 0
        %3220 = vmatprep.subr.bf16.mxu0 0
        %3221 = vmatpush1.bf16.xpose.msra.mxu0 0
        %3222 = vmatprep.subr.bf16.mxu0 0
        %3223 = vmatpush1.bf16.xpose.msra.mxu0 0
        %3224 = vmatprep.subr.bf16.mxu0 0
        %3225 = vmatpush1.bf16.xpose.msra.mxu0 0
        %3226 = vmatprep.subr.bf16.mxu0 0
        %3227 = vmatpush1.bf16.xpose.msra.mxu0 0
        %3228 = vmatprep.subr.bf16.mxu0 0
        %3229 = vmatpush1.bf16.xpose.msra.mxu0 0
        %3230 = vmatprep.subr.bf16.mxu0 0
        %3231 = vmatpush1.bf16.xpose.msra.mxu0 0
        %3232 = vmatprep.subr.bf16.mxu0 0
        %3233 = vmatpush1.bf16.xpose.msra.mxu0 0
        %3234 = vmatprep.subr.bf16.mxu0 0
        %3235 = vmatpush1.bf16.xpose.msra.mxu0 0
        %3236 = vmatprep.subr.bf16.mxu0 0
        %3237 = vmatpush1.bf16.xpose.msra.mxu0 0
        %3238 = vmatprep.subr.bf16.mxu0 0
        %3239 = vmatpush1.bf16.xpose.msra.mxu0 0
        %3240 = vmatprep.subr.bf16.mxu0 0
        %3241 = vmatpush1.bf16.xpose.msra.mxu0 0
        %3242 = vmatprep.subr.bf16.mxu0 0
        %3243 = vmatpush1.bf16.xpose.msra.mxu0 0
        %3244 = vmatprep.subr.bf16.mxu0 0
        %3245 = vmatpush1.bf16.xpose.msra.mxu0 0
        %3246 = vmatprep.subr.bf16.mxu0 0
        %3247 = vmatpush1.bf16.xpose.msra.mxu0 0
        %3248 = vmatprep.mubr.bf16.mxu0 0
        %3249 = vmatmul.mubr.bf16.gmra.mrb[0].mxu0 %v3211
        %v3250 = vpop.f32.mrb[0].mxu0
        %v3251 = vadd.f32 %v437, %v3250
        %v3252 = vpop.f32.mrb[0].mxu0
        %v3253 = vpop.f32.mrb[0].mxu0
        %v3254 = vpop.f32.mrb[0].mxu0
        %3255 = vdwg.mxu0
        %v3256 = vsel %vm587, %v3251, -inf
        %3257 = vmax.xlane.f32.xlu0 %v3256
        %v3258 = vpop.xlane.xlu0 %3257
        %v3259 = vsub.f32 %v3251, %v3258
        %v3260 = vmul.f32 %v3259, 1.442695
        %v3261 = vpow.pop %v3260
        %v3262 = vsel %vm587, %v3261, 0.0
        %3263 = vadd.xlane.f32.xlu0 %v3262
        %v3264 = vpop.xlane.xlu0 %3263
        %v3265 = vrcp.pop %v3264
        %v3266 = vmul.f32 %v3261, %v3265
        %v3267 = vpack.c.bf16 %v3266, %v3266
        %3268 = vrot.lane.b32.xlu0 %v2877, 72
        %v3269 = vpop.permute.xlu0 %3268
        %v3271 = vsel %vm587, %v3267, 0
        %v3274 = vsel %vm651, %v3269, 0
        %3276 = vmatprep.subr.bf16.mxu0 0
        %3277 = vmatpush1.bf16.msra.mxu0 %v3274
        %3278 = vmatprep.subr.bf16.mxu0 0
        %3279 = vmatpush1.bf16.msra.mxu0 0
        %3280 = vmatprep.subr.bf16.mxu0 0
        %3281 = vmatpush1.bf16.msra.mxu0 0
        %3282 = vmatprep.subr.bf16.mxu0 0
        %3283 = vmatpush1.bf16.msra.mxu0 0
        %3284 = vmatprep.subr.bf16.mxu0 0
        %3285 = vmatpush1.bf16.msra.mxu0 0
        %3286 = vmatprep.subr.bf16.mxu0 0
        %3287 = vmatpush1.bf16.msra.mxu0 0
        %3288 = vmatprep.subr.bf16.mxu0 0
        %3289 = vmatpush1.bf16.msra.mxu0 0
        %3290 = vmatprep.subr.bf16.mxu0 0
        %3291 = vmatpush1.bf16.msra.mxu0 0
        %3292 = vmatprep.subr.bf16.mxu0 0
        %3293 = vmatpush1.bf16.msra.mxu0 0
        %3294 = vmatprep.subr.bf16.mxu0 0
        %3295 = vmatpush1.bf16.msra.mxu0 0
        %3296 = vmatprep.subr.bf16.mxu0 0
        %3297 = vmatpush1.bf16.msra.mxu0 0
        %3298 = vmatprep.subr.bf16.mxu0 0
        %3299 = vmatpush1.bf16.msra.mxu0 0
        %3300 = vmatprep.subr.bf16.mxu0 0
        %3301 = vmatpush1.bf16.msra.mxu0 0
        %3302 = vmatprep.subr.bf16.mxu0 0
        %3303 = vmatpush1.bf16.msra.mxu0 0
        %3304 = vmatprep.subr.bf16.mxu0 0
        %3305 = vmatpush1.bf16.msra.mxu0 0
        %3306 = vmatprep.subr.bf16.mxu0 0
        %3307 = vmatpush1.bf16.msra.mxu0 0
        %3308 = vmatprep.mubr.bf16.mxu0 0
        %3309 = vmatmul.mubr.bf16.gmra.mrb[0].mxu0 %v3271
        %v3310 = vpop.f32.mrb[0].mxu0
        %v3311 = vadd.f32 0.0, %v3310
        %v3312 = vpop.f32.mrb[0].mxu0
        %v3313 = vpop.f32.mrb[0].mxu0
        %v3314 = vpop.f32.mrb[0].mxu0
        %3315 = vdwg.mxu0
        %3317 = vrot.lane.b32.xlu0 %v3091, 8
        %v3318 = vpop.permute.xlu0 %3317
        %3321 = vrot.lane.b32.xlu0 %v3201, 16
        %v3322 = vpop.permute.xlu0 %3321
        %3325 = vrot.lane.b32.xlu0 %v3311, 24
        %v3326 = vpop.permute.xlu0 %3325
        %v3328 = vsel %vm587, %v2980, %v3318
        %v3329 = vsel %vm1038, %v3328, %v3322
        %v3330 = vsel %vm1040, %v3329, %v3326
        %s3331 = scalar_lea.vmem %s7, 48
        %v3332 = vld [vmem:[%s3331] sm:$0xf]
        %v3333 = vld [vmem:[%s3331 + $0x4] sm:$0xf]
        %v3334 = vld [vmem:[%s3331 + $0x8] sm:$0xf]
        %v3335 = vld [vmem:[%s3331 + $0xc] sm:$0xf]
        %v3336 = vpack.c.bf16 %v3330, %v3330
        %v3341 = vunpack.c.l.b16 %v3332
        %v3342 = vunpack.c.l.b16 %v3333
        %v3343 = vunpack.c.l.b16 %v3334
        %v3344 = vunpack.c.l.b16 %v3335
        %v3345 = vpack.c.b16 %v3342, %v3341
        %v3346 = vpack.c.b16 %v3344, %v3343
        %3347 = vrot.lane.b32.xlu0 %v2740, 32
        %v3348 = vpop.permute.xlu0 %3347
        %v3351 = vsel %vm439, %v3336, 0
        %v3354 = vsel %vm439, %v3345, 0
        %v3357 = vsel %vm439, %v3346, 0
        %3359 = vmatprep.subr.bf16.mxu0 0
        %3360 = vmatpush1.bf16.xpose.msra.mxu0 %v3354
        %3361 = vmatprep.subr.bf16.mxu0 0
        %3362 = vmatpush1.bf16.xpose.msra.mxu0 %v3357
        %3363 = vmatprep.subr.bf16.mxu0 0
        %3364 = vmatpush1.bf16.xpose.msra.mxu0 0
        %3365 = vmatprep.subr.bf16.mxu0 0
        %3366 = vmatpush1.bf16.xpose.msra.mxu0 0
        %3367 = vmatprep.subr.bf16.mxu0 0
        %3368 = vmatpush1.bf16.xpose.msra.mxu0 0
        %3369 = vmatprep.subr.bf16.mxu0 0
        %3370 = vmatpush1.bf16.xpose.msra.mxu0 0
        %3371 = vmatprep.subr.bf16.mxu0 0
        %3372 = vmatpush1.bf16.xpose.msra.mxu0 0
        %3373 = vmatprep.subr.bf16.mxu0 0
        %3374 = vmatpush1.bf16.xpose.msra.mxu0 0
        %3375 = vmatprep.subr.bf16.mxu0 0
        %3376 = vmatpush1.bf16.xpose.msra.mxu0 0
        %3377 = vmatprep.subr.bf16.mxu0 0
        %3378 = vmatpush1.bf16.xpose.msra.mxu0 0
        %3379 = vmatprep.subr.bf16.mxu0 0
        %3380 = vmatpush1.bf16.xpose.msra.mxu0 0
        %3381 = vmatprep.subr.bf16.mxu0 0
        %3382 = vmatpush1.bf16.xpose.msra.mxu0 0
        %3383 = vmatprep.subr.bf16.mxu0 0
        %3384 = vmatpush1.bf16.xpose.msra.mxu0 0
        %3385 = vmatprep.subr.bf16.mxu0 0
        %3386 = vmatpush1.bf16.xpose.msra.mxu0 0
        %3387 = vmatprep.subr.bf16.mxu0 0
        %3388 = vmatpush1.bf16.xpose.msra.mxu0 0
        %3389 = vmatprep.subr.bf16.mxu0 0
        %3390 = vmatpush1.bf16.xpose.msra.mxu0 0
        %3391 = vmatprep.mubr.bf16.mxu0 0
        %3392 = vmatmul.mubr.bf16.gmra.mrb[0].mxu0 %v3351
        %v3393 = vpop.f32.mrb[0].mxu0
        %v3394 = vadd.f32 %v3348, %v3393
        %v3395 = vpop.f32.mrb[0].mxu0
        %v3396 = vpop.f32.mrb[0].mxu0
        %v3397 = vpop.f32.mrb[0].mxu0
        %3398 = vdwg.mxu0
        %v3399 = vadd.f32 %v2687, %v3394
        %s3400 = scalar_lea.vmem %s4, 10
        %v3401 = vld [vmem:[%s3400] sm:$0x3]
        %v3402 = vsel %vm439, %v3399, 0.0
        %3403 = vadd.xlane.f32.xlu0 %v3402
        %v3404 = vpop.xlane.xlu0 %3403
        %v3405 = vmul.f32 %v3404, %v443
        %v3406 = vsub.f32 %v3399, %v3405
        %v3407 = vmul.f32 %v3406, %v3406
        %v3408 = vsel %vm439, %v3407, 0.0
        %3409 = vadd.xlane.f32.xlu0 %v3408
        %v3410 = vpop.xlane.xlu0 %3409
        %v3411 = vmul.f32 %v3410, %v450
        %v3412 = vrsqrt.pop %v3411
        %v3413 = vmul.f32 %v3411, %v3412
        %vm3414 = vcmp.eq.f32.partialorder %v3411, inf
        %v3415 = vsel %vm3414, %v3411, %v3413
        %vm3416 = vcmp.eq.f32.partialorder %v3411, 0.0
        %v3417 = vand.u32 %v3411, 2147483648
        %v3418 = vsel %vm3416, %v3417, %v3415
        %v3419 = vadd.f32 %v3418, 1e-06
        %v3420 = vrcp.pop %v3419
        %v3421 = vlaneseq
        %v3422 = vshrl.u32 %v3421, 7
        %v3423 = vsub.s32 0, %v3422
        %v3424 = vrot.slane %v3401, %v3423
        %v3425 = vmul.f32 %v3424, %v3406
        %v3426 = vmul.f32 %v3425, %v3420
        %v3427 = vlaneseq
        %v3428 = vshrl.u32 %v3427, 7
        %v3429 = vsub.s32 1, %v3428
        %v3430 = vrot.slane %v3401, %v3429
        %v3431 = vadd.f32 %v3426, %v3430
        %s3432 = scalar_lea.vmem %s10, 1
        %v3433 = vld [vmem:[%s3432] sm:$0x1]
        %s3434 = scalar_lea.vmem %s8, 32
        %v3435 = vld [vmem:[%s3434] sm:$0xf]
        %v3436 = vld [vmem:[%s3434 + $0x4] sm:$0xf]
        %v3437 = vld [vmem:[%s3434 + $0x8] sm:$0xf]
        %v3438 = vld [vmem:[%s3434 + $0xc] sm:$0xf]
        %v3439 = vld [vmem:[%s3434 + $0x10] sm:$0xf]
        %v3440 = vld [vmem:[%s3434 + $0x14] sm:$0xf]
        %v3441 = vld [vmem:[%s3434 + $0x18] sm:$0xf]
        %v3442 = vld [vmem:[%s3434 + $0x1c] sm:$0xf]
        %v3443 = vpack.c.bf16 %v3431, %v3431
        %v3445 = vlaneseq
        %v3446 = vshrl.u32 %v3445, 7
        %v3447 = vsub.s32 0, %v3446
        %v3448 = vrot.slane %v3433, %v3447
        %v3458 = vunpack.c.l.b16 %v3435
        %v3459 = vunpack.c.l.b16 %v3436
        %v3460 = vunpack.c.l.b16 %v3437
        %v3461 = vunpack.c.l.b16 %v3438
        %v3462 = vunpack.c.l.b16 %v3439
        %v3463 = vunpack.c.l.b16 %v3440
        %v3464 = vunpack.c.l.b16 %v3441
        %v3465 = vunpack.c.l.b16 %v3442
        %v3466 = vpack.c.b16 %v3459, %v3458
        %v3467 = vpack.c.b16 %v3461, %v3460
        %v3468 = vpack.c.b16 %v3463, %v3462
        %v3469 = vpack.c.b16 %v3465, %v3464
        %v3471 = vsel %vm439, %v3443, 0
        %v3474 = vsel %vm439, %v3466, 0
        %v3477 = vsel %vm439, %v3467, 0
        %v3480 = vsel %vm439, %v3468, 0
        %v3483 = vsel %vm439, %v3469, 0
        %3485 = vmatprep.subr.bf16.mxu0 0
        %3486 = vmatpush1.bf16.xpose.msra.mxu0 %v3474
        %3487 = vmatprep.subr.bf16.mxu0 0
        %3488 = vmatpush1.bf16.xpose.msra.mxu0 %v3477
        %3489 = vmatprep.subr.bf16.mxu0 0
        %3490 = vmatpush1.bf16.xpose.msra.mxu0 %v3480
        %3491 = vmatprep.subr.bf16.mxu0 0
        %3492 = vmatpush1.bf16.xpose.msra.mxu0 %v3483
        %3493 = vmatprep.subr.bf16.mxu0 0
        %3494 = vmatpush1.bf16.xpose.msra.mxu0 0
        %3495 = vmatprep.subr.bf16.mxu0 0
        %3496 = vmatpush1.bf16.xpose.msra.mxu0 0
        %3497 = vmatprep.subr.bf16.mxu0 0
        %3498 = vmatpush1.bf16.xpose.msra.mxu0 0
        %3499 = vmatprep.subr.bf16.mxu0 0
        %3500 = vmatpush1.bf16.xpose.msra.mxu0 0
        %3501 = vmatprep.subr.bf16.mxu0 0
        %3502 = vmatpush1.bf16.xpose.msra.mxu0 0
        %3503 = vmatprep.subr.bf16.mxu0 0
        %3504 = vmatpush1.bf16.xpose.msra.mxu0 0
        %3505 = vmatprep.subr.bf16.mxu0 0
        %3506 = vmatpush1.bf16.xpose.msra.mxu0 0
        %3507 = vmatprep.subr.bf16.mxu0 0
        %3508 = vmatpush1.bf16.xpose.msra.mxu0 0
        %3509 = vmatprep.subr.bf16.mxu0 0
        %3510 = vmatpush1.bf16.xpose.msra.mxu0 0
        %3511 = vmatprep.subr.bf16.mxu0 0
        %3512 = vmatpush1.bf16.xpose.msra.mxu0 0
        %3513 = vmatprep.subr.bf16.mxu0 0
        %3514 = vmatpush1.bf16.xpose.msra.mxu0 0
        %3515 = vmatprep.subr.bf16.mxu0 0
        %3516 = vmatpush1.bf16.xpose.msra.mxu0 0
        %3517 = vmatprep.mubr.bf16.mxu0 0
        %3518 = vmatmul.mubr.bf16.gmra.mrb[0].mxu0 %v3471
        %v3519 = vpop.f32.mrb[0].mxu0
        %v3520 = vadd.f32 %v3448, %v3519
        %v3521 = vpop.f32.mrb[0].mxu0
        %v3522 = vpop.f32.mrb[0].mxu0
        %v3523 = vpop.f32.mrb[0].mxu0
        %3524 = vdwg.mxu0
        %v3525 = vmax.f32 %v3520, 0.0
        %s3526 = scalar_lea.vmem %s9, 16
        %v3527 = vld [vmem:[%s3526] sm:$0xf]
        %v3528 = vld [vmem:[%s3526 + $0x4] sm:$0xf]
        %v3529 = vld [vmem:[%s3526 + $0x8] sm:$0xf]
        %v3530 = vld [vmem:[%s3526 + $0xc] sm:$0xf]
        %v3531 = vpack.c.bf16 %v3525, %v3525
        %v3536 = vunpack.c.l.b16 %v3527
        %v3537 = vunpack.c.l.b16 %v3528
        %v3538 = vunpack.c.l.b16 %v3529
        %v3539 = vunpack.c.l.b16 %v3530
        %v3540 = vpack.c.b16 %v3537, %v3536
        %v3541 = vpack.c.b16 %v3539, %v3538
        %v3543 = vsel %vm1964, %v3531, 0
        %v3546 = vsel %vm1964, %v3540, 0
        %v3549 = vsel %vm1964, %v3541, 0
        %3551 = vmatprep.subr.bf16.mxu0 0
        %3552 = vmatpush1.bf16.xpose.msra.mxu0 %v3546
        %3553 = vmatprep.subr.bf16.mxu0 0
        %3554 = vmatpush1.bf16.xpose.msra.mxu0 %v3549
        %3555 = vmatprep.subr.bf16.mxu0 0
        %3556 = vmatpush1.bf16.xpose.msra.mxu0 0
        %3557 = vmatprep.subr.bf16.mxu0 0
        %3558 = vmatpush1.bf16.xpose.msra.mxu0 0
        %3559 = vmatprep.subr.bf16.mxu0 0
        %3560 = vmatpush1.bf16.xpose.msra.mxu0 0
        %3561 = vmatprep.subr.bf16.mxu0 0
        %3562 = vmatpush1.bf16.xpose.msra.mxu0 0
        %3563 = vmatprep.subr.bf16.mxu0 0
        %3564 = vmatpush1.bf16.xpose.msra.mxu0 0
        %3565 = vmatprep.subr.bf16.mxu0 0
        %3566 = vmatpush1.bf16.xpose.msra.mxu0 0
        %3567 = vmatprep.subr.bf16.mxu0 0
        %3568 = vmatpush1.bf16.xpose.msra.mxu0 0
        %3569 = vmatprep.subr.bf16.mxu0 0
        %3570 = vmatpush1.bf16.xpose.msra.mxu0 0
        %3571 = vmatprep.subr.bf16.mxu0 0
        %3572 = vmatpush1.bf16.xpose.msra.mxu0 0
        %3573 = vmatprep.subr.bf16.mxu0 0
        %3574 = vmatpush1.bf16.xpose.msra.mxu0 0
        %3575 = vmatprep.subr.bf16.mxu0 0
        %3576 = vmatpush1.bf16.xpose.msra.mxu0 0
        %3577 = vmatprep.subr.bf16.mxu0 0
        %3578 = vmatpush1.bf16.xpose.msra.mxu0 0
        %3579 = vmatprep.subr.bf16.mxu0 0
        %3580 = vmatpush1.bf16.xpose.msra.mxu0 0
        %3581 = vmatprep.subr.bf16.mxu0 0
        %3582 = vmatpush1.bf16.xpose.msra.mxu0 0
        %3583 = vmatprep.mubr.bf16.mxu0 0
        %3584 = vmatmul.mubr.bf16.gmra.mrb[0].mxu0 %v3543
        %v3585 = vpop.f32.mrb[0].mxu0
        %v3586 = vadd.f32 0.0, %v3585
        %v3587 = vpop.f32.mrb[0].mxu0
        %v3588 = vpop.f32.mrb[0].mxu0
        %v3589 = vpop.f32.mrb[0].mxu0
        %3590 = vdwg.mxu0
        %v3591 = vadd.f32 %v3399, %v3586
        %3592 = vrot.lane.b32.xlu0 %v3448, 64
        %v3593 = vpop.permute.xlu0 %3592
        %v3595 = vadd.f32 %v3591, %v3593
        %s3596 = scalar_lea.vmem %s4, 12
        %v3597 = vld [vmem:[%s3596] sm:$0x3]
        %v3598 = vsel %vm439, %v3595, 0.0
        %3599 = vadd.xlane.f32.xlu0 %v3598
        %v3600 = vpop.xlane.xlu0 %3599
        %v3601 = vmul.f32 %v3600, %v443
        %v3602 = vsub.f32 %v3595, %v3601
        %v3603 = vmul.f32 %v3602, %v3602
        %v3604 = vsel %vm439, %v3603, 0.0
        %3605 = vadd.xlane.f32.xlu0 %v3604
        %v3606 = vpop.xlane.xlu0 %3605
        %v3607 = vmul.f32 %v3606, %v450
        %v3608 = vrsqrt.pop %v3607
        %v3609 = vmul.f32 %v3607, %v3608
        %vm3610 = vcmp.eq.f32.partialorder %v3607, inf
        %v3611 = vsel %vm3610, %v3607, %v3609
        %vm3612 = vcmp.eq.f32.partialorder %v3607, 0.0
        %v3613 = vand.u32 %v3607, 2147483648
        %v3614 = vsel %vm3612, %v3613, %v3611
        %v3615 = vadd.f32 %v3614, 1e-06
        %v3616 = vrcp.pop %v3615
        %v3617 = vlaneseq
        %v3618 = vshrl.u32 %v3617, 7
        %v3619 = vsub.s32 0, %v3618
        %v3620 = vrot.slane %v3597, %v3619
        %v3621 = vmul.f32 %v3620, %v3602
        %v3622 = vmul.f32 %v3621, %v3616
        %v3623 = vlaneseq
        %v3624 = vshrl.u32 %v3623, 7
        %v3625 = vsub.s32 1, %v3624
        %v3626 = vrot.slane %v3597, %v3625
        %v3627 = vadd.f32 %v3622, %v3626
        %3628 = vst.msk [vmem:[%s416] sm:$0xff] %vm439, %v3627
        %s3629 = sand.u32 %s284, 1
        %s3630 = scalar_lea.sflag [#allocation3], %s3629
        %s3631 = sand.u32 %s284, 1
        %s3632 = smul.addr %s3631, 8
        %s3633 = scalar_lea.vmem [#allocation2], %s3632
        // Predicated region
        $region65: #{tpu_custom_call.1} parent=63 // pred_check
          %p3634 = pneg %p294
        $region66: #{tpu_custom_call.1} parent=63 // pred_check_branch
          %3636 = sbr.rel (%p3634) target = $region68
        $region67: #{tpu_custom_call.1} parent=63 // pred_region
          %s3638 = ssub.s32 128, 128
          %3639 = vsyncadd %s3630, %s3638
          %s3640 = smul.addr %s25, 128
          %s3641 = scalar_lea.hbm %s11, %s3640
          %s3643 = sshll.u32 %s3633, 4
          %s3644 = int_to_ptr.vmem [resolvable:$true] %s3643
          %3646 = dma.vmem_to_hbm [thread:$0]  %s3644, 128, %s3641, %s3630
        $region68: #{tpu_custom_call.1} parent=63 // pred_fallthru
          _
      $region64: #{tpu_custom_call.1} parent=5 // pred_fallthru
        _
      %p3647 = scmp.le.s32.totalorder 2, %s20
      // Predicated region
      $region69: #{tpu_custom_call.1} parent=5 // pred_check
        %p3648 = pneg %p3647
      $region70: #{tpu_custom_call.1} parent=5 // pred_check_branch
        %3650 = sbr.rel (%p3648) target = $region72
      $region71: #{tpu_custom_call.1} parent=5 // pred_region
        %s3651 = ssub.s32 %s20, 2
        // Predicated region
        $region73: #{tpu_custom_call.1} parent=71 // pred_check
          %p3652 = pneg %p300
        $region74: #{tpu_custom_call.1} parent=71 // pred_check_branch
          %3654 = sbr.rel (%p3652) target = $region76
        $region75: #{tpu_custom_call.1} parent=71 // pred_region
          %s3655 = sand.u32 %s285, 1
          %s3656 = scalar_lea.sflag [#allocation3], %s3655
          %s3657 = sand.u32 %s285, 1
          %s3658 = smul.addr %s3657, 8
          %s3659 = scalar_lea.vmem [#allocation2], %s3658
          %3660 = dma.done %s3656, 128
        $region76: #{tpu_custom_call.1} parent=71 // pred_fallthru
          _
      $region72: #{tpu_custom_call.1} parent=5 // pred_fallthru
        _
    $region6: #{tpu_custom_call.1} parent=1 // loop_footer
      %s24 = sadd.s32 1, %s20
    $region7: #{tpu_custom_call.1} parent=1 // loop_footer_branch
      %19 = sbr.rel target = $region3
    $region8: #{tpu_custom_call.1} parent=1 // loop_exit
      _
    %3661 = vsyncpa [#allocation3], 1
    %s3662 = scalar_lea.sflag [#allocation3], 1
    %3663 = vsyncpa %s3662, 1

</llo_original>
